<compile_context>
chip_gen: v5e
topology: v5e:2x2
jax: 0.10.0
libtpu: 0.0.40
codegen_flags: <defaults>
</compile_context>

<pallas_src>
import functools

import jax
import jax.numpy as jnp
import numpy as np
from jax import lax
from jax.experimental import pallas as pl
from jax.experimental.pallas import tpu as pltpu

# ----------------------------- static sizes -------------------------------- #
K = 5                       # conv kernel size
C1, C1P = 10, 16            # conv1 out-channels (padded to sublane multiple)
P1, P1P = 25, 32            # conv1 patch length 1*5*5 (padded)
S1 = 12 * 12                # conv1 pooled spatial (24x24 -> 12x12)
C2, C2P = 20, 24            # conv2 out-channels (padded)
S2 = 4 * 4                  # conv2 pooled spatial (8x8 -> 4x4)
H1, H1P = 50, 64            # fc1 width (padded)
NCLS, NCLSP = 10, 128       # classes; logits lane-padded, masked via -1e30 bias
NEG = -1e30
TILE_N_MAX = 32             # images per grid step (raise to 64 on v6e if desired)
CONV_DTYPE = jnp.bfloat16   # patch slab / conv-weight dtype (biases stay f32)
MAX_SHIFT = (K - 1) * 12 + (K - 1)   # largest conv2 tap offset on the 12x12 grid


# ----------------------------- fused Pallas kernel ------------------------- #

def _net_fused_kernel(p_ref, w1_ref, b1_ref, w2_ref, b2_ref,
                      wf1_ref, bf1_ref, wf2_ref, bf2_ref, o_ref, *, tile):
    """Whole forward pass for one tile of `tile` images.

    p_ref : (4, P1P, S1*tile)  conv1 im2col patches; axis0 = pool tap q=dh*2+dw,
                               rows = patch index, lane = s*tile + t (s = ph*12+pw)
    w1_ref: (C1P, P1P) bf16    conv1 weight (flattened, zero-padded)
    b1_ref: (C1P, 1)   f32
    w2_ref: (25, C2P, C1P) bf16  conv2 weight per tap (kh*5+kw), transposed + padded
    b2_ref: (C2P, 1)   f32
    wf1_ref:(H1P, S2*C2P) f32  fc1 weight, columns ordered (u=ph2*4+pw2, c)
    bf1_ref:(H1P, 1)   f32
    wf2_ref:(NCLSP, H1P) f32   fc2 weight (padded class rows are zero)
    bf2_ref:(NCLSP, 1) f32     padded class rows carry -1e30 (softmax mask)
    o_ref : (1, tile, NCLSP)   softmax probabilities, lane-dense (128) store
    """
    L1 = S1 * tile
    f32 = jnp.float32

    # ---- conv1: 4 per-tap matmuls with a running max (= 2x2 maxpool), bias, ReLU
    w1 = w1_ref[...]
    pooled = jnp.dot(w1, p_ref[0], preferred_element_type=f32)
    for q in range(1, 4):
        pooled = jnp.maximum(pooled,
                             jnp.dot(w1, p_ref[q], preferred_element_type=f32))
    h1 = jnp.maximum(pooled + b1_ref[...], 0.0)            # (C1P, L1), lane = s*tile+t

    # ---- conv2 built in-kernel: 25 accumulating tap matmuls over static lane slices
    # of the VMEM-resident h1 (no HBM round trip, no XLA-side conv2 im2col).
    h1 = h1.astype(CONV_DTYPE)
    h1e = jnp.concatenate(
        [h1, jnp.zeros((C1P, MAX_SHIFT * tile), CONV_DTYPE)], axis=1)
    acc2 = None
    for kh in range(K):
        for kw in range(K):
            d = kh * 12 + kw                                # shift on the 12x12 grid
            src = h1e[:, d * tile: d * tile + L1]           # (C1P, L1)
            part = jnp.dot(w2_ref[kh * K + kw], src, preferred_element_type=f32)
            acc2 = part if acc2 is None else acc2 + part    # (C2P, L1)
    # acc2[co, (y*12+x)*tile + t] is valid conv2 output for y,x <= 7.

    # ---- maxpool2 + bias + ReLU fused with extraction of the 16 valid pooled positions
    # (dropout2d in eval mode == identity)
    b2 = b2_ref[...]
    blocks = []
    for a in range(4):          # ph2
        for b in range(4):      # pw2
            s0 = (2 * a) * 12 + 2 * b
            c00 = acc2[:, (s0 + 0) * tile: (s0 + 1) * tile]
            c01 = acc2[:, (s0 + 1) * tile: (s0 + 2) * tile]
            c10 = acc2[:, (s0 + 12) * tile: (s0 + 13) * tile]
            c11 = acc2[:, (s0 + 13) * tile: (s0 + 14) * tile]
            m = jnp.maximum(jnp.maximum(c00, c01), jnp.maximum(c10, c11))
            blocks.append(jnp.maximum(m + b2, 0.0))         # (C2P, tile)
    h2 = jnp.concatenate(blocks, axis=0)                    # (S2*C2P, tile) = (384, tile)

    # ---- fc1: one matmul over the whole 320-dim (padded 384) contraction + ReLU
    hf = jnp.dot(wf1_ref[...], h2, preferred_element_type=f32)      # (H1P, tile)
    hf = jnp.maximum(hf + bf1_ref[...], 0.0)
    # F.dropout(eval) == identity

    # lane-pad the image axis to NCLSP so the logits transpose is a canonical 128x128
    if tile < NCLSP:
        hf = jnp.concatenate([hf, jnp.zeros((H1P, NCLSP - tile), f32)], axis=1)

    # ---- fc2 + softmax (padded class rows masked via -1e30 bias; wf2 pad rows are 0)
    logits = jnp.dot(wf2_ref[...], hf, preferred_element_type=f32) + bf2_ref[...]
    logits = jnp.transpose(logits)[:tile, :]                # (tile, NCLSP) lane-dense
    mx = jnp.max(logits, axis=1, keepdims=True)
    e = jnp.exp(logits - mx)
    o_ref[0] = (e / jnp.sum(e, axis=1, keepdims=True)).astype(o_ref.dtype)


# ------------------------------ pallas_call wrapper ------------------------- #

def _fused_forward(p1, w1, b1, w2, b2, wf1, bf1, wf2, bf2, *, tile):
    n_tiles = p1.shape[0]
    L1 = S1 * tile
    flops_tile = (2 * C1P * P1P * 4 * L1            # conv1 (4 pool taps)
                  + 2 * K * K * C2P * C1P * L1      # conv2 (25 taps)
                  + 2 * H1P * S2 * C2P * tile       # fc1
                  + 2 * NCLSP * H1P * NCLSP)        # fc2 (image axis padded to 128)
    weights = (w1, b1, w2, b2, wf1, bf1, wf2, bf2)
    bytes_accessed = (int(p1.size) * p1.dtype.itemsize
                      + sum(int(a.size) * a.dtype.itemsize for a in weights)
                      + n_tiles * tile * NCLSP * 4)

    kernel = functools.partial(_net_fused_kernel, tile=tile)
    return pl.pallas_call(
        kernel,
        out_shape=jax.ShapeDtypeStruct((n_tiles, tile, NCLSP), jnp.float32),
        grid=(n_tiles,),
        in_specs=[
            pl.BlockSpec((None, 4, P1P, L1), lambda i: (i, 0, 0, 0)),
            pl.BlockSpec((C1P, P1P), lambda i: (0, 0)),          # constant blocks:
            pl.BlockSpec((C1P, 1), lambda i: (0, 0)),             # staged into VMEM once
            pl.BlockSpec((K * K, C2P, C1P), lambda i: (0, 0, 0)),
            pl.BlockSpec((C2P, 1), lambda i: (0, 0)),
            pl.BlockSpec((H1P, S2 * C2P), lambda i: (0, 0)),
            pl.BlockSpec((H1P, 1), lambda i: (0, 0)),
            pl.BlockSpec((NCLSP, H1P), lambda i: (0, 0)),
            pl.BlockSpec((NCLSP, 1), lambda i: (0, 0)),
        ],
        out_specs=pl.BlockSpec((1, tile, NCLSP), lambda i: (i, 0, 0)),
        compiler_params=pltpu.CompilerParams(
            dimension_semantics=("parallel",),
            vmem_limit_bytes=32 * 1024 * 1024),
        cost_estimate=pl.CostEstimate(flops=int(n_tiles * flops_tile),
                                      transcendentals=int(n_tiles * tile * NCLSP),
                                      bytes_accessed=int(bytes_accessed)),
    )(p1, w1, b1, w2, b2, wf1, bf1, wf2, bf2)


# ------------------------------ JAX glue (conv1 im2col / params) ------------ #

def _im2col_pool_offsets(x, k):
    """x: (N, C, H, W) -> (N, 4, C*k*k, Hp*Wp): conv patches grouped by 2x2 pool offset.
    q = dh*2 + dw; pooled spatial s = ph*Wp + pw; patch p = c*k*k + kh*k + kw."""
    n, c, h, w = x.shape
    ho, wo = h - k + 1, w - k + 1
    hp, wp = ho // 2, wo // 2
    cols = jnp.stack([x[:, :, kh:kh + ho, kw:kw + wo]
                      for kh in range(k) for kw in range(k)], axis=2)  # (N,C,k*k,Ho,Wo)
    cols = cols.reshape(n, c * k * k, ho, wo)
    cols = cols.reshape(n, c * k * k, hp, 2, wp, 2)        # (N, P, ph, dh, pw, dw)
    cols = cols.transpose(0, 3, 5, 1, 2, 4)                # (N, dh, dw, P, ph, pw)
    return cols.reshape(n, 4, c * k * k, hp * wp)


def _conv1_patches(x, n_tiles, tile):
    """-> (n_tiles, 4, P1P, S1*tile), lane = s*tile + t."""
    cols = _im2col_pool_offsets(x, K)                      # (Npad, 4, 25, 144)
    cols = cols.reshape(n_tiles, tile, 4, P1, S1)
    cols = cols.transpose(0, 2, 3, 4, 1)                   # (tiles, q, p, s, t)
    cols = jnp.pad(cols, ((0, 0), (0, 0), (0, P1P - P1), (0, 0), (0, 0)))
    return cols.reshape(n_tiles, 4, P1P, S1 * tile)


def init_params(key):
    """PyTorch-shaped parameters."""
    ks = jax.random.split(key, 8)

    def nrm(k, shape, scale):
        return scale * jax.random.normal(k, shape, dtype=jnp.float32)

    return dict(
        w_conv1=nrm(ks[0], (10, 1, 5, 5), 0.2),
        b_conv1=nrm(ks[1], (10,), 0.1),
        w_conv2=nrm(ks[2], (20, 10, 5, 5), 0.05),
        b_conv2=nrm(ks[3], (20,), 0.1),
        w_fc1=nrm(ks[4], (50, 320), 0.05),   # Linear: (out, in), in = c*16 + ph2*4 + pw2
        b_fc1=nrm(ks[5], (50,), 0.1),
        w_fc2=nrm(ks[6], (10, 50), 0.1),
        b_fc2=nrm(ks[7], (10,), 0.1),
    )


def prepare_params(p):
    """Pad / reorder PyTorch-shaped params into kernel-friendly tensors.
    Conv weights are bf16; biases and fc weights stay float32 (softmax-mask exactness)."""
    w1 = jnp.pad(p["w_conv1"].reshape(C1, P1),
                 ((0, C1P - C1), (0, P1P - P1))).astype(CONV_DTYPE)         # (16, 32)
    b1 = jnp.pad(p["b_conv1"].reshape(C1, 1),
                 ((0, C1P - C1), (0, 0))).astype(jnp.float32)               # (16, 1)

    w2 = p["w_conv2"].transpose(2, 3, 0, 1).reshape(K * K, C2, C1)          # (25, 20, 10)
    w2 = jnp.pad(w2, ((0, 0), (0, C2P - C2), (0, C1P - C1))).astype(CONV_DTYPE)
    b2 = jnp.pad(p["b_conv2"].reshape(C2, 1),
                 ((0, C2P - C2), (0, 0))).astype(jnp.float32)               # (24, 1)

    # fc1 weight (50, 320), input index c*16 + u (u = ph2*4 + pw2) -> (H1P, u*C2P + c)
    wf1 = p["w_fc1"].reshape(H1, C2, S2).transpose(0, 2, 1)                 # (50, 16, 20)
    wf1 = jnp.pad(wf1, ((0, H1P - H1), (0, 0), (0, C2P - C2)))              # (64, 16, 24)
    wf1 = wf1.reshape(H1P, S2 * C2P).astype(jnp.float32)                    # (64, 384)
    bf1 = jnp.pad(p["b_fc1"].reshape(H1, 1),
                  ((0, H1P - H1), (0, 0))).astype(jnp.float32)              # (64, 1)

    wf2 = jnp.pad(p["w_fc2"], ((0, NCLSP - NCLS), (0, H1P - H1))).astype(jnp.float32)
    bf2 = jnp.pad(p["b_fc2"].reshape(NCLS, 1), ((0, NCLSP - NCLS), (0, 0)),
                  constant_values=NEG).astype(jnp.float32)                  # (128, 1)
    return dict(w1=w1, b1=b1, w2=w2, b2=b2, wf1=wf1, bf1=bf1, wf2=wf2, bf2=bf2)


def _round_up(v, m):
    return ((v + m - 1) // m) * m


def _pick_tile(n):
    # Keep >= 2 grid steps when the batch allows it (v7x dual-TC sharding via
    # dimension_semantics=("parallel",)); cap at TILE_N_MAX (v5e scoped-VMEM friendly).
    # Any multiple of 8 keeps every lane width a multiple of 128.
    return min(TILE_N_MAX, max(8, _round_up(-(-n // 2), 8)))


def net_forward(x, params):
    """x: (N, 1, 28, 28) NCHW float32 -> softmax probabilities (N, 10)."""
    n = x.shape[0]
    tile = _pick_tile(n)
    n_tiles = -(-n // tile)
    n_pad = n_tiles * tile
    if n_pad != n:
        x = jnp.pad(x, ((0, n_pad - n), (0, 0), (0, 0), (0, 0)))
    kp = prepare_params(params)
    p1 = _conv1_patches(x.astype(CONV_DTYPE), n_tiles, tile)     # (T, 4, 32, 144*tile)
    probs = _fused_forward(p1, kp["w1"], kp["b1"], kp["w2"], kp["b2"],
                           kp["wf1"], kp["bf1"], kp["wf2"], kp["bf2"], tile=tile)
    return probs.reshape(n_pad, NCLSP)[:n, :NCLS]


# ------------------------------ pure-JAX reference -------------------------- #

def net_forward_reference(x, p):
    dn = ("NCHW", "OIHW", "NCHW")
    h = lax.conv_general_dilated(x, p["w_conv1"], (1, 1), "VALID", dimension_numbers=dn)
    h = h + p["b_conv1"][None, :, None, None]
    h = lax.reduce_window(h, -jnp.inf, lax.max, (1, 1, 2, 2), (1, 1, 2, 2), "VALID")
    h = jnp.maximum(h, 0.0)
    h = lax.conv_general_dilated(h, p["w_conv2"], (1, 1), "VALID", dimension_numbers=dn)
    h = h + p["b_conv2"][None, :, None, None]
    h = lax.reduce_window(h, -jnp.inf, lax.max, (1, 1, 2, 2), (1, 1, 2, 2), "VALID")
    h = jnp.maximum(h, 0.0)
    h = h.reshape(h.shape[0], -1)
    h = jnp.maximum(h @ p["w_fc1"].T + p["b_fc1"], 0.0)
    logits = h @ p["w_fc2"].T + p["b_fc2"]
    return jax.nn.softmax(logits, axis=1)


if __name__ == "__main__":
    key = jax.random.PRNGKey(0)
    k_x, k_p = jax.random.split(key)
    # forward pass implies 28x28 single-channel input (20*4*4 == 320); batch = 2
    x = jax.random.normal(k_x, (2, 1, 28, 28), dtype=jnp.float32)
    params = init_params(k_p)

    out = jax.block_until_ready(jax.jit(net_forward)(x, params))
    ref = jax.block_until_ready(jax.jit(net_forward_reference)(x, params))

    out_np, ref_np = np.asarray(out), np.asarray(ref)
    assert out.shape == (2, 10), out.shape
    assert np.all(np.isfinite(out_np))
    row_sums = out_np.sum(axis=1)
    assert np.all(np.abs(row_sums - 1.0) < 1e-4), row_sums
    max_err = np.max(np.abs(out_np - ref_np))
    assert max_err < 3e-2, max_err          # bf16 conv inputs -> ~1e-3 expected
    print("KERNEL_OK")
</pallas_src>

<mosaic_0001>
module attributes {stable_mosaic.version = 11 : i64} {
  func.func @_net_fused_kernel(%arg0: i32, %arg1: memref<1x4x32x1152xbf16, #tpu.memory_space<vmem>>, %arg2: memref<16x32xbf16, #tpu.memory_space<vmem>>, %arg3: memref<16x1xf32, #tpu.memory_space<vmem>>, %arg4: memref<25x24x16xbf16, #tpu.memory_space<vmem>>, %arg5: memref<24x1xf32, #tpu.memory_space<vmem>>, %arg6: memref<64x384xf32, #tpu.memory_space<vmem>>, %arg7: memref<64x1xf32, #tpu.memory_space<vmem>>, %arg8: memref<128x64xf32, #tpu.memory_space<vmem>>, %arg9: memref<128x1xf32, #tpu.memory_space<vmem>>, %arg10: memref<1x8x128xf32, #tpu.memory_space<vmem>>) attributes {dimension_semantics = [#tpu.dimension_semantics<parallel>], iteration_bounds = array<i64: 1>, scalar_prefetch = 0 : i64, scratch_operands = 0 : i64, tpu.core_type = #tpu.core_type<tc>, window_params = [{transform_indices = @transform_0, window_bounds = array<i64: 1, 4, 32, 1152>}, {pipeline_mode = #tpu.pipeline_mode<synchronous>, transform_indices = @transform_1, window_bounds = array<i64: 16, 32>}, {pipeline_mode = #tpu.pipeline_mode<synchronous>, transform_indices = @transform_2, window_bounds = array<i64: 16, 1>}, {pipeline_mode = #tpu.pipeline_mode<synchronous>, transform_indices = @transform_3, window_bounds = array<i64: 25, 24, 16>}, {pipeline_mode = #tpu.pipeline_mode<synchronous>, transform_indices = @transform_4, window_bounds = array<i64: 24, 1>}, {pipeline_mode = #tpu.pipeline_mode<synchronous>, transform_indices = @transform_5, window_bounds = array<i64: 64, 384>}, {pipeline_mode = #tpu.pipeline_mode<synchronous>, transform_indices = @transform_6, window_bounds = array<i64: 64, 1>}, {pipeline_mode = #tpu.pipeline_mode<synchronous>, transform_indices = @transform_7, window_bounds = array<i64: 128, 64>}, {pipeline_mode = #tpu.pipeline_mode<synchronous>, transform_indices = @transform_8, window_bounds = array<i64: 128, 1>}, {transform_indices = @transform_9, window_bounds = array<i64: 1, 8, 128>}]} {
    %c0 = arith.constant 0 : index
    %c0_0 = arith.constant 0 : index
    %0 = vector.load %arg2[%c0, %c0_0] : memref<16x32xbf16, #tpu.memory_space<vmem>>, vector<16x32xbf16>
    %c0_1 = arith.constant 0 : index
    %c0_2 = arith.constant 0 : index
    %c0_3 = arith.constant 0 : index
    %c0_4 = arith.constant 0 : index
    %1 = vector.load %arg1[%c0_1, %c0_2, %c0_3, %c0_4] : memref<1x4x32x1152xbf16, #tpu.memory_space<vmem>>, vector<1x1x32x1152xbf16>
    %2 = vector.shape_cast %1 : vector<1x1x32x1152xbf16> to vector<32x1152xbf16>
    %cst = arith.constant dense<0.000000e+00> : vector<16x1152xf32>
    %3 = tpu.matmul %0, %2, %cst {dimension_numbers = #tpu.dot_dimension_numbers<[1], [0], [0], [1], [0, 0, 1, 1], [], []>} : vector<16x32xbf16>, vector<32x1152xbf16>, vector<16x1152xf32> -> vector<16x1152xf32>
    %c0_5 = arith.constant 0 : index
    %c1 = arith.constant 1 : index
    %c0_6 = arith.constant 0 : index
    %c0_7 = arith.constant 0 : index
    %4 = vector.load %arg1[%c0_5, %c1, %c0_6, %c0_7] : memref<1x4x32x1152xbf16, #tpu.memory_space<vmem>>, vector<1x1x32x1152xbf16>
    %5 = vector.shape_cast %4 : vector<1x1x32x1152xbf16> to vector<32x1152xbf16>
    %cst_8 = arith.constant dense<0.000000e+00> : vector<16x1152xf32>
    %6 = tpu.matmul %0, %5, %cst_8 {dimension_numbers = #tpu.dot_dimension_numbers<[1], [0], [0], [1], [0, 0, 1, 1], [], []>} : vector<16x32xbf16>, vector<32x1152xbf16>, vector<16x1152xf32> -> vector<16x1152xf32>
    %7 = arith.maximumf %3, %6 : vector<16x1152xf32>
    %c0_9 = arith.constant 0 : index
    %c2 = arith.constant 2 : index
    %c0_10 = arith.constant 0 : index
    %c0_11 = arith.constant 0 : index
    %8 = vector.load %arg1[%c0_9, %c2, %c0_10, %c0_11] : memref<1x4x32x1152xbf16, #tpu.memory_space<vmem>>, vector<1x1x32x1152xbf16>
    %9 = vector.shape_cast %8 : vector<1x1x32x1152xbf16> to vector<32x1152xbf16>
    %cst_12 = arith.constant dense<0.000000e+00> : vector<16x1152xf32>
    %10 = tpu.matmul %0, %9, %cst_12 {dimension_numbers = #tpu.dot_dimension_numbers<[1], [0], [0], [1], [0, 0, 1, 1], [], []>} : vector<16x32xbf16>, vector<32x1152xbf16>, vector<16x1152xf32> -> vector<16x1152xf32>
    %11 = arith.maximumf %7, %10 : vector<16x1152xf32>
    %c0_13 = arith.constant 0 : index
    %c3 = arith.constant 3 : index
    %c0_14 = arith.constant 0 : index
    %c0_15 = arith.constant 0 : index
    %12 = vector.load %arg1[%c0_13, %c3, %c0_14, %c0_15] : memref<1x4x32x1152xbf16, #tpu.memory_space<vmem>>, vector<1x1x32x1152xbf16>
    %13 = vector.shape_cast %12 : vector<1x1x32x1152xbf16> to vector<32x1152xbf16>
    %cst_16 = arith.constant dense<0.000000e+00> : vector<16x1152xf32>
    %14 = tpu.matmul %0, %13, %cst_16 {dimension_numbers = #tpu.dot_dimension_numbers<[1], [0], [0], [1], [0, 0, 1, 1], [], []>} : vector<16x32xbf16>, vector<32x1152xbf16>, vector<16x1152xf32> -> vector<16x1152xf32>
    %15 = arith.maximumf %11, %14 : vector<16x1152xf32>
    %c0_17 = arith.constant 0 : index
    %c0_18 = arith.constant 0 : index
    %16 = vector.load %arg3[%c0_17, %c0_18] : memref<16x1xf32, #tpu.memory_space<vmem>>, vector<16x1xf32>
    %17 = vector.broadcast %16 : vector<16x1xf32> to vector<16x1152xf32>
    %18 = arith.addf %15, %17 : vector<16x1152xf32>
    %cst_19 = arith.constant 0.000000e+00 : f32
    %19 = vector.broadcast %cst_19 : f32 to vector<16x1152xf32>
    %20 = arith.maximumf %18, %19 : vector<16x1152xf32>
    %21 = arith.truncf %20 : vector<16x1152xf32> to vector<16x1152xbf16>
    %cst_20 = arith.constant 0.000000e+00 : bf16
    %22 = vector.broadcast %cst_20 : bf16 to vector<16x416xbf16>
    %23 = tpu.concatenate %21, %22 in 1 : vector<16x1152xbf16>, vector<16x416xbf16> -> vector<16x1568xbf16>
    %24 = vector.extract_strided_slice %23 {offsets = [0, 0], sizes = [16, 1152], strides = [1, 1]} : vector<16x1568xbf16> to vector<16x1152xbf16>
    %c0_21 = arith.constant 0 : index
    %c0_22 = arith.constant 0 : index
    %c0_23 = arith.constant 0 : index
    %25 = vector.load %arg4[%c0_21, %c0_22, %c0_23] : memref<25x24x16xbf16, #tpu.memory_space<vmem>>, vector<1x24x16xbf16>
    %26 = vector.shape_cast %25 : vector<1x24x16xbf16> to vector<24x16xbf16>
    %cst_24 = arith.constant dense<0.000000e+00> : vector<24x1152xf32>
    %27 = tpu.matmul %26, %24, %cst_24 {dimension_numbers = #tpu.dot_dimension_numbers<[1], [0], [0], [1], [0, 0, 1, 1], [], []>} : vector<24x16xbf16>, vector<16x1152xbf16>, vector<24x1152xf32> -> vector<24x1152xf32>
    %28 = vector.extract_strided_slice %23 {offsets = [0, 8], sizes = [16, 1152], strides = [1, 1]} : vector<16x1568xbf16> to vector<16x1152xbf16>
    %c1_25 = arith.constant 1 : index
    %c0_26 = arith.constant 0 : index
    %c0_27 = arith.constant 0 : index
    %29 = vector.load %arg4[%c1_25, %c0_26, %c0_27] : memref<25x24x16xbf16, #tpu.memory_space<vmem>>, vector<1x24x16xbf16>
    %30 = vector.shape_cast %29 : vector<1x24x16xbf16> to vector<24x16xbf16>
    %cst_28 = arith.constant dense<0.000000e+00> : vector<24x1152xf32>
    %31 = tpu.matmul %30, %28, %cst_28 {dimension_numbers = #tpu.dot_dimension_numbers<[1], [0], [0], [1], [0, 0, 1, 1], [], []>} : vector<24x16xbf16>, vector<16x1152xbf16>, vector<24x1152xf32> -> vector<24x1152xf32>
    %32 = arith.addf %27, %31 : vector<24x1152xf32>
    %33 = vector.extract_strided_slice %23 {offsets = [0, 16], sizes = [16, 1152], strides = [1, 1]} : vector<16x1568xbf16> to vector<16x1152xbf16>
    %c2_29 = arith.constant 2 : index
    %c0_30 = arith.constant 0 : index
    %c0_31 = arith.constant 0 : index
    %34 = vector.load %arg4[%c2_29, %c0_30, %c0_31] : memref<25x24x16xbf16, #tpu.memory_space<vmem>>, vector<1x24x16xbf16>
    %35 = vector.shape_cast %34 : vector<1x24x16xbf16> to vector<24x16xbf16>
    %cst_32 = arith.constant dense<0.000000e+00> : vector<24x1152xf32>
    %36 = tpu.matmul %35, %33, %cst_32 {dimension_numbers = #tpu.dot_dimension_numbers<[1], [0], [0], [1], [0, 0, 1, 1], [], []>} : vector<24x16xbf16>, vector<16x1152xbf16>, vector<24x1152xf32> -> vector<24x1152xf32>
    %37 = arith.addf %32, %36 : vector<24x1152xf32>
    %38 = vector.extract_strided_slice %23 {offsets = [0, 24], sizes = [16, 1152], strides = [1, 1]} : vector<16x1568xbf16> to vector<16x1152xbf16>
    %c3_33 = arith.constant 3 : index
    %c0_34 = arith.constant 0 : index
    %c0_35 = arith.constant 0 : index
    %39 = vector.load %arg4[%c3_33, %c0_34, %c0_35] : memref<25x24x16xbf16, #tpu.memory_space<vmem>>, vector<1x24x16xbf16>
    %40 = vector.shape_cast %39 : vector<1x24x16xbf16> to vector<24x16xbf16>
    %cst_36 = arith.constant dense<0.000000e+00> : vector<24x1152xf32>
    %41 = tpu.matmul %40, %38, %cst_36 {dimension_numbers = #tpu.dot_dimension_numbers<[1], [0], [0], [1], [0, 0, 1, 1], [], []>} : vector<24x16xbf16>, vector<16x1152xbf16>, vector<24x1152xf32> -> vector<24x1152xf32>
    %42 = arith.addf %37, %41 : vector<24x1152xf32>
    %43 = vector.extract_strided_slice %23 {offsets = [0, 32], sizes = [16, 1152], strides = [1, 1]} : vector<16x1568xbf16> to vector<16x1152xbf16>
    %c4 = arith.constant 4 : index
    %c0_37 = arith.constant 0 : index
    %c0_38 = arith.constant 0 : index
    %44 = vector.load %arg4[%c4, %c0_37, %c0_38] : memref<25x24x16xbf16, #tpu.memory_space<vmem>>, vector<1x24x16xbf16>
    %45 = vector.shape_cast %44 : vector<1x24x16xbf16> to vector<24x16xbf16>
    %cst_39 = arith.constant dense<0.000000e+00> : vector<24x1152xf32>
    %46 = tpu.matmul %45, %43, %cst_39 {dimension_numbers = #tpu.dot_dimension_numbers<[1], [0], [0], [1], [0, 0, 1, 1], [], []>} : vector<24x16xbf16>, vector<16x1152xbf16>, vector<24x1152xf32> -> vector<24x1152xf32>
    %47 = arith.addf %42, %46 : vector<24x1152xf32>
    %48 = vector.extract_strided_slice %23 {offsets = [0, 96], sizes = [16, 1152], strides = [1, 1]} : vector<16x1568xbf16> to vector<16x1152xbf16>
    %c5 = arith.constant 5 : index
    %c0_40 = arith.constant 0 : index
    %c0_41 = arith.constant 0 : index
    %49 = vector.load %arg4[%c5, %c0_40, %c0_41] : memref<25x24x16xbf16, #tpu.memory_space<vmem>>, vector<1x24x16xbf16>
    %50 = vector.shape_cast %49 : vector<1x24x16xbf16> to vector<24x16xbf16>
    %cst_42 = arith.constant dense<0.000000e+00> : vector<24x1152xf32>
    %51 = tpu.matmul %50, %48, %cst_42 {dimension_numbers = #tpu.dot_dimension_numbers<[1], [0], [0], [1], [0, 0, 1, 1], [], []>} : vector<24x16xbf16>, vector<16x1152xbf16>, vector<24x1152xf32> -> vector<24x1152xf32>
    %52 = arith.addf %47, %51 : vector<24x1152xf32>
    %53 = vector.extract_strided_slice %23 {offsets = [0, 104], sizes = [16, 1152], strides = [1, 1]} : vector<16x1568xbf16> to vector<16x1152xbf16>
    %c6 = arith.constant 6 : index
    %c0_43 = arith.constant 0 : index
    %c0_44 = arith.constant 0 : index
    %54 = vector.load %arg4[%c6, %c0_43, %c0_44] : memref<25x24x16xbf16, #tpu.memory_space<vmem>>, vector<1x24x16xbf16>
    %55 = vector.shape_cast %54 : vector<1x24x16xbf16> to vector<24x16xbf16>
    %cst_45 = arith.constant dense<0.000000e+00> : vector<24x1152xf32>
    %56 = tpu.matmul %55, %53, %cst_45 {dimension_numbers = #tpu.dot_dimension_numbers<[1], [0], [0], [1], [0, 0, 1, 1], [], []>} : vector<24x16xbf16>, vector<16x1152xbf16>, vector<24x1152xf32> -> vector<24x1152xf32>
    %57 = arith.addf %52, %56 : vector<24x1152xf32>
    %58 = vector.extract_strided_slice %23 {offsets = [0, 112], sizes = [16, 1152], strides = [1, 1]} : vector<16x1568xbf16> to vector<16x1152xbf16>
    %c7 = arith.constant 7 : index
    %c0_46 = arith.constant 0 : index
    %c0_47 = arith.constant 0 : index
    %59 = vector.load %arg4[%c7, %c0_46, %c0_47] : memref<25x24x16xbf16, #tpu.memory_space<vmem>>, vector<1x24x16xbf16>
    %60 = vector.shape_cast %59 : vector<1x24x16xbf16> to vector<24x16xbf16>
    %cst_48 = arith.constant dense<0.000000e+00> : vector<24x1152xf32>
    %61 = tpu.matmul %60, %58, %cst_48 {dimension_numbers = #tpu.dot_dimension_numbers<[1], [0], [0], [1], [0, 0, 1, 1], [], []>} : vector<24x16xbf16>, vector<16x1152xbf16>, vector<24x1152xf32> -> vector<24x1152xf32>
    %62 = arith.addf %57, %61 : vector<24x1152xf32>
    %63 = vector.extract_strided_slice %23 {offsets = [0, 120], sizes = [16, 1152], strides = [1, 1]} : vector<16x1568xbf16> to vector<16x1152xbf16>
    %c8 = arith.constant 8 : index
    %c0_49 = arith.constant 0 : index
    %c0_50 = arith.constant 0 : index
    %64 = vector.load %arg4[%c8, %c0_49, %c0_50] : memref<25x24x16xbf16, #tpu.memory_space<vmem>>, vector<1x24x16xbf16>
    %65 = vector.shape_cast %64 : vector<1x24x16xbf16> to vector<24x16xbf16>
    %cst_51 = arith.constant dense<0.000000e+00> : vector<24x1152xf32>
    %66 = tpu.matmul %65, %63, %cst_51 {dimension_numbers = #tpu.dot_dimension_numbers<[1], [0], [0], [1], [0, 0, 1, 1], [], []>} : vector<24x16xbf16>, vector<16x1152xbf16>, vector<24x1152xf32> -> vector<24x1152xf32>
    %67 = arith.addf %62, %66 : vector<24x1152xf32>
    %68 = vector.extract_strided_slice %23 {offsets = [0, 128], sizes = [16, 1152], strides = [1, 1]} : vector<16x1568xbf16> to vector<16x1152xbf16>
    %c9 = arith.constant 9 : index
    %c0_52 = arith.constant 0 : index
    %c0_53 = arith.constant 0 : index
    %69 = vector.load %arg4[%c9, %c0_52, %c0_53] : memref<25x24x16xbf16, #tpu.memory_space<vmem>>, vector<1x24x16xbf16>
    %70 = vector.shape_cast %69 : vector<1x24x16xbf16> to vector<24x16xbf16>
    %cst_54 = arith.constant dense<0.000000e+00> : vector<24x1152xf32>
    %71 = tpu.matmul %70, %68, %cst_54 {dimension_numbers = #tpu.dot_dimension_numbers<[1], [0], [0], [1], [0, 0, 1, 1], [], []>} : vector<24x16xbf16>, vector<16x1152xbf16>, vector<24x1152xf32> -> vector<24x1152xf32>
    %72 = arith.addf %67, %71 : vector<24x1152xf32>
    %73 = vector.extract_strided_slice %23 {offsets = [0, 192], sizes = [16, 1152], strides = [1, 1]} : vector<16x1568xbf16> to vector<16x1152xbf16>
    %c10 = arith.constant 10 : index
    %c0_55 = arith.constant 0 : index
    %c0_56 = arith.constant 0 : index
    %74 = vector.load %arg4[%c10, %c0_55, %c0_56] : memref<25x24x16xbf16, #tpu.memory_space<vmem>>, vector<1x24x16xbf16>
    %75 = vector.shape_cast %74 : vector<1x24x16xbf16> to vector<24x16xbf16>
    %cst_57 = arith.constant dense<0.000000e+00> : vector<24x1152xf32>
    %76 = tpu.matmul %75, %73, %cst_57 {dimension_numbers = #tpu.dot_dimension_numbers<[1], [0], [0], [1], [0, 0, 1, 1], [], []>} : vector<24x16xbf16>, vector<16x1152xbf16>, vector<24x1152xf32> -> vector<24x1152xf32>
    %77 = arith.addf %72, %76 : vector<24x1152xf32>
    %78 = vector.extract_strided_slice %23 {offsets = [0, 200], sizes = [16, 1152], strides = [1, 1]} : vector<16x1568xbf16> to vector<16x1152xbf16>
    %c11 = arith.constant 11 : index
    %c0_58 = arith.constant 0 : index
    %c0_59 = arith.constant 0 : index
    %79 = vector.load %arg4[%c11, %c0_58, %c0_59] : memref<25x24x16xbf16, #tpu.memory_space<vmem>>, vector<1x24x16xbf16>
    %80 = vector.shape_cast %79 : vector<1x24x16xbf16> to vector<24x16xbf16>
    %cst_60 = arith.constant dense<0.000000e+00> : vector<24x1152xf32>
    %81 = tpu.matmul %80, %78, %cst_60 {dimension_numbers = #tpu.dot_dimension_numbers<[1], [0], [0], [1], [0, 0, 1, 1], [], []>} : vector<24x16xbf16>, vector<16x1152xbf16>, vector<24x1152xf32> -> vector<24x1152xf32>
    %82 = arith.addf %77, %81 : vector<24x1152xf32>
    %83 = vector.extract_strided_slice %23 {offsets = [0, 208], sizes = [16, 1152], strides = [1, 1]} : vector<16x1568xbf16> to vector<16x1152xbf16>
    %c12 = arith.constant 12 : index
    %c0_61 = arith.constant 0 : index
    %c0_62 = arith.constant 0 : index
    %84 = vector.load %arg4[%c12, %c0_61, %c0_62] : memref<25x24x16xbf16, #tpu.memory_space<vmem>>, vector<1x24x16xbf16>
    %85 = vector.shape_cast %84 : vector<1x24x16xbf16> to vector<24x16xbf16>
    %cst_63 = arith.constant dense<0.000000e+00> : vector<24x1152xf32>
    %86 = tpu.matmul %85, %83, %cst_63 {dimension_numbers = #tpu.dot_dimension_numbers<[1], [0], [0], [1], [0, 0, 1, 1], [], []>} : vector<24x16xbf16>, vector<16x1152xbf16>, vector<24x1152xf32> -> vector<24x1152xf32>
    %87 = arith.addf %82, %86 : vector<24x1152xf32>
    %88 = vector.extract_strided_slice %23 {offsets = [0, 216], sizes = [16, 1152], strides = [1, 1]} : vector<16x1568xbf16> to vector<16x1152xbf16>
    %c13 = arith.constant 13 : index
    %c0_64 = arith.constant 0 : index
    %c0_65 = arith.constant 0 : index
    %89 = vector.load %arg4[%c13, %c0_64, %c0_65] : memref<25x24x16xbf16, #tpu.memory_space<vmem>>, vector<1x24x16xbf16>
    %90 = vector.shape_cast %89 : vector<1x24x16xbf16> to vector<24x16xbf16>
    %cst_66 = arith.constant dense<0.000000e+00> : vector<24x1152xf32>
    %91 = tpu.matmul %90, %88, %cst_66 {dimension_numbers = #tpu.dot_dimension_numbers<[1], [0], [0], [1], [0, 0, 1, 1], [], []>} : vector<24x16xbf16>, vector<16x1152xbf16>, vector<24x1152xf32> -> vector<24x1152xf32>
    %92 = arith.addf %87, %91 : vector<24x1152xf32>
    %93 = vector.extract_strided_slice %23 {offsets = [0, 224], sizes = [16, 1152], strides = [1, 1]} : vector<16x1568xbf16> to vector<16x1152xbf16>
    %c14 = arith.constant 14 : index
    %c0_67 = arith.constant 0 : index
    %c0_68 = arith.constant 0 : index
    %94 = vector.load %arg4[%c14, %c0_67, %c0_68] : memref<25x24x16xbf16, #tpu.memory_space<vmem>>, vector<1x24x16xbf16>
    %95 = vector.shape_cast %94 : vector<1x24x16xbf16> to vector<24x16xbf16>
    %cst_69 = arith.constant dense<0.000000e+00> : vector<24x1152xf32>
    %96 = tpu.matmul %95, %93, %cst_69 {dimension_numbers = #tpu.dot_dimension_numbers<[1], [0], [0], [1], [0, 0, 1, 1], [], []>} : vector<24x16xbf16>, vector<16x1152xbf16>, vector<24x1152xf32> -> vector<24x1152xf32>
    %97 = arith.addf %92, %96 : vector<24x1152xf32>
    %98 = vector.extract_strided_slice %23 {offsets = [0, 288], sizes = [16, 1152], strides = [1, 1]} : vector<16x1568xbf16> to vector<16x1152xbf16>
    %c15 = arith.constant 15 : index
    %c0_70 = arith.constant 0 : index
    %c0_71 = arith.constant 0 : index
    %99 = vector.load %arg4[%c15, %c0_70, %c0_71] : memref<25x24x16xbf16, #tpu.memory_space<vmem>>, vector<1x24x16xbf16>
    %100 = vector.shape_cast %99 : vector<1x24x16xbf16> to vector<24x16xbf16>
    %cst_72 = arith.constant dense<0.000000e+00> : vector<24x1152xf32>
    %101 = tpu.matmul %100, %98, %cst_72 {dimension_numbers = #tpu.dot_dimension_numbers<[1], [0], [0], [1], [0, 0, 1, 1], [], []>} : vector<24x16xbf16>, vector<16x1152xbf16>, vector<24x1152xf32> -> vector<24x1152xf32>
    %102 = arith.addf %97, %101 : vector<24x1152xf32>
    %103 = vector.extract_strided_slice %23 {offsets = [0, 296], sizes = [16, 1152], strides = [1, 1]} : vector<16x1568xbf16> to vector<16x1152xbf16>
    %c16 = arith.constant 16 : index
    %c0_73 = arith.constant 0 : index
    %c0_74 = arith.constant 0 : index
    %104 = vector.load %arg4[%c16, %c0_73, %c0_74] : memref<25x24x16xbf16, #tpu.memory_space<vmem>>, vector<1x24x16xbf16>
    %105 = vector.shape_cast %104 : vector<1x24x16xbf16> to vector<24x16xbf16>
    %cst_75 = arith.constant dense<0.000000e+00> : vector<24x1152xf32>
    %106 = tpu.matmul %105, %103, %cst_75 {dimension_numbers = #tpu.dot_dimension_numbers<[1], [0], [0], [1], [0, 0, 1, 1], [], []>} : vector<24x16xbf16>, vector<16x1152xbf16>, vector<24x1152xf32> -> vector<24x1152xf32>
    %107 = arith.addf %102, %106 : vector<24x1152xf32>
    %108 = vector.extract_strided_slice %23 {offsets = [0, 304], sizes = [16, 1152], strides = [1, 1]} : vector<16x1568xbf16> to vector<16x1152xbf16>
    %c17 = arith.constant 17 : index
    %c0_76 = arith.constant 0 : index
    %c0_77 = arith.constant 0 : index
    %109 = vector.load %arg4[%c17, %c0_76, %c0_77] : memref<25x24x16xbf16, #tpu.memory_space<vmem>>, vector<1x24x16xbf16>
    %110 = vector.shape_cast %109 : vector<1x24x16xbf16> to vector<24x16xbf16>
    %cst_78 = arith.constant dense<0.000000e+00> : vector<24x1152xf32>
    %111 = tpu.matmul %110, %108, %cst_78 {dimension_numbers = #tpu.dot_dimension_numbers<[1], [0], [0], [1], [0, 0, 1, 1], [], []>} : vector<24x16xbf16>, vector<16x1152xbf16>, vector<24x1152xf32> -> vector<24x1152xf32>
    %112 = arith.addf %107, %111 : vector<24x1152xf32>
    %113 = vector.extract_strided_slice %23 {offsets = [0, 312], sizes = [16, 1152], strides = [1, 1]} : vector<16x1568xbf16> to vector<16x1152xbf16>
    %c18 = arith.constant 18 : index
    %c0_79 = arith.constant 0 : index
    %c0_80 = arith.constant 0 : index
    %114 = vector.load %arg4[%c18, %c0_79, %c0_80] : memref<25x24x16xbf16, #tpu.memory_space<vmem>>, vector<1x24x16xbf16>
    %115 = vector.shape_cast %114 : vector<1x24x16xbf16> to vector<24x16xbf16>
    %cst_81 = arith.constant dense<0.000000e+00> : vector<24x1152xf32>
    %116 = tpu.matmul %115, %113, %cst_81 {dimension_numbers = #tpu.dot_dimension_numbers<[1], [0], [0], [1], [0, 0, 1, 1], [], []>} : vector<24x16xbf16>, vector<16x1152xbf16>, vector<24x1152xf32> -> vector<24x1152xf32>
    %117 = arith.addf %112, %116 : vector<24x1152xf32>
    %118 = vector.extract_strided_slice %23 {offsets = [0, 320], sizes = [16, 1152], strides = [1, 1]} : vector<16x1568xbf16> to vector<16x1152xbf16>
    %c19 = arith.constant 19 : index
    %c0_82 = arith.constant 0 : index
    %c0_83 = arith.constant 0 : index
    %119 = vector.load %arg4[%c19, %c0_82, %c0_83] : memref<25x24x16xbf16, #tpu.memory_space<vmem>>, vector<1x24x16xbf16>
    %120 = vector.shape_cast %119 : vector<1x24x16xbf16> to vector<24x16xbf16>
    %cst_84 = arith.constant dense<0.000000e+00> : vector<24x1152xf32>
    %121 = tpu.matmul %120, %118, %cst_84 {dimension_numbers = #tpu.dot_dimension_numbers<[1], [0], [0], [1], [0, 0, 1, 1], [], []>} : vector<24x16xbf16>, vector<16x1152xbf16>, vector<24x1152xf32> -> vector<24x1152xf32>
    %122 = arith.addf %117, %121 : vector<24x1152xf32>
    %123 = vector.extract_strided_slice %23 {offsets = [0, 384], sizes = [16, 1152], strides = [1, 1]} : vector<16x1568xbf16> to vector<16x1152xbf16>
    %c20 = arith.constant 20 : index
    %c0_85 = arith.constant 0 : index
    %c0_86 = arith.constant 0 : index
    %124 = vector.load %arg4[%c20, %c0_85, %c0_86] : memref<25x24x16xbf16, #tpu.memory_space<vmem>>, vector<1x24x16xbf16>
    %125 = vector.shape_cast %124 : vector<1x24x16xbf16> to vector<24x16xbf16>
    %cst_87 = arith.constant dense<0.000000e+00> : vector<24x1152xf32>
    %126 = tpu.matmul %125, %123, %cst_87 {dimension_numbers = #tpu.dot_dimension_numbers<[1], [0], [0], [1], [0, 0, 1, 1], [], []>} : vector<24x16xbf16>, vector<16x1152xbf16>, vector<24x1152xf32> -> vector<24x1152xf32>
    %127 = arith.addf %122, %126 : vector<24x1152xf32>
    %128 = vector.extract_strided_slice %23 {offsets = [0, 392], sizes = [16, 1152], strides = [1, 1]} : vector<16x1568xbf16> to vector<16x1152xbf16>
    %c21 = arith.constant 21 : index
    %c0_88 = arith.constant 0 : index
    %c0_89 = arith.constant 0 : index
    %129 = vector.load %arg4[%c21, %c0_88, %c0_89] : memref<25x24x16xbf16, #tpu.memory_space<vmem>>, vector<1x24x16xbf16>
    %130 = vector.shape_cast %129 : vector<1x24x16xbf16> to vector<24x16xbf16>
    %cst_90 = arith.constant dense<0.000000e+00> : vector<24x1152xf32>
    %131 = tpu.matmul %130, %128, %cst_90 {dimension_numbers = #tpu.dot_dimension_numbers<[1], [0], [0], [1], [0, 0, 1, 1], [], []>} : vector<24x16xbf16>, vector<16x1152xbf16>, vector<24x1152xf32> -> vector<24x1152xf32>
    %132 = arith.addf %127, %131 : vector<24x1152xf32>
    %133 = vector.extract_strided_slice %23 {offsets = [0, 400], sizes = [16, 1152], strides = [1, 1]} : vector<16x1568xbf16> to vector<16x1152xbf16>
    %c22 = arith.constant 22 : index
    %c0_91 = arith.constant 0 : index
    %c0_92 = arith.constant 0 : index
    %134 = vector.load %arg4[%c22, %c0_91, %c0_92] : memref<25x24x16xbf16, #tpu.memory_space<vmem>>, vector<1x24x16xbf16>
    %135 = vector.shape_cast %134 : vector<1x24x16xbf16> to vector<24x16xbf16>
    %cst_93 = arith.constant dense<0.000000e+00> : vector<24x1152xf32>
    %136 = tpu.matmul %135, %133, %cst_93 {dimension_numbers = #tpu.dot_dimension_numbers<[1], [0], [0], [1], [0, 0, 1, 1], [], []>} : vector<24x16xbf16>, vector<16x1152xbf16>, vector<24x1152xf32> -> vector<24x1152xf32>
    %137 = arith.addf %132, %136 : vector<24x1152xf32>
    %138 = vector.extract_strided_slice %23 {offsets = [0, 408], sizes = [16, 1152], strides = [1, 1]} : vector<16x1568xbf16> to vector<16x1152xbf16>
    %c23 = arith.constant 23 : index
    %c0_94 = arith.constant 0 : index
    %c0_95 = arith.constant 0 : index
    %139 = vector.load %arg4[%c23, %c0_94, %c0_95] : memref<25x24x16xbf16, #tpu.memory_space<vmem>>, vector<1x24x16xbf16>
    %140 = vector.shape_cast %139 : vector<1x24x16xbf16> to vector<24x16xbf16>
    %cst_96 = arith.constant dense<0.000000e+00> : vector<24x1152xf32>
    %141 = tpu.matmul %140, %138, %cst_96 {dimension_numbers = #tpu.dot_dimension_numbers<[1], [0], [0], [1], [0, 0, 1, 1], [], []>} : vector<24x16xbf16>, vector<16x1152xbf16>, vector<24x1152xf32> -> vector<24x1152xf32>
    %142 = arith.addf %137, %141 : vector<24x1152xf32>
    %143 = vector.extract_strided_slice %23 {offsets = [0, 416], sizes = [16, 1152], strides = [1, 1]} : vector<16x1568xbf16> to vector<16x1152xbf16>
    %c24 = arith.constant 24 : index
    %c0_97 = arith.constant 0 : index
    %c0_98 = arith.constant 0 : index
    %144 = vector.load %arg4[%c24, %c0_97, %c0_98] : memref<25x24x16xbf16, #tpu.memory_space<vmem>>, vector<1x24x16xbf16>
    %145 = vector.shape_cast %144 : vector<1x24x16xbf16> to vector<24x16xbf16>
    %cst_99 = arith.constant dense<0.000000e+00> : vector<24x1152xf32>
    %146 = tpu.matmul %145, %143, %cst_99 {dimension_numbers = #tpu.dot_dimension_numbers<[1], [0], [0], [1], [0, 0, 1, 1], [], []>} : vector<24x16xbf16>, vector<16x1152xbf16>, vector<24x1152xf32> -> vector<24x1152xf32>
    %147 = arith.addf %142, %146 : vector<24x1152xf32>
    %c0_100 = arith.constant 0 : index
    %c0_101 = arith.constant 0 : index
    %148 = vector.load %arg5[%c0_100, %c0_101] : memref<24x1xf32, #tpu.memory_space<vmem>>, vector<24x1xf32>
    %149 = vector.extract_strided_slice %147 {offsets = [0, 0], sizes = [24, 8], strides = [1, 1]} : vector<24x1152xf32> to vector<24x8xf32>
    %150 = vector.extract_strided_slice %147 {offsets = [0, 8], sizes = [24, 8], strides = [1, 1]} : vector<24x1152xf32> to vector<24x8xf32>
    %151 = vector.extract_strided_slice %147 {offsets = [0, 96], sizes = [24, 8], strides = [1, 1]} : vector<24x1152xf32> to vector<24x8xf32>
    %152 = vector.extract_strided_slice %147 {offsets = [0, 104], sizes = [24, 8], strides = [1, 1]} : vector<24x1152xf32> to vector<24x8xf32>
    %153 = arith.maximumf %149, %150 : vector<24x8xf32>
    %154 = arith.maximumf %151, %152 : vector<24x8xf32>
    %155 = arith.maximumf %153, %154 : vector<24x8xf32>
    %156 = vector.broadcast %148 : vector<24x1xf32> to vector<24x8xf32>
    %157 = arith.addf %155, %156 : vector<24x8xf32>
    %cst_102 = arith.constant 0.000000e+00 : f32
    %158 = vector.broadcast %cst_102 : f32 to vector<24x8xf32>
    %159 = arith.maximumf %157, %158 : vector<24x8xf32>
    %160 = vector.extract_strided_slice %147 {offsets = [0, 16], sizes = [24, 8], strides = [1, 1]} : vector<24x1152xf32> to vector<24x8xf32>
    %161 = vector.extract_strided_slice %147 {offsets = [0, 24], sizes = [24, 8], strides = [1, 1]} : vector<24x1152xf32> to vector<24x8xf32>
    %162 = vector.extract_strided_slice %147 {offsets = [0, 112], sizes = [24, 8], strides = [1, 1]} : vector<24x1152xf32> to vector<24x8xf32>
    %163 = vector.extract_strided_slice %147 {offsets = [0, 120], sizes = [24, 8], strides = [1, 1]} : vector<24x1152xf32> to vector<24x8xf32>
    %164 = arith.maximumf %160, %161 : vector<24x8xf32>
    %165 = arith.maximumf %162, %163 : vector<24x8xf32>
    %166 = arith.maximumf %164, %165 : vector<24x8xf32>
    %167 = vector.broadcast %148 : vector<24x1xf32> to vector<24x8xf32>
    %168 = arith.addf %166, %167 : vector<24x8xf32>
    %cst_103 = arith.constant 0.000000e+00 : f32
    %169 = vector.broadcast %cst_103 : f32 to vector<24x8xf32>
    %170 = arith.maximumf %168, %169 : vector<24x8xf32>
    %171 = vector.extract_strided_slice %147 {offsets = [0, 32], sizes = [24, 8], strides = [1, 1]} : vector<24x1152xf32> to vector<24x8xf32>
    %172 = vector.extract_strided_slice %147 {offsets = [0, 40], sizes = [24, 8], strides = [1, 1]} : vector<24x1152xf32> to vector<24x8xf32>
    %173 = vector.extract_strided_slice %147 {offsets = [0, 128], sizes = [24, 8], strides = [1, 1]} : vector<24x1152xf32> to vector<24x8xf32>
    %174 = vector.extract_strided_slice %147 {offsets = [0, 136], sizes = [24, 8], strides = [1, 1]} : vector<24x1152xf32> to vector<24x8xf32>
    %175 = arith.maximumf %171, %172 : vector<24x8xf32>
    %176 = arith.maximumf %173, %174 : vector<24x8xf32>
    %177 = arith.maximumf %175, %176 : vector<24x8xf32>
    %178 = vector.broadcast %148 : vector<24x1xf32> to vector<24x8xf32>
    %179 = arith.addf %177, %178 : vector<24x8xf32>
    %cst_104 = arith.constant 0.000000e+00 : f32
    %180 = vector.broadcast %cst_104 : f32 to vector<24x8xf32>
    %181 = arith.maximumf %179, %180 : vector<24x8xf32>
    %182 = vector.extract_strided_slice %147 {offsets = [0, 48], sizes = [24, 8], strides = [1, 1]} : vector<24x1152xf32> to vector<24x8xf32>
    %183 = vector.extract_strided_slice %147 {offsets = [0, 56], sizes = [24, 8], strides = [1, 1]} : vector<24x1152xf32> to vector<24x8xf32>
    %184 = vector.extract_strided_slice %147 {offsets = [0, 144], sizes = [24, 8], strides = [1, 1]} : vector<24x1152xf32> to vector<24x8xf32>
    %185 = vector.extract_strided_slice %147 {offsets = [0, 152], sizes = [24, 8], strides = [1, 1]} : vector<24x1152xf32> to vector<24x8xf32>
    %186 = arith.maximumf %182, %183 : vector<24x8xf32>
    %187 = arith.maximumf %184, %185 : vector<24x8xf32>
    %188 = arith.maximumf %186, %187 : vector<24x8xf32>
    %189 = vector.broadcast %148 : vector<24x1xf32> to vector<24x8xf32>
    %190 = arith.addf %188, %189 : vector<24x8xf32>
    %cst_105 = arith.constant 0.000000e+00 : f32
    %191 = vector.broadcast %cst_105 : f32 to vector<24x8xf32>
    %192 = arith.maximumf %190, %191 : vector<24x8xf32>
    %193 = vector.extract_strided_slice %147 {offsets = [0, 192], sizes = [24, 8], strides = [1, 1]} : vector<24x1152xf32> to vector<24x8xf32>
    %194 = vector.extract_strided_slice %147 {offsets = [0, 200], sizes = [24, 8], strides = [1, 1]} : vector<24x1152xf32> to vector<24x8xf32>
    %195 = vector.extract_strided_slice %147 {offsets = [0, 288], sizes = [24, 8], strides = [1, 1]} : vector<24x1152xf32> to vector<24x8xf32>
    %196 = vector.extract_strided_slice %147 {offsets = [0, 296], sizes = [24, 8], strides = [1, 1]} : vector<24x1152xf32> to vector<24x8xf32>
    %197 = arith.maximumf %193, %194 : vector<24x8xf32>
    %198 = arith.maximumf %195, %196 : vector<24x8xf32>
    %199 = arith.maximumf %197, %198 : vector<24x8xf32>
    %200 = vector.broadcast %148 : vector<24x1xf32> to vector<24x8xf32>
    %201 = arith.addf %199, %200 : vector<24x8xf32>
    %cst_106 = arith.constant 0.000000e+00 : f32
    %202 = vector.broadcast %cst_106 : f32 to vector<24x8xf32>
    %203 = arith.maximumf %201, %202 : vector<24x8xf32>
    %204 = vector.extract_strided_slice %147 {offsets = [0, 208], sizes = [24, 8], strides = [1, 1]} : vector<24x1152xf32> to vector<24x8xf32>
    %205 = vector.extract_strided_slice %147 {offsets = [0, 216], sizes = [24, 8], strides = [1, 1]} : vector<24x1152xf32> to vector<24x8xf32>
    %206 = vector.extract_strided_slice %147 {offsets = [0, 304], sizes = [24, 8], strides = [1, 1]} : vector<24x1152xf32> to vector<24x8xf32>
    %207 = vector.extract_strided_slice %147 {offsets = [0, 312], sizes = [24, 8], strides = [1, 1]} : vector<24x1152xf32> to vector<24x8xf32>
    %208 = arith.maximumf %204, %205 : vector<24x8xf32>
    %209 = arith.maximumf %206, %207 : vector<24x8xf32>
    %210 = arith.maximumf %208, %209 : vector<24x8xf32>
    %211 = vector.broadcast %148 : vector<24x1xf32> to vector<24x8xf32>
    %212 = arith.addf %210, %211 : vector<24x8xf32>
    %cst_107 = arith.constant 0.000000e+00 : f32
    %213 = vector.broadcast %cst_107 : f32 to vector<24x8xf32>
    %214 = arith.maximumf %212, %213 : vector<24x8xf32>
    %215 = vector.extract_strided_slice %147 {offsets = [0, 224], sizes = [24, 8], strides = [1, 1]} : vector<24x1152xf32> to vector<24x8xf32>
    %216 = vector.extract_strided_slice %147 {offsets = [0, 232], sizes = [24, 8], strides = [1, 1]} : vector<24x1152xf32> to vector<24x8xf32>
    %217 = vector.extract_strided_slice %147 {offsets = [0, 320], sizes = [24, 8], strides = [1, 1]} : vector<24x1152xf32> to vector<24x8xf32>
    %218 = vector.extract_strided_slice %147 {offsets = [0, 328], sizes = [24, 8], strides = [1, 1]} : vector<24x1152xf32> to vector<24x8xf32>
    %219 = arith.maximumf %215, %216 : vector<24x8xf32>
    %220 = arith.maximumf %217, %218 : vector<24x8xf32>
    %221 = arith.maximumf %219, %220 : vector<24x8xf32>
    %222 = vector.broadcast %148 : vector<24x1xf32> to vector<24x8xf32>
    %223 = arith.addf %221, %222 : vector<24x8xf32>
    %cst_108 = arith.constant 0.000000e+00 : f32
    %224 = vector.broadcast %cst_108 : f32 to vector<24x8xf32>
    %225 = arith.maximumf %223, %224 : vector<24x8xf32>
    %226 = vector.extract_strided_slice %147 {offsets = [0, 240], sizes = [24, 8], strides = [1, 1]} : vector<24x1152xf32> to vector<24x8xf32>
    %227 = vector.extract_strided_slice %147 {offsets = [0, 248], sizes = [24, 8], strides = [1, 1]} : vector<24x1152xf32> to vector<24x8xf32>
    %228 = vector.extract_strided_slice %147 {offsets = [0, 336], sizes = [24, 8], strides = [1, 1]} : vector<24x1152xf32> to vector<24x8xf32>
    %229 = vector.extract_strided_slice %147 {offsets = [0, 344], sizes = [24, 8], strides = [1, 1]} : vector<24x1152xf32> to vector<24x8xf32>
    %230 = arith.maximumf %226, %227 : vector<24x8xf32>
    %231 = arith.maximumf %228, %229 : vector<24x8xf32>
    %232 = arith.maximumf %230, %231 : vector<24x8xf32>
    %233 = vector.broadcast %148 : vector<24x1xf32> to vector<24x8xf32>
    %234 = arith.addf %232, %233 : vector<24x8xf32>
    %cst_109 = arith.constant 0.000000e+00 : f32
    %235 = vector.broadcast %cst_109 : f32 to vector<24x8xf32>
    %236 = arith.maximumf %234, %235 : vector<24x8xf32>
    %237 = vector.extract_strided_slice %147 {offsets = [0, 384], sizes = [24, 8], strides = [1, 1]} : vector<24x1152xf32> to vector<24x8xf32>
    %238 = vector.extract_strided_slice %147 {offsets = [0, 392], sizes = [24, 8], strides = [1, 1]} : vector<24x1152xf32> to vector<24x8xf32>
    %239 = vector.extract_strided_slice %147 {offsets = [0, 480], sizes = [24, 8], strides = [1, 1]} : vector<24x1152xf32> to vector<24x8xf32>
    %240 = vector.extract_strided_slice %147 {offsets = [0, 488], sizes = [24, 8], strides = [1, 1]} : vector<24x1152xf32> to vector<24x8xf32>
    %241 = arith.maximumf %237, %238 : vector<24x8xf32>
    %242 = arith.maximumf %239, %240 : vector<24x8xf32>
    %243 = arith.maximumf %241, %242 : vector<24x8xf32>
    %244 = vector.broadcast %148 : vector<24x1xf32> to vector<24x8xf32>
    %245 = arith.addf %243, %244 : vector<24x8xf32>
    %cst_110 = arith.constant 0.000000e+00 : f32
    %246 = vector.broadcast %cst_110 : f32 to vector<24x8xf32>
    %247 = arith.maximumf %245, %246 : vector<24x8xf32>
    %248 = vector.extract_strided_slice %147 {offsets = [0, 400], sizes = [24, 8], strides = [1, 1]} : vector<24x1152xf32> to vector<24x8xf32>
    %249 = vector.extract_strided_slice %147 {offsets = [0, 408], sizes = [24, 8], strides = [1, 1]} : vector<24x1152xf32> to vector<24x8xf32>
    %250 = vector.extract_strided_slice %147 {offsets = [0, 496], sizes = [24, 8], strides = [1, 1]} : vector<24x1152xf32> to vector<24x8xf32>
    %251 = vector.extract_strided_slice %147 {offsets = [0, 504], sizes = [24, 8], strides = [1, 1]} : vector<24x1152xf32> to vector<24x8xf32>
    %252 = arith.maximumf %248, %249 : vector<24x8xf32>
    %253 = arith.maximumf %250, %251 : vector<24x8xf32>
    %254 = arith.maximumf %252, %253 : vector<24x8xf32>
    %255 = vector.broadcast %148 : vector<24x1xf32> to vector<24x8xf32>
    %256 = arith.addf %254, %255 : vector<24x8xf32>
    %cst_111 = arith.constant 0.000000e+00 : f32
    %257 = vector.broadcast %cst_111 : f32 to vector<24x8xf32>
    %258 = arith.maximumf %256, %257 : vector<24x8xf32>
    %259 = vector.extract_strided_slice %147 {offsets = [0, 416], sizes = [24, 8], strides = [1, 1]} : vector<24x1152xf32> to vector<24x8xf32>
    %260 = vector.extract_strided_slice %147 {offsets = [0, 424], sizes = [24, 8], strides = [1, 1]} : vector<24x1152xf32> to vector<24x8xf32>
    %261 = vector.extract_strided_slice %147 {offsets = [0, 512], sizes = [24, 8], strides = [1, 1]} : vector<24x1152xf32> to vector<24x8xf32>
    %262 = vector.extract_strided_slice %147 {offsets = [0, 520], sizes = [24, 8], strides = [1, 1]} : vector<24x1152xf32> to vector<24x8xf32>
    %263 = arith.maximumf %259, %260 : vector<24x8xf32>
    %264 = arith.maximumf %261, %262 : vector<24x8xf32>
    %265 = arith.maximumf %263, %264 : vector<24x8xf32>
    %266 = vector.broadcast %148 : vector<24x1xf32> to vector<24x8xf32>
    %267 = arith.addf %265, %266 : vector<24x8xf32>
    %cst_112 = arith.constant 0.000000e+00 : f32
    %268 = vector.broadcast %cst_112 : f32 to vector<24x8xf32>
    %269 = arith.maximumf %267, %268 : vector<24x8xf32>
    %270 = vector.extract_strided_slice %147 {offsets = [0, 432], sizes = [24, 8], strides = [1, 1]} : vector<24x1152xf32> to vector<24x8xf32>
    %271 = vector.extract_strided_slice %147 {offsets = [0, 440], sizes = [24, 8], strides = [1, 1]} : vector<24x1152xf32> to vector<24x8xf32>
    %272 = vector.extract_strided_slice %147 {offsets = [0, 528], sizes = [24, 8], strides = [1, 1]} : vector<24x1152xf32> to vector<24x8xf32>
    %273 = vector.extract_strided_slice %147 {offsets = [0, 536], sizes = [24, 8], strides = [1, 1]} : vector<24x1152xf32> to vector<24x8xf32>
    %274 = arith.maximumf %270, %271 : vector<24x8xf32>
    %275 = arith.maximumf %272, %273 : vector<24x8xf32>
    %276 = arith.maximumf %274, %275 : vector<24x8xf32>
    %277 = vector.broadcast %148 : vector<24x1xf32> to vector<24x8xf32>
    %278 = arith.addf %276, %277 : vector<24x8xf32>
    %cst_113 = arith.constant 0.000000e+00 : f32
    %279 = vector.broadcast %cst_113 : f32 to vector<24x8xf32>
    %280 = arith.maximumf %278, %279 : vector<24x8xf32>
    %281 = vector.extract_strided_slice %147 {offsets = [0, 576], sizes = [24, 8], strides = [1, 1]} : vector<24x1152xf32> to vector<24x8xf32>
    %282 = vector.extract_strided_slice %147 {offsets = [0, 584], sizes = [24, 8], strides = [1, 1]} : vector<24x1152xf32> to vector<24x8xf32>
    %283 = vector.extract_strided_slice %147 {offsets = [0, 672], sizes = [24, 8], strides = [1, 1]} : vector<24x1152xf32> to vector<24x8xf32>
    %284 = vector.extract_strided_slice %147 {offsets = [0, 680], sizes = [24, 8], strides = [1, 1]} : vector<24x1152xf32> to vector<24x8xf32>
    %285 = arith.maximumf %281, %282 : vector<24x8xf32>
    %286 = arith.maximumf %283, %284 : vector<24x8xf32>
    %287 = arith.maximumf %285, %286 : vector<24x8xf32>
    %288 = vector.broadcast %148 : vector<24x1xf32> to vector<24x8xf32>
    %289 = arith.addf %287, %288 : vector<24x8xf32>
    %cst_114 = arith.constant 0.000000e+00 : f32
    %290 = vector.broadcast %cst_114 : f32 to vector<24x8xf32>
    %291 = arith.maximumf %289, %290 : vector<24x8xf32>
    %292 = vector.extract_strided_slice %147 {offsets = [0, 592], sizes = [24, 8], strides = [1, 1]} : vector<24x1152xf32> to vector<24x8xf32>
    %293 = vector.extract_strided_slice %147 {offsets = [0, 600], sizes = [24, 8], strides = [1, 1]} : vector<24x1152xf32> to vector<24x8xf32>
    %294 = vector.extract_strided_slice %147 {offsets = [0, 688], sizes = [24, 8], strides = [1, 1]} : vector<24x1152xf32> to vector<24x8xf32>
    %295 = vector.extract_strided_slice %147 {offsets = [0, 696], sizes = [24, 8], strides = [1, 1]} : vector<24x1152xf32> to vector<24x8xf32>
    %296 = arith.maximumf %292, %293 : vector<24x8xf32>
    %297 = arith.maximumf %294, %295 : vector<24x8xf32>
    %298 = arith.maximumf %296, %297 : vector<24x8xf32>
    %299 = vector.broadcast %148 : vector<24x1xf32> to vector<24x8xf32>
    %300 = arith.addf %298, %299 : vector<24x8xf32>
    %cst_115 = arith.constant 0.000000e+00 : f32
    %301 = vector.broadcast %cst_115 : f32 to vector<24x8xf32>
    %302 = arith.maximumf %300, %301 : vector<24x8xf32>
    %303 = vector.extract_strided_slice %147 {offsets = [0, 608], sizes = [24, 8], strides = [1, 1]} : vector<24x1152xf32> to vector<24x8xf32>
    %304 = vector.extract_strided_slice %147 {offsets = [0, 616], sizes = [24, 8], strides = [1, 1]} : vector<24x1152xf32> to vector<24x8xf32>
    %305 = vector.extract_strided_slice %147 {offsets = [0, 704], sizes = [24, 8], strides = [1, 1]} : vector<24x1152xf32> to vector<24x8xf32>
    %306 = vector.extract_strided_slice %147 {offsets = [0, 712], sizes = [24, 8], strides = [1, 1]} : vector<24x1152xf32> to vector<24x8xf32>
    %307 = arith.maximumf %303, %304 : vector<24x8xf32>
    %308 = arith.maximumf %305, %306 : vector<24x8xf32>
    %309 = arith.maximumf %307, %308 : vector<24x8xf32>
    %310 = vector.broadcast %148 : vector<24x1xf32> to vector<24x8xf32>
    %311 = arith.addf %309, %310 : vector<24x8xf32>
    %cst_116 = arith.constant 0.000000e+00 : f32
    %312 = vector.broadcast %cst_116 : f32 to vector<24x8xf32>
    %313 = arith.maximumf %311, %312 : vector<24x8xf32>
    %314 = vector.extract_strided_slice %147 {offsets = [0, 624], sizes = [24, 8], strides = [1, 1]} : vector<24x1152xf32> to vector<24x8xf32>
    %315 = vector.extract_strided_slice %147 {offsets = [0, 632], sizes = [24, 8], strides = [1, 1]} : vector<24x1152xf32> to vector<24x8xf32>
    %316 = vector.extract_strided_slice %147 {offsets = [0, 720], sizes = [24, 8], strides = [1, 1]} : vector<24x1152xf32> to vector<24x8xf32>
    %317 = vector.extract_strided_slice %147 {offsets = [0, 728], sizes = [24, 8], strides = [1, 1]} : vector<24x1152xf32> to vector<24x8xf32>
    %318 = arith.maximumf %314, %315 : vector<24x8xf32>
    %319 = arith.maximumf %316, %317 : vector<24x8xf32>
    %320 = arith.maximumf %318, %319 : vector<24x8xf32>
    %321 = vector.broadcast %148 : vector<24x1xf32> to vector<24x8xf32>
    %322 = arith.addf %320, %321 : vector<24x8xf32>
    %cst_117 = arith.constant 0.000000e+00 : f32
    %323 = vector.broadcast %cst_117 : f32 to vector<24x8xf32>
    %324 = arith.maximumf %322, %323 : vector<24x8xf32>
    %325 = tpu.concatenate %159, %170, %181, %192, %203, %214, %225, %236, %247, %258, %269, %280, %291, %302, %313, %324 in 0 : vector<24x8xf32>, vector<24x8xf32>, vector<24x8xf32>, vector<24x8xf32>, vector<24x8xf32>, vector<24x8xf32>, vector<24x8xf32>, vector<24x8xf32>, vector<24x8xf32>, vector<24x8xf32>, vector<24x8xf32>, vector<24x8xf32>, vector<24x8xf32>, vector<24x8xf32>, vector<24x8xf32>, vector<24x8xf32> -> vector<384x8xf32>
    %c0_118 = arith.constant 0 : index
    %c0_119 = arith.constant 0 : index
    %326 = vector.load %arg6[%c0_118, %c0_119] : memref<64x384xf32, #tpu.memory_space<vmem>>, vector<64x384xf32>
    %cst_120 = arith.constant dense<0.000000e+00> : vector<64x8xf32>
    %327 = tpu.matmul %326, %325, %cst_120 {dimension_numbers = #tpu.dot_dimension_numbers<[1], [0], [0], [1], [0, 0, 1, 1], [], []>} : vector<64x384xf32>, vector<384x8xf32>, vector<64x8xf32> -> vector<64x8xf32>
    %c0_121 = arith.constant 0 : index
    %c0_122 = arith.constant 0 : index
    %328 = vector.load %arg7[%c0_121, %c0_122] : memref<64x1xf32, #tpu.memory_space<vmem>>, vector<64x1xf32>
    %329 = vector.broadcast %328 : vector<64x1xf32> to vector<64x8xf32>
    %330 = arith.addf %327, %329 : vector<64x8xf32>
    %cst_123 = arith.constant 0.000000e+00 : f32
    %331 = vector.broadcast %cst_123 : f32 to vector<64x8xf32>
    %332 = arith.maximumf %330, %331 : vector<64x8xf32>
    %cst_124 = arith.constant 0.000000e+00 : f32
    %333 = vector.broadcast %cst_124 : f32 to vector<64x120xf32>
    %334 = tpu.concatenate %332, %333 in 1 : vector<64x8xf32>, vector<64x120xf32> -> vector<64x128xf32>
    %c0_125 = arith.constant 0 : index
    %c0_126 = arith.constant 0 : index
    %335 = vector.load %arg8[%c0_125, %c0_126] : memref<128x64xf32, #tpu.memory_space<vmem>>, vector<128x64xf32>
    %cst_127 = arith.constant dense<0.000000e+00> : vector<128x128xf32>
    %336 = tpu.matmul %335, %334, %cst_127 {dimension_numbers = #tpu.dot_dimension_numbers<[1], [0], [0], [1], [0, 0, 1, 1], [], []>} : vector<128x64xf32>, vector<64x128xf32>, vector<128x128xf32> -> vector<128x128xf32>
    %c0_128 = arith.constant 0 : index
    %c0_129 = arith.constant 0 : index
    %337 = vector.load %arg9[%c0_128, %c0_129] : memref<128x1xf32, #tpu.memory_space<vmem>>, vector<128x1xf32>
    %338 = vector.broadcast %337 : vector<128x1xf32> to vector<128x128xf32>
    %339 = arith.addf %336, %338 : vector<128x128xf32>
    %340 = tpu.transpose %339, [1, 0] : vector<128x128xf32> -> vector<128x128xf32>
    %341 = vector.extract_strided_slice %340 {offsets = [0, 0], sizes = [8, 128], strides = [1, 1]} : vector<128x128xf32> to vector<8x128xf32>
    %cst_130 = arith.constant dense<0xFF800000> : vector<8xf32>
    %342 = vector.multi_reduction <maximumf>, %341, %cst_130 [1] : vector<8x128xf32> to vector<8xf32>
    %343 = vector.shape_cast %342 : vector<8xf32> to vector<8x1xf32>
    %344 = vector.broadcast %343 : vector<8x1xf32> to vector<8x128xf32>
    %345 = arith.subf %341, %344 : vector<8x128xf32>
    %346 = math.exp %345 : vector<8x128xf32>
    %cst_131 = arith.constant dense<0.000000e+00> : vector<8xf32>
    %347 = vector.multi_reduction <add>, %346, %cst_131 [1] : vector<8x128xf32> to vector<8xf32>
    %348 = vector.shape_cast %347 : vector<8xf32> to vector<8x1xf32>
    %349 = vector.broadcast %348 : vector<8x1xf32> to vector<8x128xf32>
    %350 = arith.divf %346, %349 : vector<8x128xf32>
    %c0_132 = arith.constant 0 : index
    %c0_133 = arith.constant 0 : index
    %c0_134 = arith.constant 0 : index
    %351 = vector.load %arg10[%c0_132, %c0_133, %c0_134] : memref<1x8x128xf32, #tpu.memory_space<vmem>>, vector<1x8x128xf32>
    %352 = vector.shape_cast %351 : vector<1x8x128xf32> to vector<8x128xf32>
    %353 = vector.shape_cast %350 : vector<8x128xf32> to vector<1x8x128xf32>
    tpu.vector_store %arg10[%c0_132, %c0_133, %c0_134], %353 {strides = array<i32>} : memref<1x8x128xf32, #tpu.memory_space<vmem>>, vector<1x8x128xf32>,
    return
  }
  func.func @transform_0(%arg0: i32) -> (i32, i32, i32, i32) {
    %c0_i32 = arith.constant 0 : i32
    %c0_i32_0 = arith.constant 0 : i32
    %c0_i32_1 = arith.constant 0 : i32
    %c0_i32_2 = arith.constant 0 : i32
    return %arg0, %c0_i32, %c0_i32_0, %c0_i32_1 : i32, i32, i32, i32
  }
  func.func @transform_1(%arg0: i32) -> (i32, i32) {
    %c0_i32 = arith.constant 0 : i32
    %c0_i32_0 = arith.constant 0 : i32
    %c0_i32_1 = arith.constant 0 : i32
    return %c0_i32, %c0_i32_0 : i32, i32
  }
  func.func @transform_2(%arg0: i32) -> (i32, i32) {
    %c0_i32 = arith.constant 0 : i32
    %c0_i32_0 = arith.constant 0 : i32
    %c0_i32_1 = arith.constant 0 : i32
    return %c0_i32, %c0_i32_0 : i32, i32
  }
  func.func @transform_3(%arg0: i32) -> (i32, i32, i32) {
    %c0_i32 = arith.constant 0 : i32
    %c0_i32_0 = arith.constant 0 : i32
    %c0_i32_1 = arith.constant 0 : i32
    %c0_i32_2 = arith.constant 0 : i32
    return %c0_i32, %c0_i32_0, %c0_i32_1 : i32, i32, i32
  }
  func.func @transform_4(%arg0: i32) -> (i32, i32) {
    %c0_i32 = arith.constant 0 : i32
    %c0_i32_0 = arith.constant 0 : i32
    %c0_i32_1 = arith.constant 0 : i32
    return %c0_i32, %c0_i32_0 : i32, i32
  }
  func.func @transform_5(%arg0: i32) -> (i32, i32) {
    %c0_i32 = arith.constant 0 : i32
    %c0_i32_0 = arith.constant 0 : i32
    %c0_i32_1 = arith.constant 0 : i32
    return %c0_i32, %c0_i32_0 : i32, i32
  }
  func.func @transform_6(%arg0: i32) -> (i32, i32) {
    %c0_i32 = arith.constant 0 : i32
    %c0_i32_0 = arith.constant 0 : i32
    %c0_i32_1 = arith.constant 0 : i32
    return %c0_i32, %c0_i32_0 : i32, i32
  }
  func.func @transform_7(%arg0: i32) -> (i32, i32) {
    %c0_i32 = arith.constant 0 : i32
    %c0_i32_0 = arith.constant 0 : i32
    %c0_i32_1 = arith.constant 0 : i32
    return %c0_i32, %c0_i32_0 : i32, i32
  }
  func.func @transform_8(%arg0: i32) -> (i32, i32) {
    %c0_i32 = arith.constant 0 : i32
    %c0_i32_0 = arith.constant 0 : i32
    %c0_i32_1 = arith.constant 0 : i32
    return %c0_i32, %c0_i32_0 : i32, i32
  }
  func.func @transform_9(%arg0: i32) -> (i32, i32, i32) {
    %c0_i32 = arith.constant 0 : i32
    %c0_i32_0 = arith.constant 0 : i32
    %c0_i32_1 = arith.constant 0 : i32
    return %arg0, %c0_i32, %c0_i32_0 : i32, i32, i32
  }
}

</mosaic_0001>

<llo_original>
// kernel: net_forward.1
$region0: #{net_forward.1}
  #allocation0 [shape = 'u32[]', space=smem, size = 0x4, offset = 0x4, fixed_abs, tag = 'smem constant byte address 0x4 - core index']
  #allocation1 [shape = 'u32[72,128]{1,0:T(1,128)}', space=vmem, size = 0x9000, scoped, tag = 'internal scratch']
  %s0 = inlined_call_operand.vmem [shape: bf16[1,4,32,1152], index: 0, kind: input, shape index: {}]
  %s1 = inlined_call_operand.vmem [shape: bf16[16,32], index: 1, kind: input, shape index: {}]
  %s2 = inlined_call_operand.vmem [shape: f32[16,1], index: 2, kind: input, shape index: {}]
  %s3 = inlined_call_operand.vmem [shape: bf16[25,24,16], index: 3, kind: input, shape index: {}]
  %s4 = inlined_call_operand.vmem [shape: f32[24,1], index: 4, kind: input, shape index: {}]
  %s5 = inlined_call_operand.vmem [shape: f32[64,384], index: 5, kind: input, shape index: {}]
  %s6 = inlined_call_operand.vmem [shape: f32[64,1], index: 6, kind: input, shape index: {}]
  %s7 = inlined_call_operand.vmem [shape: f32[128,64], index: 7, kind: input, shape index: {}]
  %s8 = inlined_call_operand.vmem [shape: f32[128,1], index: 8, kind: input, shape index: {}]
  %s9 = inlined_call_operand.vmem [shape: f32[1,8,128], index: 9, kind: output, shape index: {}]
  %s10 = sld [smem:[#allocation0]]
  $region46: #{net_forward.1} parent=0
    _
  %s12 = ssub.s32 1, %s10
  %s13 = scalar_select 0, %s12, %s10
  // Predicated region
  $region2: #{net_forward.1} parent=0 // pred_check
    _
  $region3: #{net_forward.1} parent=0 // pred_check_branch
    %15 = sbr.rel (0) target = $region5
  $region4: #{net_forward.1} parent=0 // pred_region
    _
  $region5: #{net_forward.1} parent=0 // pred_fallthru
    _
  // Predicated region
  $region6: #{net_forward.1} parent=0 // pred_check
    _
  $region7: #{net_forward.1} parent=0 // pred_check_branch
    %17 = sbr.rel (0) target = $region9
  $region8: #{net_forward.1} parent=0 // pred_region
    _
  $region9: #{net_forward.1} parent=0 // pred_fallthru
    _
  // Predicated region
  $region10: #{net_forward.1} parent=0 // pred_check
    _
  $region11: #{net_forward.1} parent=0 // pred_check_branch
    %19 = sbr.rel (0) target = $region13
  $region12: #{net_forward.1} parent=0 // pred_region
    _
  $region13: #{net_forward.1} parent=0 // pred_fallthru
    _
  // Predicated region
  $region14: #{net_forward.1} parent=0 // pred_check
    _
  $region15: #{net_forward.1} parent=0 // pred_check_branch
    %21 = sbr.rel (0) target = $region17
  $region16: #{net_forward.1} parent=0 // pred_region
    _
  $region17: #{net_forward.1} parent=0 // pred_fallthru
    _
  // Predicated region
  $region18: #{net_forward.1} parent=0 // pred_check
    _
  $region19: #{net_forward.1} parent=0 // pred_check_branch
    %23 = sbr.rel (0) target = $region21
  $region20: #{net_forward.1} parent=0 // pred_region
    _
  $region21: #{net_forward.1} parent=0 // pred_fallthru
    _
  // Predicated region
  $region22: #{net_forward.1} parent=0 // pred_check
    _
  $region23: #{net_forward.1} parent=0 // pred_check_branch
    %25 = sbr.rel (0) target = $region25
  $region24: #{net_forward.1} parent=0 // pred_region
    _
  $region25: #{net_forward.1} parent=0 // pred_fallthru
    _
  // Predicated region
  $region26: #{net_forward.1} parent=0 // pred_check
    _
  $region27: #{net_forward.1} parent=0 // pred_check_branch
    %27 = sbr.rel (0) target = $region29
  $region28: #{net_forward.1} parent=0 // pred_region
    _
  $region29: #{net_forward.1} parent=0 // pred_fallthru
    _
  // Predicated region
  $region30: #{net_forward.1} parent=0 // pred_check
    _
  $region31: #{net_forward.1} parent=0 // pred_check_branch
    %29 = sbr.rel (0) target = $region33
  $region32: #{net_forward.1} parent=0 // pred_region
    _
  $region33: #{net_forward.1} parent=0 // pred_fallthru
    _
  // Predicated region
  $region34: #{net_forward.1} parent=0 // pred_check
    _
  $region35: #{net_forward.1} parent=0 // pred_check_branch
    %31 = sbr.rel (0) target = $region37
  $region36: #{net_forward.1} parent=0 // pred_region
    _
  $region37: #{net_forward.1} parent=0 // pred_fallthru
    _
  %v33 = vld [vmem:[%s1] sm:$0xf]
  %v34 = vld [vmem:[%s1 + $0x4] sm:$0xf]
  %v35 = vld [vmem:[%s0] sm:$0xff]
  %v36 = vld [vmem:[%s0 + $0x8] sm:$0xff]
  %v37 = vld [vmem:[%s0 + $0x10] sm:$0xff]
  %v38 = vld [vmem:[%s0 + $0x18] sm:$0xff]
  %v39 = vld [vmem:[%s0 + $0x20] sm:$0xf]
  %v40 = vld [vmem:[%s0 + $0x24] sm:$0xff]
  %v41 = vld [vmem:[%s0 + $0x2c] sm:$0xff]
  %v42 = vld [vmem:[%s0 + $0x34] sm:$0xff]
  %v43 = vld [vmem:[%s0 + $0x3c] sm:$0xff]
  %v44 = vld [vmem:[%s0 + $0x44] sm:$0xf]
  %v45 = vld [vmem:[%s0 + $0x48] sm:$0xff]
  %v46 = vld [vmem:[%s0 + $0x50] sm:$0xff]
  %v47 = vld [vmem:[%s0 + $0x58] sm:$0xff]
  %v48 = vld [vmem:[%s0 + $0x60] sm:$0xff]
  %v49 = vld [vmem:[%s0 + $0x68] sm:$0xf]
  %v50 = vld [vmem:[%s0 + $0x6c] sm:$0xff]
  %v51 = vld [vmem:[%s0 + $0x74] sm:$0xff]
  %v52 = vld [vmem:[%s0 + $0x7c] sm:$0xff]
  %v53 = vld [vmem:[%s0 + $0x84] sm:$0xff]
  %v54 = vld [vmem:[%s0 + $0x8c] sm:$0xf]
  %v57 = vunpack.c.l.b16 %v33
  %v58 = vunpack.c.l.b16 %v34
  %v59 = vpack.c.b16 %v58, %v57
  %v80 = vunpack.c.l.b16 %v35
  %v81 = vunpack.c.h.b16 %v35
  %v82 = vunpack.c.l.b16 %v36
  %v83 = vunpack.c.h.b16 %v36
  %v84 = vunpack.c.l.b16 %v37
  %v85 = vunpack.c.h.b16 %v37
  %v86 = vunpack.c.l.b16 %v38
  %v87 = vunpack.c.h.b16 %v38
  %v88 = vunpack.c.l.b16 %v39
  %v89 = vunpack.c.l.b16 %v40
  %v90 = vunpack.c.h.b16 %v40
  %v91 = vunpack.c.l.b16 %v41
  %v92 = vunpack.c.h.b16 %v41
  %v93 = vunpack.c.l.b16 %v42
  %v94 = vunpack.c.h.b16 %v42
  %v95 = vunpack.c.l.b16 %v43
  %v96 = vunpack.c.h.b16 %v43
  %v97 = vunpack.c.l.b16 %v44
  %v98 = vunpack.c.l.b16 %v45
  %v99 = vunpack.c.h.b16 %v45
  %v100 = vunpack.c.l.b16 %v46
  %v101 = vunpack.c.h.b16 %v46
  %v102 = vunpack.c.l.b16 %v47
  %v103 = vunpack.c.h.b16 %v47
  %v104 = vunpack.c.l.b16 %v48
  %v105 = vunpack.c.h.b16 %v48
  %v106 = vunpack.c.l.b16 %v49
  %v107 = vunpack.c.l.b16 %v50
  %v108 = vunpack.c.h.b16 %v50
  %v109 = vunpack.c.l.b16 %v51
  %v110 = vunpack.c.h.b16 %v51
  %v111 = vunpack.c.l.b16 %v52
  %v112 = vunpack.c.h.b16 %v52
  %v113 = vunpack.c.l.b16 %v53
  %v114 = vunpack.c.h.b16 %v53
  %v115 = vunpack.c.l.b16 %v54
  %v116 = vpack.c.b16 %v89, %v80
  %v117 = vpack.c.b16 %v90, %v81
  %v118 = vpack.c.b16 %v91, %v82
  %v119 = vpack.c.b16 %v92, %v83
  %v120 = vpack.c.b16 %v93, %v84
  %v121 = vpack.c.b16 %v94, %v85
  %v122 = vpack.c.b16 %v95, %v86
  %v123 = vpack.c.b16 %v96, %v87
  %v124 = vpack.c.b16 %v97, %v88
  %v125 = vpack.c.b16 %v107, %v98
  %v126 = vpack.c.b16 %v108, %v99
  %v127 = vpack.c.b16 %v109, %v100
  %v128 = vpack.c.b16 %v110, %v101
  %v129 = vpack.c.b16 %v111, %v102
  %v130 = vpack.c.b16 %v112, %v103
  %v131 = vpack.c.b16 %v113, %v104
  %v132 = vpack.c.b16 %v114, %v105
  %v133 = vpack.c.b16 %v115, %v106
  %vm152 = vcmask 261120
  %v154 = vsel %vm152, %v59, 0
  %156 = vmatpush.bf16.msra.mxu0 0
  %157 = vmatpush.bf16.msra.mxu0 0
  %158 = vmatpush.bf16.msra.mxu0 0
  %159 = vmatpush.bf16.msra.mxu0 0
  %160 = vmatpush.bf16.msra.mxu0 0
  %161 = vmatpush.bf16.msra.mxu0 0
  %162 = vmatpush.bf16.msra.mxu0 %v125
  %163 = vmatpush.bf16.msra.mxu0 %v116
  %164 = vmatmul.bf16.gmra.mxu0 %v154
  %v165 = vpop.f32.mrf.mxu0
  %v166 = vadd.f32 0.0, %v165
  %v167 = vpop.f32.mrf.mxu0
  %v168 = vadd.f32 0.0, %v167
  %169 = vdwg.mxu0
  %170 = vmatpush.bf16.msra.mxu0 0
  %171 = vmatpush.bf16.msra.mxu0 0
  %172 = vmatpush.bf16.msra.mxu0 0
  %173 = vmatpush.bf16.msra.mxu0 0
  %174 = vmatpush.bf16.msra.mxu0 0
  %175 = vmatpush.bf16.msra.mxu0 0
  %176 = vmatpush.bf16.msra.mxu0 %v126
  %177 = vmatpush.bf16.msra.mxu0 %v117
  %178 = vmatmul.bf16.gmra.mxu0 %v154
  %v179 = vpop.f32.mrf.mxu0
  %v180 = vadd.f32 0.0, %v179
  %v181 = vpop.f32.mrf.mxu0
  %v182 = vadd.f32 0.0, %v181
  %183 = vdwg.mxu0
  %184 = vmatpush.bf16.msra.mxu0 0
  %185 = vmatpush.bf16.msra.mxu0 0
  %186 = vmatpush.bf16.msra.mxu0 0
  %187 = vmatpush.bf16.msra.mxu0 0
  %188 = vmatpush.bf16.msra.mxu0 0
  %189 = vmatpush.bf16.msra.mxu0 0
  %190 = vmatpush.bf16.msra.mxu0 %v127
  %191 = vmatpush.bf16.msra.mxu0 %v118
  %192 = vmatmul.bf16.gmra.mxu0 %v154
  %v193 = vpop.f32.mrf.mxu0
  %v194 = vadd.f32 0.0, %v193
  %v195 = vpop.f32.mrf.mxu0
  %v196 = vadd.f32 0.0, %v195
  %197 = vdwg.mxu0
  %198 = vmatpush.bf16.msra.mxu0 0
  %199 = vmatpush.bf16.msra.mxu0 0
  %200 = vmatpush.bf16.msra.mxu0 0
  %201 = vmatpush.bf16.msra.mxu0 0
  %202 = vmatpush.bf16.msra.mxu0 0
  %203 = vmatpush.bf16.msra.mxu0 0
  %204 = vmatpush.bf16.msra.mxu0 %v128
  %205 = vmatpush.bf16.msra.mxu0 %v119
  %206 = vmatmul.bf16.gmra.mxu0 %v154
  %v207 = vpop.f32.mrf.mxu0
  %v208 = vadd.f32 0.0, %v207
  %v209 = vpop.f32.mrf.mxu0
  %v210 = vadd.f32 0.0, %v209
  %211 = vdwg.mxu0
  %212 = vmatpush.bf16.msra.mxu0 0
  %213 = vmatpush.bf16.msra.mxu0 0
  %214 = vmatpush.bf16.msra.mxu0 0
  %215 = vmatpush.bf16.msra.mxu0 0
  %216 = vmatpush.bf16.msra.mxu0 0
  %217 = vmatpush.bf16.msra.mxu0 0
  %218 = vmatpush.bf16.msra.mxu0 %v129
  %219 = vmatpush.bf16.msra.mxu0 %v120
  %220 = vmatmul.bf16.gmra.mxu0 %v154
  %v221 = vpop.f32.mrf.mxu0
  %v222 = vadd.f32 0.0, %v221
  %v223 = vpop.f32.mrf.mxu0
  %v224 = vadd.f32 0.0, %v223
  %225 = vdwg.mxu0
  %226 = vmatpush.bf16.msra.mxu0 0
  %227 = vmatpush.bf16.msra.mxu0 0
  %228 = vmatpush.bf16.msra.mxu0 0
  %229 = vmatpush.bf16.msra.mxu0 0
  %230 = vmatpush.bf16.msra.mxu0 0
  %231 = vmatpush.bf16.msra.mxu0 0
  %232 = vmatpush.bf16.msra.mxu0 %v130
  %233 = vmatpush.bf16.msra.mxu0 %v121
  %234 = vmatmul.bf16.gmra.mxu0 %v154
  %v235 = vpop.f32.mrf.mxu0
  %v236 = vadd.f32 0.0, %v235
  %v237 = vpop.f32.mrf.mxu0
  %v238 = vadd.f32 0.0, %v237
  %239 = vdwg.mxu0
  %240 = vmatpush.bf16.msra.mxu0 0
  %241 = vmatpush.bf16.msra.mxu0 0
  %242 = vmatpush.bf16.msra.mxu0 0
  %243 = vmatpush.bf16.msra.mxu0 0
  %244 = vmatpush.bf16.msra.mxu0 0
  %245 = vmatpush.bf16.msra.mxu0 0
  %246 = vmatpush.bf16.msra.mxu0 %v131
  %247 = vmatpush.bf16.msra.mxu0 %v122
  %248 = vmatmul.bf16.gmra.mxu0 %v154
  %v249 = vpop.f32.mrf.mxu0
  %v250 = vadd.f32 0.0, %v249
  %v251 = vpop.f32.mrf.mxu0
  %v252 = vadd.f32 0.0, %v251
  %253 = vdwg.mxu0
  %254 = vmatpush.bf16.msra.mxu0 0
  %255 = vmatpush.bf16.msra.mxu0 0
  %256 = vmatpush.bf16.msra.mxu0 0
  %257 = vmatpush.bf16.msra.mxu0 0
  %258 = vmatpush.bf16.msra.mxu0 0
  %259 = vmatpush.bf16.msra.mxu0 0
  %260 = vmatpush.bf16.msra.mxu0 %v132
  %261 = vmatpush.bf16.msra.mxu0 %v123
  %262 = vmatmul.bf16.gmra.mxu0 %v154
  %v263 = vpop.f32.mrf.mxu0
  %v264 = vadd.f32 0.0, %v263
  %v265 = vpop.f32.mrf.mxu0
  %v266 = vadd.f32 0.0, %v265
  %267 = vdwg.mxu0
  %268 = vmatpush.bf16.msra.mxu0 0
  %269 = vmatpush.bf16.msra.mxu0 0
  %270 = vmatpush.bf16.msra.mxu0 0
  %271 = vmatpush.bf16.msra.mxu0 0
  %272 = vmatpush.bf16.msra.mxu0 0
  %273 = vmatpush.bf16.msra.mxu0 0
  %274 = vmatpush.bf16.msra.mxu0 %v133
  %275 = vmatpush.bf16.msra.mxu0 %v124
  %276 = vmatmul.bf16.gmra.mxu0 %v154
  %v277 = vpop.f32.mrf.mxu0
  %v278 = vadd.f32 0.0, %v277
  %v279 = vpop.f32.mrf.mxu0
  %v280 = vadd.f32 0.0, %v279
  %281 = vdwg.mxu0
  %s282 = scalar_lea.vmem %s0, 144
  %v283 = vld [vmem:[%s282] sm:$0xff]
  %v284 = vld [vmem:[%s282 + $0x8] sm:$0xff]
  %v285 = vld [vmem:[%s282 + $0x10] sm:$0xff]
  %v286 = vld [vmem:[%s282 + $0x18] sm:$0xff]
  %v287 = vld [vmem:[%s282 + $0x20] sm:$0xf]
  %v288 = vld [vmem:[%s282 + $0x24] sm:$0xff]
  %v289 = vld [vmem:[%s282 + $0x2c] sm:$0xff]
  %v290 = vld [vmem:[%s282 + $0x34] sm:$0xff]
  %v291 = vld [vmem:[%s282 + $0x3c] sm:$0xff]
  %v292 = vld [vmem:[%s282 + $0x44] sm:$0xf]
  %v293 = vld [vmem:[%s282 + $0x48] sm:$0xff]
  %v294 = vld [vmem:[%s282 + $0x50] sm:$0xff]
  %v295 = vld [vmem:[%s282 + $0x58] sm:$0xff]
  %v296 = vld [vmem:[%s282 + $0x60] sm:$0xff]
  %v297 = vld [vmem:[%s282 + $0x68] sm:$0xf]
  %v298 = vld [vmem:[%s282 + $0x6c] sm:$0xff]
  %v299 = vld [vmem:[%s282 + $0x74] sm:$0xff]
  %v300 = vld [vmem:[%s282 + $0x7c] sm:$0xff]
  %v301 = vld [vmem:[%s282 + $0x84] sm:$0xff]
  %v302 = vld [vmem:[%s282 + $0x8c] sm:$0xf]
  %v323 = vunpack.c.l.b16 %v283
  %v324 = vunpack.c.h.b16 %v283
  %v325 = vunpack.c.l.b16 %v284
  %v326 = vunpack.c.h.b16 %v284
  %v327 = vunpack.c.l.b16 %v285
  %v328 = vunpack.c.h.b16 %v285
  %v329 = vunpack.c.l.b16 %v286
  %v330 = vunpack.c.h.b16 %v286
  %v331 = vunpack.c.l.b16 %v287
  %v332 = vunpack.c.l.b16 %v288
  %v333 = vunpack.c.h.b16 %v288
  %v334 = vunpack.c.l.b16 %v289
  %v335 = vunpack.c.h.b16 %v289
  %v336 = vunpack.c.l.b16 %v290
  %v337 = vunpack.c.h.b16 %v290
  %v338 = vunpack.c.l.b16 %v291
  %v339 = vunpack.c.h.b16 %v291
  %v340 = vunpack.c.l.b16 %v292
  %v341 = vunpack.c.l.b16 %v293
  %v342 = vunpack.c.h.b16 %v293
  %v343 = vunpack.c.l.b16 %v294
  %v344 = vunpack.c.h.b16 %v294
  %v345 = vunpack.c.l.b16 %v295
  %v346 = vunpack.c.h.b16 %v295
  %v347 = vunpack.c.l.b16 %v296
  %v348 = vunpack.c.h.b16 %v296
  %v349 = vunpack.c.l.b16 %v297
  %v350 = vunpack.c.l.b16 %v298
  %v351 = vunpack.c.h.b16 %v298
  %v352 = vunpack.c.l.b16 %v299
  %v353 = vunpack.c.h.b16 %v299
  %v354 = vunpack.c.l.b16 %v300
  %v355 = vunpack.c.h.b16 %v300
  %v356 = vunpack.c.l.b16 %v301
  %v357 = vunpack.c.h.b16 %v301
  %v358 = vunpack.c.l.b16 %v302
  %v359 = vpack.c.b16 %v332, %v323
  %v360 = vpack.c.b16 %v333, %v324
  %v361 = vpack.c.b16 %v334, %v325
  %v362 = vpack.c.b16 %v335, %v326
  %v363 = vpack.c.b16 %v336, %v327
  %v364 = vpack.c.b16 %v337, %v328
  %v365 = vpack.c.b16 %v338, %v329
  %v366 = vpack.c.b16 %v339, %v330
  %v367 = vpack.c.b16 %v340, %v331
  %v368 = vpack.c.b16 %v350, %v341
  %v369 = vpack.c.b16 %v351, %v342
  %v370 = vpack.c.b16 %v352, %v343
  %v371 = vpack.c.b16 %v353, %v344
  %v372 = vpack.c.b16 %v354, %v345
  %v373 = vpack.c.b16 %v355, %v346
  %v374 = vpack.c.b16 %v356, %v347
  %v375 = vpack.c.b16 %v357, %v348
  %v376 = vpack.c.b16 %v358, %v349
  %395 = vmatpush.bf16.msra.mxu0 0
  %396 = vmatpush.bf16.msra.mxu0 0
  %397 = vmatpush.bf16.msra.mxu0 0
  %398 = vmatpush.bf16.msra.mxu0 0
  %399 = vmatpush.bf16.msra.mxu0 0
  %400 = vmatpush.bf16.msra.mxu0 0
  %401 = vmatpush.bf16.msra.mxu0 %v368
  %402 = vmatpush.bf16.msra.mxu0 %v359
  %403 = vmatmul.bf16.gmra.mxu0 %v154
  %v404 = vpop.f32.mrf.mxu0
  %v405 = vadd.f32 0.0, %v404
  %v406 = vpop.f32.mrf.mxu0
  %v407 = vadd.f32 0.0, %v406
  %408 = vdwg.mxu0
  %409 = vmatpush.bf16.msra.mxu0 0
  %410 = vmatpush.bf16.msra.mxu0 0
  %411 = vmatpush.bf16.msra.mxu0 0
  %412 = vmatpush.bf16.msra.mxu0 0
  %413 = vmatpush.bf16.msra.mxu0 0
  %414 = vmatpush.bf16.msra.mxu0 0
  %415 = vmatpush.bf16.msra.mxu0 %v369
  %416 = vmatpush.bf16.msra.mxu0 %v360
  %417 = vmatmul.bf16.gmra.mxu0 %v154
  %v418 = vpop.f32.mrf.mxu0
  %v419 = vadd.f32 0.0, %v418
  %v420 = vpop.f32.mrf.mxu0
  %v421 = vadd.f32 0.0, %v420
  %422 = vdwg.mxu0
  %423 = vmatpush.bf16.msra.mxu0 0
  %424 = vmatpush.bf16.msra.mxu0 0
  %425 = vmatpush.bf16.msra.mxu0 0
  %426 = vmatpush.bf16.msra.mxu0 0
  %427 = vmatpush.bf16.msra.mxu0 0
  %428 = vmatpush.bf16.msra.mxu0 0
  %429 = vmatpush.bf16.msra.mxu0 %v370
  %430 = vmatpush.bf16.msra.mxu0 %v361
  %431 = vmatmul.bf16.gmra.mxu0 %v154
  %v432 = vpop.f32.mrf.mxu0
  %v433 = vadd.f32 0.0, %v432
  %v434 = vpop.f32.mrf.mxu0
  %v435 = vadd.f32 0.0, %v434
  %436 = vdwg.mxu0
  %437 = vmatpush.bf16.msra.mxu0 0
  %438 = vmatpush.bf16.msra.mxu0 0
  %439 = vmatpush.bf16.msra.mxu0 0
  %440 = vmatpush.bf16.msra.mxu0 0
  %441 = vmatpush.bf16.msra.mxu0 0
  %442 = vmatpush.bf16.msra.mxu0 0
  %443 = vmatpush.bf16.msra.mxu0 %v371
  %444 = vmatpush.bf16.msra.mxu0 %v362
  %445 = vmatmul.bf16.gmra.mxu0 %v154
  %v446 = vpop.f32.mrf.mxu0
  %v447 = vadd.f32 0.0, %v446
  %v448 = vpop.f32.mrf.mxu0
  %v449 = vadd.f32 0.0, %v448
  %450 = vdwg.mxu0
  %451 = vmatpush.bf16.msra.mxu0 0
  %452 = vmatpush.bf16.msra.mxu0 0
  %453 = vmatpush.bf16.msra.mxu0 0
  %454 = vmatpush.bf16.msra.mxu0 0
  %455 = vmatpush.bf16.msra.mxu0 0
  %456 = vmatpush.bf16.msra.mxu0 0
  %457 = vmatpush.bf16.msra.mxu0 %v372
  %458 = vmatpush.bf16.msra.mxu0 %v363
  %459 = vmatmul.bf16.gmra.mxu0 %v154
  %v460 = vpop.f32.mrf.mxu0
  %v461 = vadd.f32 0.0, %v460
  %v462 = vpop.f32.mrf.mxu0
  %v463 = vadd.f32 0.0, %v462
  %464 = vdwg.mxu0
  %465 = vmatpush.bf16.msra.mxu0 0
  %466 = vmatpush.bf16.msra.mxu0 0
  %467 = vmatpush.bf16.msra.mxu0 0
  %468 = vmatpush.bf16.msra.mxu0 0
  %469 = vmatpush.bf16.msra.mxu0 0
  %470 = vmatpush.bf16.msra.mxu0 0
  %471 = vmatpush.bf16.msra.mxu0 %v373
  %472 = vmatpush.bf16.msra.mxu0 %v364
  %473 = vmatmul.bf16.gmra.mxu0 %v154
  %v474 = vpop.f32.mrf.mxu0
  %v475 = vadd.f32 0.0, %v474
  %v476 = vpop.f32.mrf.mxu0
  %v477 = vadd.f32 0.0, %v476
  %478 = vdwg.mxu0
  %479 = vmatpush.bf16.msra.mxu0 0
  %480 = vmatpush.bf16.msra.mxu0 0
  %481 = vmatpush.bf16.msra.mxu0 0
  %482 = vmatpush.bf16.msra.mxu0 0
  %483 = vmatpush.bf16.msra.mxu0 0
  %484 = vmatpush.bf16.msra.mxu0 0
  %485 = vmatpush.bf16.msra.mxu0 %v374
  %486 = vmatpush.bf16.msra.mxu0 %v365
  %487 = vmatmul.bf16.gmra.mxu0 %v154
  %v488 = vpop.f32.mrf.mxu0
  %v489 = vadd.f32 0.0, %v488
  %v490 = vpop.f32.mrf.mxu0
  %v491 = vadd.f32 0.0, %v490
  %492 = vdwg.mxu0
  %493 = vmatpush.bf16.msra.mxu0 0
  %494 = vmatpush.bf16.msra.mxu0 0
  %495 = vmatpush.bf16.msra.mxu0 0
  %496 = vmatpush.bf16.msra.mxu0 0
  %497 = vmatpush.bf16.msra.mxu0 0
  %498 = vmatpush.bf16.msra.mxu0 0
  %499 = vmatpush.bf16.msra.mxu0 %v375
  %500 = vmatpush.bf16.msra.mxu0 %v366
  %501 = vmatmul.bf16.gmra.mxu0 %v154
  %v502 = vpop.f32.mrf.mxu0
  %v503 = vadd.f32 0.0, %v502
  %v504 = vpop.f32.mrf.mxu0
  %v505 = vadd.f32 0.0, %v504
  %506 = vdwg.mxu0
  %507 = vmatpush.bf16.msra.mxu0 0
  %508 = vmatpush.bf16.msra.mxu0 0
  %509 = vmatpush.bf16.msra.mxu0 0
  %510 = vmatpush.bf16.msra.mxu0 0
  %511 = vmatpush.bf16.msra.mxu0 0
  %512 = vmatpush.bf16.msra.mxu0 0
  %513 = vmatpush.bf16.msra.mxu0 %v376
  %514 = vmatpush.bf16.msra.mxu0 %v367
  %515 = vmatmul.bf16.gmra.mxu0 %v154
  %v516 = vpop.f32.mrf.mxu0
  %v517 = vadd.f32 0.0, %v516
  %v518 = vpop.f32.mrf.mxu0
  %v519 = vadd.f32 0.0, %v518
  %520 = vdwg.mxu0
  %v521 = vmax.f32 %v166, %v405
  %v522 = vmax.f32 %v180, %v419
  %v523 = vmax.f32 %v194, %v433
  %v524 = vmax.f32 %v208, %v447
  %v525 = vmax.f32 %v222, %v461
  %v526 = vmax.f32 %v236, %v475
  %v527 = vmax.f32 %v250, %v489
  %v528 = vmax.f32 %v264, %v503
  %v529 = vmax.f32 %v278, %v517
  %v530 = vmax.f32 %v168, %v407
  %v531 = vmax.f32 %v182, %v421
  %v532 = vmax.f32 %v196, %v435
  %v533 = vmax.f32 %v210, %v449
  %v534 = vmax.f32 %v224, %v463
  %v535 = vmax.f32 %v238, %v477
  %v536 = vmax.f32 %v252, %v491
  %v537 = vmax.f32 %v266, %v505
  %v538 = vmax.f32 %v280, %v519
  %s539 = scalar_lea.vmem %s0, 288
  %v540 = vld [vmem:[%s539] sm:$0xff]
  %v541 = vld [vmem:[%s539 + $0x8] sm:$0xff]
  %v542 = vld [vmem:[%s539 + $0x10] sm:$0xff]
  %v543 = vld [vmem:[%s539 + $0x18] sm:$0xff]
  %v544 = vld [vmem:[%s539 + $0x20] sm:$0xf]
  %v545 = vld [vmem:[%s539 + $0x24] sm:$0xff]
  %v546 = vld [vmem:[%s539 + $0x2c] sm:$0xff]
  %v547 = vld [vmem:[%s539 + $0x34] sm:$0xff]
  %v548 = vld [vmem:[%s539 + $0x3c] sm:$0xff]
  %v549 = vld [vmem:[%s539 + $0x44] sm:$0xf]
  %v550 = vld [vmem:[%s539 + $0x48] sm:$0xff]
  %v551 = vld [vmem:[%s539 + $0x50] sm:$0xff]
  %v552 = vld [vmem:[%s539 + $0x58] sm:$0xff]
  %v553 = vld [vmem:[%s539 + $0x60] sm:$0xff]
  %v554 = vld [vmem:[%s539 + $0x68] sm:$0xf]
  %v555 = vld [vmem:[%s539 + $0x6c] sm:$0xff]
  %v556 = vld [vmem:[%s539 + $0x74] sm:$0xff]
  %v557 = vld [vmem:[%s539 + $0x7c] sm:$0xff]
  %v558 = vld [vmem:[%s539 + $0x84] sm:$0xff]
  %v559 = vld [vmem:[%s539 + $0x8c] sm:$0xf]
  %v580 = vunpack.c.l.b16 %v540
  %v581 = vunpack.c.h.b16 %v540
  %v582 = vunpack.c.l.b16 %v541
  %v583 = vunpack.c.h.b16 %v541
  %v584 = vunpack.c.l.b16 %v542
  %v585 = vunpack.c.h.b16 %v542
  %v586 = vunpack.c.l.b16 %v543
  %v587 = vunpack.c.h.b16 %v543
  %v588 = vunpack.c.l.b16 %v544
  %v589 = vunpack.c.l.b16 %v545
  %v590 = vunpack.c.h.b16 %v545
  %v591 = vunpack.c.l.b16 %v546
  %v592 = vunpack.c.h.b16 %v546
  %v593 = vunpack.c.l.b16 %v547
  %v594 = vunpack.c.h.b16 %v547
  %v595 = vunpack.c.l.b16 %v548
  %v596 = vunpack.c.h.b16 %v548
  %v597 = vunpack.c.l.b16 %v549
  %v598 = vunpack.c.l.b16 %v550
  %v599 = vunpack.c.h.b16 %v550
  %v600 = vunpack.c.l.b16 %v551
  %v601 = vunpack.c.h.b16 %v551
  %v602 = vunpack.c.l.b16 %v552
  %v603 = vunpack.c.h.b16 %v552
  %v604 = vunpack.c.l.b16 %v553
  %v605 = vunpack.c.h.b16 %v553
  %v606 = vunpack.c.l.b16 %v554
  %v607 = vunpack.c.l.b16 %v555
  %v608 = vunpack.c.h.b16 %v555
  %v609 = vunpack.c.l.b16 %v556
  %v610 = vunpack.c.h.b16 %v556
  %v611 = vunpack.c.l.b16 %v557
  %v612 = vunpack.c.h.b16 %v557
  %v613 = vunpack.c.l.b16 %v558
  %v614 = vunpack.c.h.b16 %v558
  %v615 = vunpack.c.l.b16 %v559
  %v616 = vpack.c.b16 %v589, %v580
  %v617 = vpack.c.b16 %v590, %v581
  %v618 = vpack.c.b16 %v591, %v582
  %v619 = vpack.c.b16 %v592, %v583
  %v620 = vpack.c.b16 %v593, %v584
  %v621 = vpack.c.b16 %v594, %v585
  %v622 = vpack.c.b16 %v595, %v586
  %v623 = vpack.c.b16 %v596, %v587
  %v624 = vpack.c.b16 %v597, %v588
  %v625 = vpack.c.b16 %v607, %v598
  %v626 = vpack.c.b16 %v608, %v599
  %v627 = vpack.c.b16 %v609, %v600
  %v628 = vpack.c.b16 %v610, %v601
  %v629 = vpack.c.b16 %v611, %v602
  %v630 = vpack.c.b16 %v612, %v603
  %v631 = vpack.c.b16 %v613, %v604
  %v632 = vpack.c.b16 %v614, %v605
  %v633 = vpack.c.b16 %v615, %v606
  %652 = vmatpush.bf16.msra.mxu0 0
  %653 = vmatpush.bf16.msra.mxu0 0
  %654 = vmatpush.bf16.msra.mxu0 0
  %655 = vmatpush.bf16.msra.mxu0 0
  %656 = vmatpush.bf16.msra.mxu0 0
  %657 = vmatpush.bf16.msra.mxu0 0
  %658 = vmatpush.bf16.msra.mxu0 %v625
  %659 = vmatpush.bf16.msra.mxu0 %v616
  %660 = vmatmul.bf16.gmra.mxu0 %v154
  %v661 = vpop.f32.mrf.mxu0
  %v662 = vadd.f32 0.0, %v661
  %v663 = vpop.f32.mrf.mxu0
  %v664 = vadd.f32 0.0, %v663
  %665 = vdwg.mxu0
  %666 = vmatpush.bf16.msra.mxu0 0
  %667 = vmatpush.bf16.msra.mxu0 0
  %668 = vmatpush.bf16.msra.mxu0 0
  %669 = vmatpush.bf16.msra.mxu0 0
  %670 = vmatpush.bf16.msra.mxu0 0
  %671 = vmatpush.bf16.msra.mxu0 0
  %672 = vmatpush.bf16.msra.mxu0 %v626
  %673 = vmatpush.bf16.msra.mxu0 %v617
  %674 = vmatmul.bf16.gmra.mxu0 %v154
  %v675 = vpop.f32.mrf.mxu0
  %v676 = vadd.f32 0.0, %v675
  %v677 = vpop.f32.mrf.mxu0
  %v678 = vadd.f32 0.0, %v677
  %679 = vdwg.mxu0
  %680 = vmatpush.bf16.msra.mxu0 0
  %681 = vmatpush.bf16.msra.mxu0 0
  %682 = vmatpush.bf16.msra.mxu0 0
  %683 = vmatpush.bf16.msra.mxu0 0
  %684 = vmatpush.bf16.msra.mxu0 0
  %685 = vmatpush.bf16.msra.mxu0 0
  %686 = vmatpush.bf16.msra.mxu0 %v627
  %687 = vmatpush.bf16.msra.mxu0 %v618
  %688 = vmatmul.bf16.gmra.mxu0 %v154
  %v689 = vpop.f32.mrf.mxu0
  %v690 = vadd.f32 0.0, %v689
  %v691 = vpop.f32.mrf.mxu0
  %v692 = vadd.f32 0.0, %v691
  %693 = vdwg.mxu0
  %694 = vmatpush.bf16.msra.mxu0 0
  %695 = vmatpush.bf16.msra.mxu0 0
  %696 = vmatpush.bf16.msra.mxu0 0
  %697 = vmatpush.bf16.msra.mxu0 0
  %698 = vmatpush.bf16.msra.mxu0 0
  %699 = vmatpush.bf16.msra.mxu0 0
  %700 = vmatpush.bf16.msra.mxu0 %v628
  %701 = vmatpush.bf16.msra.mxu0 %v619
  %702 = vmatmul.bf16.gmra.mxu0 %v154
  %v703 = vpop.f32.mrf.mxu0
  %v704 = vadd.f32 0.0, %v703
  %v705 = vpop.f32.mrf.mxu0
  %v706 = vadd.f32 0.0, %v705
  %707 = vdwg.mxu0
  %708 = vmatpush.bf16.msra.mxu0 0
  %709 = vmatpush.bf16.msra.mxu0 0
  %710 = vmatpush.bf16.msra.mxu0 0
  %711 = vmatpush.bf16.msra.mxu0 0
  %712 = vmatpush.bf16.msra.mxu0 0
  %713 = vmatpush.bf16.msra.mxu0 0
  %714 = vmatpush.bf16.msra.mxu0 %v629
  %715 = vmatpush.bf16.msra.mxu0 %v620
  %716 = vmatmul.bf16.gmra.mxu0 %v154
  %v717 = vpop.f32.mrf.mxu0
  %v718 = vadd.f32 0.0, %v717
  %v719 = vpop.f32.mrf.mxu0
  %v720 = vadd.f32 0.0, %v719
  %721 = vdwg.mxu0
  %722 = vmatpush.bf16.msra.mxu0 0
  %723 = vmatpush.bf16.msra.mxu0 0
  %724 = vmatpush.bf16.msra.mxu0 0
  %725 = vmatpush.bf16.msra.mxu0 0
  %726 = vmatpush.bf16.msra.mxu0 0
  %727 = vmatpush.bf16.msra.mxu0 0
  %728 = vmatpush.bf16.msra.mxu0 %v630
  %729 = vmatpush.bf16.msra.mxu0 %v621
  %730 = vmatmul.bf16.gmra.mxu0 %v154
  %v731 = vpop.f32.mrf.mxu0
  %v732 = vadd.f32 0.0, %v731
  %v733 = vpop.f32.mrf.mxu0
  %v734 = vadd.f32 0.0, %v733
  %735 = vdwg.mxu0
  %736 = vmatpush.bf16.msra.mxu0 0
  %737 = vmatpush.bf16.msra.mxu0 0
  %738 = vmatpush.bf16.msra.mxu0 0
  %739 = vmatpush.bf16.msra.mxu0 0
  %740 = vmatpush.bf16.msra.mxu0 0
  %741 = vmatpush.bf16.msra.mxu0 0
  %742 = vmatpush.bf16.msra.mxu0 %v631
  %743 = vmatpush.bf16.msra.mxu0 %v622
  %744 = vmatmul.bf16.gmra.mxu0 %v154
  %v745 = vpop.f32.mrf.mxu0
  %v746 = vadd.f32 0.0, %v745
  %v747 = vpop.f32.mrf.mxu0
  %v748 = vadd.f32 0.0, %v747
  %749 = vdwg.mxu0
  %750 = vmatpush.bf16.msra.mxu0 0
  %751 = vmatpush.bf16.msra.mxu0 0
  %752 = vmatpush.bf16.msra.mxu0 0
  %753 = vmatpush.bf16.msra.mxu0 0
  %754 = vmatpush.bf16.msra.mxu0 0
  %755 = vmatpush.bf16.msra.mxu0 0
  %756 = vmatpush.bf16.msra.mxu0 %v632
  %757 = vmatpush.bf16.msra.mxu0 %v623
  %758 = vmatmul.bf16.gmra.mxu0 %v154
  %v759 = vpop.f32.mrf.mxu0
  %v760 = vadd.f32 0.0, %v759
  %v761 = vpop.f32.mrf.mxu0
  %v762 = vadd.f32 0.0, %v761
  %763 = vdwg.mxu0
  %764 = vmatpush.bf16.msra.mxu0 0
  %765 = vmatpush.bf16.msra.mxu0 0
  %766 = vmatpush.bf16.msra.mxu0 0
  %767 = vmatpush.bf16.msra.mxu0 0
  %768 = vmatpush.bf16.msra.mxu0 0
  %769 = vmatpush.bf16.msra.mxu0 0
  %770 = vmatpush.bf16.msra.mxu0 %v633
  %771 = vmatpush.bf16.msra.mxu0 %v624
  %772 = vmatmul.bf16.gmra.mxu0 %v154
  %v773 = vpop.f32.mrf.mxu0
  %v774 = vadd.f32 0.0, %v773
  %v775 = vpop.f32.mrf.mxu0
  %v776 = vadd.f32 0.0, %v775
  %777 = vdwg.mxu0
  %v778 = vmax.f32 %v521, %v662
  %v779 = vmax.f32 %v522, %v676
  %v780 = vmax.f32 %v523, %v690
  %v781 = vmax.f32 %v524, %v704
  %v782 = vmax.f32 %v525, %v718
  %v783 = vmax.f32 %v526, %v732
  %v784 = vmax.f32 %v527, %v746
  %v785 = vmax.f32 %v528, %v760
  %v786 = vmax.f32 %v529, %v774
  %v787 = vmax.f32 %v530, %v664
  %v788 = vmax.f32 %v531, %v678
  %v789 = vmax.f32 %v532, %v692
  %v790 = vmax.f32 %v533, %v706
  %v791 = vmax.f32 %v534, %v720
  %v792 = vmax.f32 %v535, %v734
  %v793 = vmax.f32 %v536, %v748
  %v794 = vmax.f32 %v537, %v762
  %v795 = vmax.f32 %v538, %v776
  %s796 = scalar_lea.vmem %s0, 432
  %v797 = vld [vmem:[%s796] sm:$0xff]
  %v798 = vld [vmem:[%s796 + $0x8] sm:$0xff]
  %v799 = vld [vmem:[%s796 + $0x10] sm:$0xff]
  %v800 = vld [vmem:[%s796 + $0x18] sm:$0xff]
  %v801 = vld [vmem:[%s796 + $0x20] sm:$0xf]
  %v802 = vld [vmem:[%s796 + $0x24] sm:$0xff]
  %v803 = vld [vmem:[%s796 + $0x2c] sm:$0xff]
  %v804 = vld [vmem:[%s796 + $0x34] sm:$0xff]
  %v805 = vld [vmem:[%s796 + $0x3c] sm:$0xff]
  %v806 = vld [vmem:[%s796 + $0x44] sm:$0xf]
  %v807 = vld [vmem:[%s796 + $0x48] sm:$0xff]
  %v808 = vld [vmem:[%s796 + $0x50] sm:$0xff]
  %v809 = vld [vmem:[%s796 + $0x58] sm:$0xff]
  %v810 = vld [vmem:[%s796 + $0x60] sm:$0xff]
  %v811 = vld [vmem:[%s796 + $0x68] sm:$0xf]
  %v812 = vld [vmem:[%s796 + $0x6c] sm:$0xff]
  %v813 = vld [vmem:[%s796 + $0x74] sm:$0xff]
  %v814 = vld [vmem:[%s796 + $0x7c] sm:$0xff]
  %v815 = vld [vmem:[%s796 + $0x84] sm:$0xff]
  %v816 = vld [vmem:[%s796 + $0x8c] sm:$0xf]
  %v837 = vunpack.c.l.b16 %v797
  %v838 = vunpack.c.h.b16 %v797
  %v839 = vunpack.c.l.b16 %v798
  %v840 = vunpack.c.h.b16 %v798
  %v841 = vunpack.c.l.b16 %v799
  %v842 = vunpack.c.h.b16 %v799
  %v843 = vunpack.c.l.b16 %v800
  %v844 = vunpack.c.h.b16 %v800
  %v845 = vunpack.c.l.b16 %v801
  %v846 = vunpack.c.l.b16 %v802
  %v847 = vunpack.c.h.b16 %v802
  %v848 = vunpack.c.l.b16 %v803
  %v849 = vunpack.c.h.b16 %v803
  %v850 = vunpack.c.l.b16 %v804
  %v851 = vunpack.c.h.b16 %v804
  %v852 = vunpack.c.l.b16 %v805
  %v853 = vunpack.c.h.b16 %v805
  %v854 = vunpack.c.l.b16 %v806
  %v855 = vunpack.c.l.b16 %v807
  %v856 = vunpack.c.h.b16 %v807
  %v857 = vunpack.c.l.b16 %v808
  %v858 = vunpack.c.h.b16 %v808
  %v859 = vunpack.c.l.b16 %v809
  %v860 = vunpack.c.h.b16 %v809
  %v861 = vunpack.c.l.b16 %v810
  %v862 = vunpack.c.h.b16 %v810
  %v863 = vunpack.c.l.b16 %v811
  %v864 = vunpack.c.l.b16 %v812
  %v865 = vunpack.c.h.b16 %v812
  %v866 = vunpack.c.l.b16 %v813
  %v867 = vunpack.c.h.b16 %v813
  %v868 = vunpack.c.l.b16 %v814
  %v869 = vunpack.c.h.b16 %v814
  %v870 = vunpack.c.l.b16 %v815
  %v871 = vunpack.c.h.b16 %v815
  %v872 = vunpack.c.l.b16 %v816
  %v873 = vpack.c.b16 %v846, %v837
  %v874 = vpack.c.b16 %v847, %v838
  %v875 = vpack.c.b16 %v848, %v839
  %v876 = vpack.c.b16 %v849, %v840
  %v877 = vpack.c.b16 %v850, %v841
  %v878 = vpack.c.b16 %v851, %v842
  %v879 = vpack.c.b16 %v852, %v843
  %v880 = vpack.c.b16 %v853, %v844
  %v881 = vpack.c.b16 %v854, %v845
  %v882 = vpack.c.b16 %v864, %v855
  %v883 = vpack.c.b16 %v865, %v856
  %v884 = vpack.c.b16 %v866, %v857
  %v885 = vpack.c.b16 %v867, %v858
  %v886 = vpack.c.b16 %v868, %v859
  %v887 = vpack.c.b16 %v869, %v860
  %v888 = vpack.c.b16 %v870, %v861
  %v889 = vpack.c.b16 %v871, %v862
  %v890 = vpack.c.b16 %v872, %v863
  %909 = vmatpush.bf16.msra.mxu0 0
  %910 = vmatpush.bf16.msra.mxu0 0
  %911 = vmatpush.bf16.msra.mxu0 0
  %912 = vmatpush.bf16.msra.mxu0 0
  %913 = vmatpush.bf16.msra.mxu0 0
  %914 = vmatpush.bf16.msra.mxu0 0
  %915 = vmatpush.bf16.msra.mxu0 %v882
  %916 = vmatpush.bf16.msra.mxu0 %v873
  %917 = vmatmul.bf16.gmra.mxu0 %v154
  %v918 = vpop.f32.mrf.mxu0
  %v919 = vadd.f32 0.0, %v918
  %v920 = vpop.f32.mrf.mxu0
  %v921 = vadd.f32 0.0, %v920
  %922 = vdwg.mxu0
  %923 = vmatpush.bf16.msra.mxu0 0
  %924 = vmatpush.bf16.msra.mxu0 0
  %925 = vmatpush.bf16.msra.mxu0 0
  %926 = vmatpush.bf16.msra.mxu0 0
  %927 = vmatpush.bf16.msra.mxu0 0
  %928 = vmatpush.bf16.msra.mxu0 0
  %929 = vmatpush.bf16.msra.mxu0 %v883
  %930 = vmatpush.bf16.msra.mxu0 %v874
  %931 = vmatmul.bf16.gmra.mxu0 %v154
  %v932 = vpop.f32.mrf.mxu0
  %v933 = vadd.f32 0.0, %v932
  %v934 = vpop.f32.mrf.mxu0
  %v935 = vadd.f32 0.0, %v934
  %936 = vdwg.mxu0
  %937 = vmatpush.bf16.msra.mxu0 0
  %938 = vmatpush.bf16.msra.mxu0 0
  %939 = vmatpush.bf16.msra.mxu0 0
  %940 = vmatpush.bf16.msra.mxu0 0
  %941 = vmatpush.bf16.msra.mxu0 0
  %942 = vmatpush.bf16.msra.mxu0 0
  %943 = vmatpush.bf16.msra.mxu0 %v884
  %944 = vmatpush.bf16.msra.mxu0 %v875
  %945 = vmatmul.bf16.gmra.mxu0 %v154
  %v946 = vpop.f32.mrf.mxu0
  %v947 = vadd.f32 0.0, %v946
  %v948 = vpop.f32.mrf.mxu0
  %v949 = vadd.f32 0.0, %v948
  %950 = vdwg.mxu0
  %951 = vmatpush.bf16.msra.mxu0 0
  %952 = vmatpush.bf16.msra.mxu0 0
  %953 = vmatpush.bf16.msra.mxu0 0
  %954 = vmatpush.bf16.msra.mxu0 0
  %955 = vmatpush.bf16.msra.mxu0 0
  %956 = vmatpush.bf16.msra.mxu0 0
  %957 = vmatpush.bf16.msra.mxu0 %v885
  %958 = vmatpush.bf16.msra.mxu0 %v876
  %959 = vmatmul.bf16.gmra.mxu0 %v154
  %v960 = vpop.f32.mrf.mxu0
  %v961 = vadd.f32 0.0, %v960
  %v962 = vpop.f32.mrf.mxu0
  %v963 = vadd.f32 0.0, %v962
  %964 = vdwg.mxu0
  %965 = vmatpush.bf16.msra.mxu0 0
  %966 = vmatpush.bf16.msra.mxu0 0
  %967 = vmatpush.bf16.msra.mxu0 0
  %968 = vmatpush.bf16.msra.mxu0 0
  %969 = vmatpush.bf16.msra.mxu0 0
  %970 = vmatpush.bf16.msra.mxu0 0
  %971 = vmatpush.bf16.msra.mxu0 %v886
  %972 = vmatpush.bf16.msra.mxu0 %v877
  %973 = vmatmul.bf16.gmra.mxu0 %v154
  %v974 = vpop.f32.mrf.mxu0
  %v975 = vadd.f32 0.0, %v974
  %v976 = vpop.f32.mrf.mxu0
  %v977 = vadd.f32 0.0, %v976
  %978 = vdwg.mxu0
  %979 = vmatpush.bf16.msra.mxu0 0
  %980 = vmatpush.bf16.msra.mxu0 0
  %981 = vmatpush.bf16.msra.mxu0 0
  %982 = vmatpush.bf16.msra.mxu0 0
  %983 = vmatpush.bf16.msra.mxu0 0
  %984 = vmatpush.bf16.msra.mxu0 0
  %985 = vmatpush.bf16.msra.mxu0 %v887
  %986 = vmatpush.bf16.msra.mxu0 %v878
  %987 = vmatmul.bf16.gmra.mxu0 %v154
  %v988 = vpop.f32.mrf.mxu0
  %v989 = vadd.f32 0.0, %v988
  %v990 = vpop.f32.mrf.mxu0
  %v991 = vadd.f32 0.0, %v990
  %992 = vdwg.mxu0
  %993 = vmatpush.bf16.msra.mxu0 0
  %994 = vmatpush.bf16.msra.mxu0 0
  %995 = vmatpush.bf16.msra.mxu0 0
  %996 = vmatpush.bf16.msra.mxu0 0
  %997 = vmatpush.bf16.msra.mxu0 0
  %998 = vmatpush.bf16.msra.mxu0 0
  %999 = vmatpush.bf16.msra.mxu0 %v888
  %1000 = vmatpush.bf16.msra.mxu0 %v879
  %1001 = vmatmul.bf16.gmra.mxu0 %v154
  %v1002 = vpop.f32.mrf.mxu0
  %v1003 = vadd.f32 0.0, %v1002
  %v1004 = vpop.f32.mrf.mxu0
  %v1005 = vadd.f32 0.0, %v1004
  %1006 = vdwg.mxu0
  %1007 = vmatpush.bf16.msra.mxu0 0
  %1008 = vmatpush.bf16.msra.mxu0 0
  %1009 = vmatpush.bf16.msra.mxu0 0
  %1010 = vmatpush.bf16.msra.mxu0 0
  %1011 = vmatpush.bf16.msra.mxu0 0
  %1012 = vmatpush.bf16.msra.mxu0 0
  %1013 = vmatpush.bf16.msra.mxu0 %v889
  %1014 = vmatpush.bf16.msra.mxu0 %v880
  %1015 = vmatmul.bf16.gmra.mxu0 %v154
  %v1016 = vpop.f32.mrf.mxu0
  %v1017 = vadd.f32 0.0, %v1016
  %v1018 = vpop.f32.mrf.mxu0
  %v1019 = vadd.f32 0.0, %v1018
  %1020 = vdwg.mxu0
  %1021 = vmatpush.bf16.msra.mxu0 0
  %1022 = vmatpush.bf16.msra.mxu0 0
  %1023 = vmatpush.bf16.msra.mxu0 0
  %1024 = vmatpush.bf16.msra.mxu0 0
  %1025 = vmatpush.bf16.msra.mxu0 0
  %1026 = vmatpush.bf16.msra.mxu0 0
  %1027 = vmatpush.bf16.msra.mxu0 %v890
  %1028 = vmatpush.bf16.msra.mxu0 %v881
  %1029 = vmatmul.bf16.gmra.mxu0 %v154
  %v1030 = vpop.f32.mrf.mxu0
  %v1031 = vadd.f32 0.0, %v1030
  %v1032 = vpop.f32.mrf.mxu0
  %v1033 = vadd.f32 0.0, %v1032
  %1034 = vdwg.mxu0
  %v1035 = vmax.f32 %v778, %v919
  %v1036 = vmax.f32 %v779, %v933
  %v1037 = vmax.f32 %v780, %v947
  %v1038 = vmax.f32 %v781, %v961
  %v1039 = vmax.f32 %v782, %v975
  %v1040 = vmax.f32 %v783, %v989
  %v1041 = vmax.f32 %v784, %v1003
  %v1042 = vmax.f32 %v785, %v1017
  %v1043 = vmax.f32 %v786, %v1031
  %v1044 = vmax.f32 %v787, %v921
  %v1045 = vmax.f32 %v788, %v935
  %v1046 = vmax.f32 %v789, %v949
  %v1047 = vmax.f32 %v790, %v963
  %v1048 = vmax.f32 %v791, %v977
  %v1049 = vmax.f32 %v792, %v991
  %v1050 = vmax.f32 %v793, %v1005
  %v1051 = vmax.f32 %v794, %v1019
  %v1052 = vmax.f32 %v795, %v1033
  %v1053 = vld [vmem:[%s2] sm:$0xff]
  %v1054 = vld [vmem:[%s2 + $0x8] sm:$0xff]
  %1056 = vset.pattern.permute.xlu0 0
  %1057 = vperm.xlu0 %1056, %v1053
  %v1058 = vpop.permute.xlu0 %1057
  %1061 = vset.pattern.permute.xlu0 0
  %1062 = vperm.xlu0 %1061, %v1054
  %v1063 = vpop.permute.xlu0 %1062
  %v1065 = vadd.f32 %v1035, %v1058
  %v1066 = vadd.f32 %v1036, %v1058
  %v1067 = vadd.f32 %v1037, %v1058
  %v1068 = vadd.f32 %v1038, %v1058
  %v1069 = vadd.f32 %v1039, %v1058
  %v1070 = vadd.f32 %v1040, %v1058
  %v1071 = vadd.f32 %v1041, %v1058
  %v1072 = vadd.f32 %v1042, %v1058
  %v1073 = vadd.f32 %v1043, %v1058
  %v1074 = vadd.f32 %v1044, %v1063
  %v1075 = vadd.f32 %v1045, %v1063
  %v1076 = vadd.f32 %v1046, %v1063
  %v1077 = vadd.f32 %v1047, %v1063
  %v1078 = vadd.f32 %v1048, %v1063
  %v1079 = vadd.f32 %v1049, %v1063
  %v1080 = vadd.f32 %v1050, %v1063
  %v1081 = vadd.f32 %v1051, %v1063
  %v1082 = vadd.f32 %v1052, %v1063
  %v1083 = vmax.f32 %v1065, 0.0
  %v1084 = vmax.f32 %v1066, 0.0
  %v1085 = vmax.f32 %v1067, 0.0
  %v1086 = vmax.f32 %v1068, 0.0
  %v1087 = vmax.f32 %v1069, 0.0
  %v1088 = vmax.f32 %v1070, 0.0
  %v1089 = vmax.f32 %v1071, 0.0
  %v1090 = vmax.f32 %v1072, 0.0
  %v1091 = vmax.f32 %v1073, 0.0
  %v1092 = vmax.f32 %v1074, 0.0
  %v1093 = vmax.f32 %v1075, 0.0
  %v1094 = vmax.f32 %v1076, 0.0
  %v1095 = vmax.f32 %v1077, 0.0
  %v1096 = vmax.f32 %v1078, 0.0
  %v1097 = vmax.f32 %v1079, 0.0
  %v1098 = vmax.f32 %v1080, 0.0
  %v1099 = vmax.f32 %v1081, 0.0
  %v1100 = vmax.f32 %v1082, 0.0
  %v1101 = vpack.c.bf16 %v1084, %v1083
  %v1102 = vpack.c.bf16 %v1086, %v1085
  %v1103 = vpack.c.bf16 %v1088, %v1087
  %v1104 = vpack.c.bf16 %v1090, %v1089
  %v1105 = vpack.c.bf16 %v1091, %v1091
  %v1106 = vpack.c.bf16 %v1093, %v1092
  %v1107 = vpack.c.bf16 %v1095, %v1094
  %v1108 = vpack.c.bf16 %v1097, %v1096
  %v1109 = vpack.c.bf16 %v1099, %v1098
  %v1110 = vpack.c.bf16 %v1100, %v1100
  %v1121 = vunpack.c.l.b16 %v1101
  %v1122 = vunpack.c.h.b16 %v1101
  %v1123 = vunpack.c.l.b16 %v1102
  %v1124 = vunpack.c.h.b16 %v1102
  %v1125 = vunpack.c.l.b16 %v1103
  %v1126 = vunpack.c.h.b16 %v1103
  %v1127 = vunpack.c.l.b16 %v1104
  %v1128 = vunpack.c.h.b16 %v1104
  %v1129 = vunpack.c.l.b16 %v1105
  %v1130 = vunpack.c.l.b16 %v1106
  %v1131 = vunpack.c.h.b16 %v1106
  %v1132 = vunpack.c.l.b16 %v1107
  %v1133 = vunpack.c.h.b16 %v1107
  %v1134 = vunpack.c.l.b16 %v1108
  %v1135 = vunpack.c.h.b16 %v1108
  %v1136 = vunpack.c.l.b16 %v1109
  %v1137 = vunpack.c.h.b16 %v1109
  %v1138 = vunpack.c.l.b16 %v1110
  %v1139 = vpack.c.b16 %v1130, %v1121
  %v1140 = vpack.c.b16 %v1131, %v1122
  %v1141 = vpack.c.b16 %v1132, %v1123
  %v1142 = vpack.c.b16 %v1133, %v1124
  %v1143 = vpack.c.b16 %v1134, %v1125
  %v1144 = vpack.c.b16 %v1135, %v1126
  %v1145 = vpack.c.b16 %v1136, %v1127
  %v1146 = vpack.c.b16 %v1137, %v1128
  %v1147 = vpack.c.b16 %v1138, %v1129
  %v1157 = vld [vmem:[%s3] sm:$0xf]
  %v1158 = vld [vmem:[%s3 + $0x4] sm:$0xf]
  %v1159 = vld [vmem:[%s3 + $0x8] sm:$0xf]
  %s1160 = scalar_lea.vmem %s3, 12
  %v1161 = vld [vmem:[%s1160] sm:$0xf]
  %v1162 = vld [vmem:[%s1160 + $0x4] sm:$0xf]
  %v1163 = vld [vmem:[%s1160 + $0x8] sm:$0xf]
  %v1167 = vunpack.c.l.b16 %v1161
  %v1168 = vunpack.c.l.b16 %v1162
  %v1169 = vunpack.c.l.b16 %v1163
  %v1170 = vpack.c.b16 %v1168, %v1167
  %v1171 = vpack.c.b16 %v1169, %v1169
  %1172 = vrot.lane.b32.xlu0 %v1139, 120
  %v1173 = vpop.permute.xlu0 %1172
  %1174 = vrot.lane.b32.xlu0 %v1140, 120
  %v1175 = vpop.permute.xlu0 %1174
  %1176 = vrot.lane.b32.xlu0 %v1141, 120
  %v1177 = vpop.permute.xlu0 %1176
  %1178 = vrot.lane.b32.xlu0 %v1142, 120
  %v1179 = vpop.permute.xlu0 %1178
  %1180 = vrot.lane.b32.xlu0 %v1143, 120
  %v1181 = vpop.permute.xlu0 %1180
  %1182 = vrot.lane.b32.xlu0 %v1144, 120
  %v1183 = vpop.permute.xlu0 %1182
  %1184 = vrot.lane.b32.xlu0 %v1145, 120
  %v1185 = vpop.permute.xlu0 %1184
  %vm1186 = vcmask 982016
  %v1187 = vsel %vm1186, %v1173, %v1175
  %v1188 = vsel %vm1186, %v1175, %v1177
  %v1189 = vsel %vm1186, %v1177, %v1179
  %v1190 = vsel %vm1186, %v1179, %v1181
  %v1191 = vsel %vm1186, %v1181, %v1183
  %v1192 = vsel %vm1186, %v1183, %v1185
  %vm1199 = vcmask 130048
  %v1201 = vsel %vm1199, %v1170, 0
  %v1204 = vsel %vm1199, %v1171, 0
  %1206 = vmatpush.bf16.msra.mxu0 0
  %1207 = vmatpush.bf16.msra.mxu0 0
  %1208 = vmatpush.bf16.msra.mxu0 0
  %1209 = vmatpush.bf16.msra.mxu0 0
  %1210 = vmatpush.bf16.msra.mxu0 0
  %1211 = vmatpush.bf16.msra.mxu0 0
  %1212 = vmatpush.bf16.msra.mxu0 0
  %1213 = vmatpush.bf16.msra.mxu0 %v1187
  %1214 = vmatmul.bf16.gmra.mxu0 %v1201
  %v1215 = vpop.f32.mrf.mxu0
  %v1216 = vadd.f32 0.0, %v1215
  %v1217 = vpop.f32.mrf.mxu0
  %v1218 = vadd.f32 0.0, %v1217
  %1219 = vmatmul.bf16.gmra.mxu0 %v1204
  %v1220 = vpop.f32.mrf.mxu0
  %v1221 = vadd.f32 0.0, %v1220
  %v1222 = vpop.f32.mrf.mxu0
  %1223 = vdwg.mxu0
  %1224 = vmatpush.bf16.msra.mxu0 0
  %1225 = vmatpush.bf16.msra.mxu0 0
  %1226 = vmatpush.bf16.msra.mxu0 0
  %1227 = vmatpush.bf16.msra.mxu0 0
  %1228 = vmatpush.bf16.msra.mxu0 0
  %1229 = vmatpush.bf16.msra.mxu0 0
  %1230 = vmatpush.bf16.msra.mxu0 0
  %1231 = vmatpush.bf16.msra.mxu0 %v1188
  %1232 = vmatmul.bf16.gmra.mxu0 %v1201
  %v1233 = vpop.f32.mrf.mxu0
  %v1234 = vadd.f32 0.0, %v1233
  %v1235 = vpop.f32.mrf.mxu0
  %v1236 = vadd.f32 0.0, %v1235
  %1237 = vmatmul.bf16.gmra.mxu0 %v1204
  %v1238 = vpop.f32.mrf.mxu0
  %v1239 = vadd.f32 0.0, %v1238
  %v1240 = vpop.f32.mrf.mxu0
  %1241 = vdwg.mxu0
  %1242 = vmatpush.bf16.msra.mxu0 0
  %1243 = vmatpush.bf16.msra.mxu0 0
  %1244 = vmatpush.bf16.msra.mxu0 0
  %1245 = vmatpush.bf16.msra.mxu0 0
  %1246 = vmatpush.bf16.msra.mxu0 0
  %1247 = vmatpush.bf16.msra.mxu0 0
  %1248 = vmatpush.bf16.msra.mxu0 0
  %1249 = vmatpush.bf16.msra.mxu0 %v1189
  %1250 = vmatmul.bf16.gmra.mxu0 %v1201
  %v1251 = vpop.f32.mrf.mxu0
  %v1252 = vadd.f32 0.0, %v1251
  %v1253 = vpop.f32.mrf.mxu0
  %v1254 = vadd.f32 0.0, %v1253
  %1255 = vmatmul.bf16.gmra.mxu0 %v1204
  %v1256 = vpop.f32.mrf.mxu0
  %v1257 = vadd.f32 0.0, %v1256
  %v1258 = vpop.f32.mrf.mxu0
  %1259 = vdwg.mxu0
  %1260 = vmatpush.bf16.msra.mxu0 0
  %1261 = vmatpush.bf16.msra.mxu0 0
  %1262 = vmatpush.bf16.msra.mxu0 0
  %1263 = vmatpush.bf16.msra.mxu0 0
  %1264 = vmatpush.bf16.msra.mxu0 0
  %1265 = vmatpush.bf16.msra.mxu0 0
  %1266 = vmatpush.bf16.msra.mxu0 0
  %1267 = vmatpush.bf16.msra.mxu0 %v1190
  %1268 = vmatmul.bf16.gmra.mxu0 %v1201
  %v1269 = vpop.f32.mrf.mxu0
  %v1270 = vadd.f32 0.0, %v1269
  %v1271 = vpop.f32.mrf.mxu0
  %v1272 = vadd.f32 0.0, %v1271
  %1273 = vmatmul.bf16.gmra.mxu0 %v1204
  %v1274 = vpop.f32.mrf.mxu0
  %v1275 = vadd.f32 0.0, %v1274
  %v1276 = vpop.f32.mrf.mxu0
  %1277 = vdwg.mxu0
  %1278 = vmatpush.bf16.msra.mxu0 0
  %1279 = vmatpush.bf16.msra.mxu0 0
  %1280 = vmatpush.bf16.msra.mxu0 0
  %1281 = vmatpush.bf16.msra.mxu0 0
  %1282 = vmatpush.bf16.msra.mxu0 0
  %1283 = vmatpush.bf16.msra.mxu0 0
  %1284 = vmatpush.bf16.msra.mxu0 0
  %1285 = vmatpush.bf16.msra.mxu0 %v1191
  %1286 = vmatmul.bf16.gmra.mxu0 %v1201
  %v1287 = vpop.f32.mrf.mxu0
  %v1288 = vadd.f32 0.0, %v1287
  %v1289 = vpop.f32.mrf.mxu0
  %v1290 = vadd.f32 0.0, %v1289
  %1291 = vmatmul.bf16.gmra.mxu0 %v1204
  %v1292 = vpop.f32.mrf.mxu0
  %v1293 = vadd.f32 0.0, %v1292
  %v1294 = vpop.f32.mrf.mxu0
  %1295 = vdwg.mxu0
  %1296 = vmatpush.bf16.msra.mxu0 0
  %1297 = vmatpush.bf16.msra.mxu0 0
  %1298 = vmatpush.bf16.msra.mxu0 0
  %1299 = vmatpush.bf16.msra.mxu0 0
  %1300 = vmatpush.bf16.msra.mxu0 0
  %1301 = vmatpush.bf16.msra.mxu0 0
  %1302 = vmatpush.bf16.msra.mxu0 0
  %1303 = vmatpush.bf16.msra.mxu0 %v1192
  %1304 = vmatmul.bf16.gmra.mxu0 %v1201
  %v1305 = vpop.f32.mrf.mxu0
  %v1306 = vadd.f32 0.0, %v1305
  %v1307 = vpop.f32.mrf.mxu0
  %v1308 = vadd.f32 0.0, %v1307
  %1309 = vmatmul.bf16.gmra.mxu0 %v1204
  %v1310 = vpop.f32.mrf.mxu0
  %v1311 = vadd.f32 0.0, %v1310
  %v1312 = vpop.f32.mrf.mxu0
  %1313 = vdwg.mxu0
  %v1317 = vunpack.c.l.b16 %v1157
  %v1318 = vunpack.c.l.b16 %v1158
  %v1319 = vunpack.c.l.b16 %v1159
  %v1320 = vpack.c.b16 %v1318, %v1317
  %v1321 = vpack.c.b16 %v1319, %v1319
  %v1323 = vsel %vm1199, %v1320, 0
  %v1326 = vsel %vm1199, %v1321, 0
  %1328 = vmatpush.bf16.msra.mxu0 0
  %1329 = vmatpush.bf16.msra.mxu0 0
  %1330 = vmatpush.bf16.msra.mxu0 0
  %1331 = vmatpush.bf16.msra.mxu0 0
  %1332 = vmatpush.bf16.msra.mxu0 0
  %1333 = vmatpush.bf16.msra.mxu0 0
  %1334 = vmatpush.bf16.msra.mxu0 0
  %1335 = vmatpush.bf16.msra.mxu0 %v1139
  %1336 = vmatmul.bf16.gmra.mxu0 %v1323
  %v1337 = vpop.f32.mrf.mxu0
  %v1338 = vadd.f32 %v1216, %v1337
  %v1339 = vpop.f32.mrf.mxu0
  %v1340 = vadd.f32 %v1218, %v1339
  %1341 = vmatmul.bf16.gmra.mxu0 %v1326
  %v1342 = vpop.f32.mrf.mxu0
  %v1343 = vadd.f32 %v1221, %v1342
  %v1344 = vpop.f32.mrf.mxu0
  %1345 = vdwg.mxu0
  %1346 = vmatpush.bf16.msra.mxu0 0
  %1347 = vmatpush.bf16.msra.mxu0 0
  %1348 = vmatpush.bf16.msra.mxu0 0
  %1349 = vmatpush.bf16.msra.mxu0 0
  %1350 = vmatpush.bf16.msra.mxu0 0
  %1351 = vmatpush.bf16.msra.mxu0 0
  %1352 = vmatpush.bf16.msra.mxu0 0
  %1353 = vmatpush.bf16.msra.mxu0 %v1140
  %1354 = vmatmul.bf16.gmra.mxu0 %v1323
  %v1355 = vpop.f32.mrf.mxu0
  %v1356 = vadd.f32 %v1234, %v1355
  %v1357 = vpop.f32.mrf.mxu0
  %v1358 = vadd.f32 %v1236, %v1357
  %1359 = vmatmul.bf16.gmra.mxu0 %v1326
  %v1360 = vpop.f32.mrf.mxu0
  %v1361 = vadd.f32 %v1239, %v1360
  %v1362 = vpop.f32.mrf.mxu0
  %1363 = vdwg.mxu0
  %1364 = vmatpush.bf16.msra.mxu0 0
  %1365 = vmatpush.bf16.msra.mxu0 0
  %1366 = vmatpush.bf16.msra.mxu0 0
  %1367 = vmatpush.bf16.msra.mxu0 0
  %1368 = vmatpush.bf16.msra.mxu0 0
  %1369 = vmatpush.bf16.msra.mxu0 0
  %1370 = vmatpush.bf16.msra.mxu0 0
  %1371 = vmatpush.bf16.msra.mxu0 %v1141
  %1372 = vmatmul.bf16.gmra.mxu0 %v1323
  %v1373 = vpop.f32.mrf.mxu0
  %v1374 = vadd.f32 %v1252, %v1373
  %v1375 = vpop.f32.mrf.mxu0
  %v1376 = vadd.f32 %v1254, %v1375
  %1377 = vmatmul.bf16.gmra.mxu0 %v1326
  %v1378 = vpop.f32.mrf.mxu0
  %v1379 = vadd.f32 %v1257, %v1378
  %v1380 = vpop.f32.mrf.mxu0
  %1381 = vdwg.mxu0
  %1382 = vmatpush.bf16.msra.mxu0 0
  %1383 = vmatpush.bf16.msra.mxu0 0
  %1384 = vmatpush.bf16.msra.mxu0 0
  %1385 = vmatpush.bf16.msra.mxu0 0
  %1386 = vmatpush.bf16.msra.mxu0 0
  %1387 = vmatpush.bf16.msra.mxu0 0
  %1388 = vmatpush.bf16.msra.mxu0 0
  %1389 = vmatpush.bf16.msra.mxu0 %v1142
  %1390 = vmatmul.bf16.gmra.mxu0 %v1323
  %v1391 = vpop.f32.mrf.mxu0
  %v1392 = vadd.f32 %v1270, %v1391
  %v1393 = vpop.f32.mrf.mxu0
  %v1394 = vadd.f32 %v1272, %v1393
  %1395 = vmatmul.bf16.gmra.mxu0 %v1326
  %v1396 = vpop.f32.mrf.mxu0
  %v1397 = vadd.f32 %v1275, %v1396
  %v1398 = vpop.f32.mrf.mxu0
  %1399 = vdwg.mxu0
  %1400 = vmatpush.bf16.msra.mxu0 0
  %1401 = vmatpush.bf16.msra.mxu0 0
  %1402 = vmatpush.bf16.msra.mxu0 0
  %1403 = vmatpush.bf16.msra.mxu0 0
  %1404 = vmatpush.bf16.msra.mxu0 0
  %1405 = vmatpush.bf16.msra.mxu0 0
  %1406 = vmatpush.bf16.msra.mxu0 0
  %1407 = vmatpush.bf16.msra.mxu0 %v1143
  %1408 = vmatmul.bf16.gmra.mxu0 %v1323
  %v1409 = vpop.f32.mrf.mxu0
  %v1410 = vadd.f32 %v1288, %v1409
  %v1411 = vpop.f32.mrf.mxu0
  %v1412 = vadd.f32 %v1290, %v1411
  %1413 = vmatmul.bf16.gmra.mxu0 %v1326
  %v1414 = vpop.f32.mrf.mxu0
  %v1415 = vadd.f32 %v1293, %v1414
  %v1416 = vpop.f32.mrf.mxu0
  %1417 = vdwg.mxu0
  %1418 = vmatpush.bf16.msra.mxu0 0
  %1419 = vmatpush.bf16.msra.mxu0 0
  %1420 = vmatpush.bf16.msra.mxu0 0
  %1421 = vmatpush.bf16.msra.mxu0 0
  %1422 = vmatpush.bf16.msra.mxu0 0
  %1423 = vmatpush.bf16.msra.mxu0 0
  %1424 = vmatpush.bf16.msra.mxu0 0
  %1425 = vmatpush.bf16.msra.mxu0 %v1144
  %1426 = vmatmul.bf16.gmra.mxu0 %v1323
  %v1427 = vpop.f32.mrf.mxu0
  %v1428 = vadd.f32 %v1306, %v1427
  %v1429 = vpop.f32.mrf.mxu0
  %v1430 = vadd.f32 %v1308, %v1429
  %1431 = vmatmul.bf16.gmra.mxu0 %v1326
  %v1432 = vpop.f32.mrf.mxu0
  %v1433 = vadd.f32 %v1311, %v1432
  %v1434 = vpop.f32.mrf.mxu0
  %1435 = vdwg.mxu0
  %s1436 = scalar_lea.vmem %s3, 24
  %v1437 = vld [vmem:[%s1436] sm:$0xf]
  %v1438 = vld [vmem:[%s1436 + $0x4] sm:$0xf]
  %v1439 = vld [vmem:[%s1436 + $0x8] sm:$0xf]
  %v1443 = vunpack.c.l.b16 %v1437
  %v1444 = vunpack.c.l.b16 %v1438
  %v1445 = vunpack.c.l.b16 %v1439
  %v1446 = vpack.c.b16 %v1444, %v1443
  %v1447 = vpack.c.b16 %v1445, %v1445
  %1448 = vrot.lane.b32.xlu0 %v1139, 112
  %v1449 = vpop.permute.xlu0 %1448
  %1450 = vrot.lane.b32.xlu0 %v1140, 112
  %v1451 = vpop.permute.xlu0 %1450
  %1452 = vrot.lane.b32.xlu0 %v1141, 112
  %v1453 = vpop.permute.xlu0 %1452
  %1454 = vrot.lane.b32.xlu0 %v1142, 112
  %v1455 = vpop.permute.xlu0 %1454
  %1456 = vrot.lane.b32.xlu0 %v1143, 112
  %v1457 = vpop.permute.xlu0 %1456
  %1458 = vrot.lane.b32.xlu0 %v1144, 112
  %v1459 = vpop.permute.xlu0 %1458
  %1460 = vrot.lane.b32.xlu0 %v1145, 112
  %v1461 = vpop.permute.xlu0 %1460
  %vm1462 = vcmask 916480
  %v1463 = vsel %vm1462, %v1449, %v1451
  %v1464 = vsel %vm1462, %v1451, %v1453
  %v1465 = vsel %vm1462, %v1453, %v1455
  %v1466 = vsel %vm1462, %v1455, %v1457
  %v1467 = vsel %vm1462, %v1457, %v1459
  %v1468 = vsel %vm1462, %v1459, %v1461
  %v1476 = vsel %vm1199, %v1446, 0
  %v1479 = vsel %vm1199, %v1447, 0
  %1481 = vmatpush.bf16.msra.mxu0 0
  %1482 = vmatpush.bf16.msra.mxu0 0
  %1483 = vmatpush.bf16.msra.mxu0 0
  %1484 = vmatpush.bf16.msra.mxu0 0
  %1485 = vmatpush.bf16.msra.mxu0 0
  %1486 = vmatpush.bf16.msra.mxu0 0
  %1487 = vmatpush.bf16.msra.mxu0 0
  %1488 = vmatpush.bf16.msra.mxu0 %v1463
  %1489 = vmatmul.bf16.gmra.mxu0 %v1476
  %v1490 = vpop.f32.mrf.mxu0
  %v1491 = vadd.f32 0.0, %v1490
  %v1492 = vpop.f32.mrf.mxu0
  %v1493 = vadd.f32 0.0, %v1492
  %1494 = vmatmul.bf16.gmra.mxu0 %v1479
  %v1495 = vpop.f32.mrf.mxu0
  %v1496 = vadd.f32 0.0, %v1495
  %v1497 = vpop.f32.mrf.mxu0
  %1498 = vdwg.mxu0
  %1499 = vmatpush.bf16.msra.mxu0 0
  %1500 = vmatpush.bf16.msra.mxu0 0
  %1501 = vmatpush.bf16.msra.mxu0 0
  %1502 = vmatpush.bf16.msra.mxu0 0
  %1503 = vmatpush.bf16.msra.mxu0 0
  %1504 = vmatpush.bf16.msra.mxu0 0
  %1505 = vmatpush.bf16.msra.mxu0 0
  %1506 = vmatpush.bf16.msra.mxu0 %v1464
  %1507 = vmatmul.bf16.gmra.mxu0 %v1476
  %v1508 = vpop.f32.mrf.mxu0
  %v1509 = vadd.f32 0.0, %v1508
  %v1510 = vpop.f32.mrf.mxu0
  %v1511 = vadd.f32 0.0, %v1510
  %1512 = vmatmul.bf16.gmra.mxu0 %v1479
  %v1513 = vpop.f32.mrf.mxu0
  %v1514 = vadd.f32 0.0, %v1513
  %v1515 = vpop.f32.mrf.mxu0
  %1516 = vdwg.mxu0
  %1517 = vmatpush.bf16.msra.mxu0 0
  %1518 = vmatpush.bf16.msra.mxu0 0
  %1519 = vmatpush.bf16.msra.mxu0 0
  %1520 = vmatpush.bf16.msra.mxu0 0
  %1521 = vmatpush.bf16.msra.mxu0 0
  %1522 = vmatpush.bf16.msra.mxu0 0
  %1523 = vmatpush.bf16.msra.mxu0 0
  %1524 = vmatpush.bf16.msra.mxu0 %v1465
  %1525 = vmatmul.bf16.gmra.mxu0 %v1476
  %v1526 = vpop.f32.mrf.mxu0
  %v1527 = vadd.f32 0.0, %v1526
  %v1528 = vpop.f32.mrf.mxu0
  %v1529 = vadd.f32 0.0, %v1528
  %1530 = vmatmul.bf16.gmra.mxu0 %v1479
  %v1531 = vpop.f32.mrf.mxu0
  %v1532 = vadd.f32 0.0, %v1531
  %v1533 = vpop.f32.mrf.mxu0
  %1534 = vdwg.mxu0
  %1535 = vmatpush.bf16.msra.mxu0 0
  %1536 = vmatpush.bf16.msra.mxu0 0
  %1537 = vmatpush.bf16.msra.mxu0 0
  %1538 = vmatpush.bf16.msra.mxu0 0
  %1539 = vmatpush.bf16.msra.mxu0 0
  %1540 = vmatpush.bf16.msra.mxu0 0
  %1541 = vmatpush.bf16.msra.mxu0 0
  %1542 = vmatpush.bf16.msra.mxu0 %v1466
  %1543 = vmatmul.bf16.gmra.mxu0 %v1476
  %v1544 = vpop.f32.mrf.mxu0
  %v1545 = vadd.f32 0.0, %v1544
  %v1546 = vpop.f32.mrf.mxu0
  %v1547 = vadd.f32 0.0, %v1546
  %1548 = vmatmul.bf16.gmra.mxu0 %v1479
  %v1549 = vpop.f32.mrf.mxu0
  %v1550 = vadd.f32 0.0, %v1549
  %v1551 = vpop.f32.mrf.mxu0
  %1552 = vdwg.mxu0
  %1553 = vmatpush.bf16.msra.mxu0 0
  %1554 = vmatpush.bf16.msra.mxu0 0
  %1555 = vmatpush.bf16.msra.mxu0 0
  %1556 = vmatpush.bf16.msra.mxu0 0
  %1557 = vmatpush.bf16.msra.mxu0 0
  %1558 = vmatpush.bf16.msra.mxu0 0
  %1559 = vmatpush.bf16.msra.mxu0 0
  %1560 = vmatpush.bf16.msra.mxu0 %v1467
  %1561 = vmatmul.bf16.gmra.mxu0 %v1476
  %v1562 = vpop.f32.mrf.mxu0
  %v1563 = vadd.f32 0.0, %v1562
  %v1564 = vpop.f32.mrf.mxu0
  %v1565 = vadd.f32 0.0, %v1564
  %1566 = vmatmul.bf16.gmra.mxu0 %v1479
  %v1567 = vpop.f32.mrf.mxu0
  %v1568 = vadd.f32 0.0, %v1567
  %v1569 = vpop.f32.mrf.mxu0
  %1570 = vdwg.mxu0
  %1571 = vmatpush.bf16.msra.mxu0 0
  %1572 = vmatpush.bf16.msra.mxu0 0
  %1573 = vmatpush.bf16.msra.mxu0 0
  %1574 = vmatpush.bf16.msra.mxu0 0
  %1575 = vmatpush.bf16.msra.mxu0 0
  %1576 = vmatpush.bf16.msra.mxu0 0
  %1577 = vmatpush.bf16.msra.mxu0 0
  %1578 = vmatpush.bf16.msra.mxu0 %v1468
  %1579 = vmatmul.bf16.gmra.mxu0 %v1476
  %v1580 = vpop.f32.mrf.mxu0
  %v1581 = vadd.f32 0.0, %v1580
  %v1582 = vpop.f32.mrf.mxu0
  %v1583 = vadd.f32 0.0, %v1582
  %1584 = vmatmul.bf16.gmra.mxu0 %v1479
  %v1585 = vpop.f32.mrf.mxu0
  %v1586 = vadd.f32 0.0, %v1585
  %v1587 = vpop.f32.mrf.mxu0
  %1588 = vdwg.mxu0
  %v1589 = vadd.f32 %v1338, %v1491
  %v1590 = vadd.f32 %v1356, %v1509
  %v1591 = vadd.f32 %v1374, %v1527
  %v1592 = vadd.f32 %v1392, %v1545
  %v1593 = vadd.f32 %v1410, %v1563
  %v1594 = vadd.f32 %v1428, %v1581
  %v1595 = vadd.f32 %v1340, %v1493
  %v1596 = vadd.f32 %v1358, %v1511
  %v1597 = vadd.f32 %v1376, %v1529
  %v1598 = vadd.f32 %v1394, %v1547
  %v1599 = vadd.f32 %v1412, %v1565
  %v1600 = vadd.f32 %v1430, %v1583
  %v1601 = vadd.f32 %v1343, %v1496
  %v1602 = vadd.f32 %v1361, %v1514
  %v1603 = vadd.f32 %v1379, %v1532
  %v1604 = vadd.f32 %v1397, %v1550
  %v1605 = vadd.f32 %v1415, %v1568
  %v1606 = vadd.f32 %v1433, %v1586
  %s1607 = scalar_lea.vmem %s3, 36
  %v1608 = vld [vmem:[%s1607] sm:$0xf]
  %v1609 = vld [vmem:[%s1607 + $0x4] sm:$0xf]
  %v1610 = vld [vmem:[%s1607 + $0x8] sm:$0xf]
  %v1614 = vunpack.c.l.b16 %v1608
  %v1615 = vunpack.c.l.b16 %v1609
  %v1616 = vunpack.c.l.b16 %v1610
  %v1617 = vpack.c.b16 %v1615, %v1614
  %v1618 = vpack.c.b16 %v1616, %v1616
  %1619 = vrot.lane.b32.xlu0 %v1139, 104
  %v1620 = vpop.permute.xlu0 %1619
  %1621 = vrot.lane.b32.xlu0 %v1140, 104
  %v1622 = vpop.permute.xlu0 %1621
  %1623 = vrot.lane.b32.xlu0 %v1141, 104
  %v1624 = vpop.permute.xlu0 %1623
  %1625 = vrot.lane.b32.xlu0 %v1142, 104
  %v1626 = vpop.permute.xlu0 %1625
  %1627 = vrot.lane.b32.xlu0 %v1143, 104
  %v1628 = vpop.permute.xlu0 %1627
  %1629 = vrot.lane.b32.xlu0 %v1144, 104
  %v1630 = vpop.permute.xlu0 %1629
  %1631 = vrot.lane.b32.xlu0 %v1145, 104
  %v1632 = vpop.permute.xlu0 %1631
  %vm1633 = vcmask 850944
  %v1634 = vsel %vm1633, %v1620, %v1622
  %v1635 = vsel %vm1633, %v1622, %v1624
  %v1636 = vsel %vm1633, %v1624, %v1626
  %v1637 = vsel %vm1633, %v1626, %v1628
  %v1638 = vsel %vm1633, %v1628, %v1630
  %v1639 = vsel %vm1633, %v1630, %v1632
  %v1647 = vsel %vm1199, %v1617, 0
  %v1650 = vsel %vm1199, %v1618, 0
  %1652 = vmatpush.bf16.msra.mxu0 0
  %1653 = vmatpush.bf16.msra.mxu0 0
  %1654 = vmatpush.bf16.msra.mxu0 0
  %1655 = vmatpush.bf16.msra.mxu0 0
  %1656 = vmatpush.bf16.msra.mxu0 0
  %1657 = vmatpush.bf16.msra.mxu0 0
  %1658 = vmatpush.bf16.msra.mxu0 0
  %1659 = vmatpush.bf16.msra.mxu0 %v1634
  %1660 = vmatmul.bf16.gmra.mxu0 %v1647
  %v1661 = vpop.f32.mrf.mxu0
  %v1662 = vadd.f32 0.0, %v1661
  %v1663 = vpop.f32.mrf.mxu0
  %v1664 = vadd.f32 0.0, %v1663
  %1665 = vmatmul.bf16.gmra.mxu0 %v1650
  %v1666 = vpop.f32.mrf.mxu0
  %v1667 = vadd.f32 0.0, %v1666
  %v1668 = vpop.f32.mrf.mxu0
  %1669 = vdwg.mxu0
  %1670 = vmatpush.bf16.msra.mxu0 0
  %1671 = vmatpush.bf16.msra.mxu0 0
  %1672 = vmatpush.bf16.msra.mxu0 0
  %1673 = vmatpush.bf16.msra.mxu0 0
  %1674 = vmatpush.bf16.msra.mxu0 0
  %1675 = vmatpush.bf16.msra.mxu0 0
  %1676 = vmatpush.bf16.msra.mxu0 0
  %1677 = vmatpush.bf16.msra.mxu0 %v1635
  %1678 = vmatmul.bf16.gmra.mxu0 %v1647
  %v1679 = vpop.f32.mrf.mxu0
  %v1680 = vadd.f32 0.0, %v1679
  %v1681 = vpop.f32.mrf.mxu0
  %v1682 = vadd.f32 0.0, %v1681
  %1683 = vmatmul.bf16.gmra.mxu0 %v1650
  %v1684 = vpop.f32.mrf.mxu0
  %v1685 = vadd.f32 0.0, %v1684
  %v1686 = vpop.f32.mrf.mxu0
  %1687 = vdwg.mxu0
  %1688 = vmatpush.bf16.msra.mxu0 0
  %1689 = vmatpush.bf16.msra.mxu0 0
  %1690 = vmatpush.bf16.msra.mxu0 0
  %1691 = vmatpush.bf16.msra.mxu0 0
  %1692 = vmatpush.bf16.msra.mxu0 0
  %1693 = vmatpush.bf16.msra.mxu0 0
  %1694 = vmatpush.bf16.msra.mxu0 0
  %1695 = vmatpush.bf16.msra.mxu0 %v1636
  %1696 = vmatmul.bf16.gmra.mxu0 %v1647
  %v1697 = vpop.f32.mrf.mxu0
  %v1698 = vadd.f32 0.0, %v1697
  %v1699 = vpop.f32.mrf.mxu0
  %v1700 = vadd.f32 0.0, %v1699
  %1701 = vmatmul.bf16.gmra.mxu0 %v1650
  %v1702 = vpop.f32.mrf.mxu0
  %v1703 = vadd.f32 0.0, %v1702
  %v1704 = vpop.f32.mrf.mxu0
  %1705 = vdwg.mxu0
  %1706 = vmatpush.bf16.msra.mxu0 0
  %1707 = vmatpush.bf16.msra.mxu0 0
  %1708 = vmatpush.bf16.msra.mxu0 0
  %1709 = vmatpush.bf16.msra.mxu0 0
  %1710 = vmatpush.bf16.msra.mxu0 0
  %1711 = vmatpush.bf16.msra.mxu0 0
  %1712 = vmatpush.bf16.msra.mxu0 0
  %1713 = vmatpush.bf16.msra.mxu0 %v1637
  %1714 = vmatmul.bf16.gmra.mxu0 %v1647
  %v1715 = vpop.f32.mrf.mxu0
  %v1716 = vadd.f32 0.0, %v1715
  %v1717 = vpop.f32.mrf.mxu0
  %v1718 = vadd.f32 0.0, %v1717
  %1719 = vmatmul.bf16.gmra.mxu0 %v1650
  %v1720 = vpop.f32.mrf.mxu0
  %v1721 = vadd.f32 0.0, %v1720
  %v1722 = vpop.f32.mrf.mxu0
  %1723 = vdwg.mxu0
  %1724 = vmatpush.bf16.msra.mxu0 0
  %1725 = vmatpush.bf16.msra.mxu0 0
  %1726 = vmatpush.bf16.msra.mxu0 0
  %1727 = vmatpush.bf16.msra.mxu0 0
  %1728 = vmatpush.bf16.msra.mxu0 0
  %1729 = vmatpush.bf16.msra.mxu0 0
  %1730 = vmatpush.bf16.msra.mxu0 0
  %1731 = vmatpush.bf16.msra.mxu0 %v1638
  %1732 = vmatmul.bf16.gmra.mxu0 %v1647
  %v1733 = vpop.f32.mrf.mxu0
  %v1734 = vadd.f32 0.0, %v1733
  %v1735 = vpop.f32.mrf.mxu0
  %v1736 = vadd.f32 0.0, %v1735
  %1737 = vmatmul.bf16.gmra.mxu0 %v1650
  %v1738 = vpop.f32.mrf.mxu0
  %v1739 = vadd.f32 0.0, %v1738
  %v1740 = vpop.f32.mrf.mxu0
  %1741 = vdwg.mxu0
  %1742 = vmatpush.bf16.msra.mxu0 0
  %1743 = vmatpush.bf16.msra.mxu0 0
  %1744 = vmatpush.bf16.msra.mxu0 0
  %1745 = vmatpush.bf16.msra.mxu0 0
  %1746 = vmatpush.bf16.msra.mxu0 0
  %1747 = vmatpush.bf16.msra.mxu0 0
  %1748 = vmatpush.bf16.msra.mxu0 0
  %1749 = vmatpush.bf16.msra.mxu0 %v1639
  %1750 = vmatmul.bf16.gmra.mxu0 %v1647
  %v1751 = vpop.f32.mrf.mxu0
  %v1752 = vadd.f32 0.0, %v1751
  %v1753 = vpop.f32.mrf.mxu0
  %v1754 = vadd.f32 0.0, %v1753
  %1755 = vmatmul.bf16.gmra.mxu0 %v1650
  %v1756 = vpop.f32.mrf.mxu0
  %v1757 = vadd.f32 0.0, %v1756
  %v1758 = vpop.f32.mrf.mxu0
  %1759 = vdwg.mxu0
  %v1760 = vadd.f32 %v1589, %v1662
  %v1761 = vadd.f32 %v1590, %v1680
  %v1762 = vadd.f32 %v1591, %v1698
  %v1763 = vadd.f32 %v1592, %v1716
  %v1764 = vadd.f32 %v1593, %v1734
  %v1765 = vadd.f32 %v1594, %v1752
  %v1766 = vadd.f32 %v1595, %v1664
  %v1767 = vadd.f32 %v1596, %v1682
  %v1768 = vadd.f32 %v1597, %v1700
  %v1769 = vadd.f32 %v1598, %v1718
  %v1770 = vadd.f32 %v1599, %v1736
  %v1771 = vadd.f32 %v1600, %v1754
  %v1772 = vadd.f32 %v1601, %v1667
  %v1773 = vadd.f32 %v1602, %v1685
  %v1774 = vadd.f32 %v1603, %v1703
  %v1775 = vadd.f32 %v1604, %v1721
  %v1776 = vadd.f32 %v1605, %v1739
  %v1777 = vadd.f32 %v1606, %v1757
  %s1778 = scalar_lea.vmem %s3, 48
  %v1779 = vld [vmem:[%s1778] sm:$0xf]
  %v1780 = vld [vmem:[%s1778 + $0x4] sm:$0xf]
  %v1781 = vld [vmem:[%s1778 + $0x8] sm:$0xf]
  %v1785 = vunpack.c.l.b16 %v1779
  %v1786 = vunpack.c.l.b16 %v1780
  %v1787 = vunpack.c.l.b16 %v1781
  %v1788 = vpack.c.b16 %v1786, %v1785
  %v1789 = vpack.c.b16 %v1787, %v1787
  %1790 = vrot.lane.b32.xlu0 %v1139, 96
  %v1791 = vpop.permute.xlu0 %1790
  %1792 = vrot.lane.b32.xlu0 %v1140, 96
  %v1793 = vpop.permute.xlu0 %1792
  %1794 = vrot.lane.b32.xlu0 %v1141, 96
  %v1795 = vpop.permute.xlu0 %1794
  %1796 = vrot.lane.b32.xlu0 %v1142, 96
  %v1797 = vpop.permute.xlu0 %1796
  %1798 = vrot.lane.b32.xlu0 %v1143, 96
  %v1799 = vpop.permute.xlu0 %1798
  %1800 = vrot.lane.b32.xlu0 %v1144, 96
  %v1801 = vpop.permute.xlu0 %1800
  %1802 = vrot.lane.b32.xlu0 %v1145, 96
  %v1803 = vpop.permute.xlu0 %1802
  %vm1804 = vcmask 785408
  %v1805 = vsel %vm1804, %v1791, %v1793
  %v1806 = vsel %vm1804, %v1793, %v1795
  %v1807 = vsel %vm1804, %v1795, %v1797
  %v1808 = vsel %vm1804, %v1797, %v1799
  %v1809 = vsel %vm1804, %v1799, %v1801
  %v1810 = vsel %vm1804, %v1801, %v1803
  %v1818 = vsel %vm1199, %v1788, 0
  %v1821 = vsel %vm1199, %v1789, 0
  %1823 = vmatpush.bf16.msra.mxu0 0
  %1824 = vmatpush.bf16.msra.mxu0 0
  %1825 = vmatpush.bf16.msra.mxu0 0
  %1826 = vmatpush.bf16.msra.mxu0 0
  %1827 = vmatpush.bf16.msra.mxu0 0
  %1828 = vmatpush.bf16.msra.mxu0 0
  %1829 = vmatpush.bf16.msra.mxu0 0
  %1830 = vmatpush.bf16.msra.mxu0 %v1805
  %1831 = vmatmul.bf16.gmra.mxu0 %v1818
  %v1832 = vpop.f32.mrf.mxu0
  %v1833 = vadd.f32 0.0, %v1832
  %v1834 = vpop.f32.mrf.mxu0
  %v1835 = vadd.f32 0.0, %v1834
  %1836 = vmatmul.bf16.gmra.mxu0 %v1821
  %v1837 = vpop.f32.mrf.mxu0
  %v1838 = vadd.f32 0.0, %v1837
  %v1839 = vpop.f32.mrf.mxu0
  %1840 = vdwg.mxu0
  %1841 = vmatpush.bf16.msra.mxu0 0
  %1842 = vmatpush.bf16.msra.mxu0 0
  %1843 = vmatpush.bf16.msra.mxu0 0
  %1844 = vmatpush.bf16.msra.mxu0 0
  %1845 = vmatpush.bf16.msra.mxu0 0
  %1846 = vmatpush.bf16.msra.mxu0 0
  %1847 = vmatpush.bf16.msra.mxu0 0
  %1848 = vmatpush.bf16.msra.mxu0 %v1806
  %1849 = vmatmul.bf16.gmra.mxu0 %v1818
  %v1850 = vpop.f32.mrf.mxu0
  %v1851 = vadd.f32 0.0, %v1850
  %v1852 = vpop.f32.mrf.mxu0
  %v1853 = vadd.f32 0.0, %v1852
  %1854 = vmatmul.bf16.gmra.mxu0 %v1821
  %v1855 = vpop.f32.mrf.mxu0
  %v1856 = vadd.f32 0.0, %v1855
  %v1857 = vpop.f32.mrf.mxu0
  %1858 = vdwg.mxu0
  %1859 = vmatpush.bf16.msra.mxu0 0
  %1860 = vmatpush.bf16.msra.mxu0 0
  %1861 = vmatpush.bf16.msra.mxu0 0
  %1862 = vmatpush.bf16.msra.mxu0 0
  %1863 = vmatpush.bf16.msra.mxu0 0
  %1864 = vmatpush.bf16.msra.mxu0 0
  %1865 = vmatpush.bf16.msra.mxu0 0
  %1866 = vmatpush.bf16.msra.mxu0 %v1807
  %1867 = vmatmul.bf16.gmra.mxu0 %v1818
  %v1868 = vpop.f32.mrf.mxu0
  %v1869 = vadd.f32 0.0, %v1868
  %v1870 = vpop.f32.mrf.mxu0
  %v1871 = vadd.f32 0.0, %v1870
  %1872 = vmatmul.bf16.gmra.mxu0 %v1821
  %v1873 = vpop.f32.mrf.mxu0
  %v1874 = vadd.f32 0.0, %v1873
  %v1875 = vpop.f32.mrf.mxu0
  %1876 = vdwg.mxu0
  %1877 = vmatpush.bf16.msra.mxu0 0
  %1878 = vmatpush.bf16.msra.mxu0 0
  %1879 = vmatpush.bf16.msra.mxu0 0
  %1880 = vmatpush.bf16.msra.mxu0 0
  %1881 = vmatpush.bf16.msra.mxu0 0
  %1882 = vmatpush.bf16.msra.mxu0 0
  %1883 = vmatpush.bf16.msra.mxu0 0
  %1884 = vmatpush.bf16.msra.mxu0 %v1808
  %1885 = vmatmul.bf16.gmra.mxu0 %v1818
  %v1886 = vpop.f32.mrf.mxu0
  %v1887 = vadd.f32 0.0, %v1886
  %v1888 = vpop.f32.mrf.mxu0
  %v1889 = vadd.f32 0.0, %v1888
  %1890 = vmatmul.bf16.gmra.mxu0 %v1821
  %v1891 = vpop.f32.mrf.mxu0
  %v1892 = vadd.f32 0.0, %v1891
  %v1893 = vpop.f32.mrf.mxu0
  %1894 = vdwg.mxu0
  %1895 = vmatpush.bf16.msra.mxu0 0
  %1896 = vmatpush.bf16.msra.mxu0 0
  %1897 = vmatpush.bf16.msra.mxu0 0
  %1898 = vmatpush.bf16.msra.mxu0 0
  %1899 = vmatpush.bf16.msra.mxu0 0
  %1900 = vmatpush.bf16.msra.mxu0 0
  %1901 = vmatpush.bf16.msra.mxu0 0
  %1902 = vmatpush.bf16.msra.mxu0 %v1809
  %1903 = vmatmul.bf16.gmra.mxu0 %v1818
  %v1904 = vpop.f32.mrf.mxu0
  %v1905 = vadd.f32 0.0, %v1904
  %v1906 = vpop.f32.mrf.mxu0
  %v1907 = vadd.f32 0.0, %v1906
  %1908 = vmatmul.bf16.gmra.mxu0 %v1821
  %v1909 = vpop.f32.mrf.mxu0
  %v1910 = vadd.f32 0.0, %v1909
  %v1911 = vpop.f32.mrf.mxu0
  %1912 = vdwg.mxu0
  %1913 = vmatpush.bf16.msra.mxu0 0
  %1914 = vmatpush.bf16.msra.mxu0 0
  %1915 = vmatpush.bf16.msra.mxu0 0
  %1916 = vmatpush.bf16.msra.mxu0 0
  %1917 = vmatpush.bf16.msra.mxu0 0
  %1918 = vmatpush.bf16.msra.mxu0 0
  %1919 = vmatpush.bf16.msra.mxu0 0
  %1920 = vmatpush.bf16.msra.mxu0 %v1810
  %1921 = vmatmul.bf16.gmra.mxu0 %v1818
  %v1922 = vpop.f32.mrf.mxu0
  %v1923 = vadd.f32 0.0, %v1922
  %v1924 = vpop.f32.mrf.mxu0
  %v1925 = vadd.f32 0.0, %v1924
  %1926 = vmatmul.bf16.gmra.mxu0 %v1821
  %v1927 = vpop.f32.mrf.mxu0
  %v1928 = vadd.f32 0.0, %v1927
  %v1929 = vpop.f32.mrf.mxu0
  %1930 = vdwg.mxu0
  %v1931 = vadd.f32 %v1760, %v1833
  %v1932 = vadd.f32 %v1761, %v1851
  %v1933 = vadd.f32 %v1762, %v1869
  %v1934 = vadd.f32 %v1763, %v1887
  %v1935 = vadd.f32 %v1764, %v1905
  %v1936 = vadd.f32 %v1765, %v1923
  %v1937 = vadd.f32 %v1766, %v1835
  %v1938 = vadd.f32 %v1767, %v1853
  %v1939 = vadd.f32 %v1768, %v1871
  %v1940 = vadd.f32 %v1769, %v1889
  %v1941 = vadd.f32 %v1770, %v1907
  %v1942 = vadd.f32 %v1771, %v1925
  %v1943 = vadd.f32 %v1772, %v1838
  %v1944 = vadd.f32 %v1773, %v1856
  %v1945 = vadd.f32 %v1774, %v1874
  %v1946 = vadd.f32 %v1775, %v1892
  %v1947 = vadd.f32 %v1776, %v1910
  %v1948 = vadd.f32 %v1777, %v1928
  %s1949 = scalar_lea.vmem %s3, 60
  %v1950 = vld [vmem:[%s1949] sm:$0xf]
  %v1951 = vld [vmem:[%s1949 + $0x4] sm:$0xf]
  %v1952 = vld [vmem:[%s1949 + $0x8] sm:$0xf]
  %v1956 = vunpack.c.l.b16 %v1950
  %v1957 = vunpack.c.l.b16 %v1951
  %v1958 = vunpack.c.l.b16 %v1952
  %v1959 = vpack.c.b16 %v1957, %v1956
  %v1960 = vpack.c.b16 %v1958, %v1958
  %1961 = vrot.lane.b32.xlu0 %v1139, 32
  %v1962 = vpop.permute.xlu0 %1961
  %1963 = vrot.lane.b32.xlu0 %v1140, 32
  %v1964 = vpop.permute.xlu0 %1963
  %1965 = vrot.lane.b32.xlu0 %v1141, 32
  %v1966 = vpop.permute.xlu0 %1965
  %1967 = vrot.lane.b32.xlu0 %v1142, 32
  %v1968 = vpop.permute.xlu0 %1967
  %1969 = vrot.lane.b32.xlu0 %v1143, 32
  %v1970 = vpop.permute.xlu0 %1969
  %1971 = vrot.lane.b32.xlu0 %v1144, 32
  %v1972 = vpop.permute.xlu0 %1971
  %1973 = vrot.lane.b32.xlu0 %v1145, 32
  %v1974 = vpop.permute.xlu0 %1973
  %vm1975 = vcmask 261120
  %v1976 = vsel %vm1975, %v1962, %v1964
  %v1977 = vsel %vm1975, %v1964, %v1966
  %v1978 = vsel %vm1975, %v1966, %v1968
  %v1979 = vsel %vm1975, %v1968, %v1970
  %v1980 = vsel %vm1975, %v1970, %v1972
  %v1981 = vsel %vm1975, %v1972, %v1974
  %v1989 = vsel %vm1199, %v1959, 0
  %v1992 = vsel %vm1199, %v1960, 0
  %1994 = vmatpush.bf16.msra.mxu0 0
  %1995 = vmatpush.bf16.msra.mxu0 0
  %1996 = vmatpush.bf16.msra.mxu0 0
  %1997 = vmatpush.bf16.msra.mxu0 0
  %1998 = vmatpush.bf16.msra.mxu0 0
  %1999 = vmatpush.bf16.msra.mxu0 0
  %2000 = vmatpush.bf16.msra.mxu0 0
  %2001 = vmatpush.bf16.msra.mxu0 %v1976
  %2002 = vmatmul.bf16.gmra.mxu0 %v1989
  %v2003 = vpop.f32.mrf.mxu0
  %v2004 = vadd.f32 0.0, %v2003
  %v2005 = vpop.f32.mrf.mxu0
  %v2006 = vadd.f32 0.0, %v2005
  %2007 = vmatmul.bf16.gmra.mxu0 %v1992
  %v2008 = vpop.f32.mrf.mxu0
  %v2009 = vadd.f32 0.0, %v2008
  %v2010 = vpop.f32.mrf.mxu0
  %2011 = vdwg.mxu0
  %2012 = vmatpush.bf16.msra.mxu0 0
  %2013 = vmatpush.bf16.msra.mxu0 0
  %2014 = vmatpush.bf16.msra.mxu0 0
  %2015 = vmatpush.bf16.msra.mxu0 0
  %2016 = vmatpush.bf16.msra.mxu0 0
  %2017 = vmatpush.bf16.msra.mxu0 0
  %2018 = vmatpush.bf16.msra.mxu0 0
  %2019 = vmatpush.bf16.msra.mxu0 %v1977
  %2020 = vmatmul.bf16.gmra.mxu0 %v1989
  %v2021 = vpop.f32.mrf.mxu0
  %v2022 = vadd.f32 0.0, %v2021
  %v2023 = vpop.f32.mrf.mxu0
  %v2024 = vadd.f32 0.0, %v2023
  %2025 = vmatmul.bf16.gmra.mxu0 %v1992
  %v2026 = vpop.f32.mrf.mxu0
  %v2027 = vadd.f32 0.0, %v2026
  %v2028 = vpop.f32.mrf.mxu0
  %2029 = vdwg.mxu0
  %2030 = vmatpush.bf16.msra.mxu0 0
  %2031 = vmatpush.bf16.msra.mxu0 0
  %2032 = vmatpush.bf16.msra.mxu0 0
  %2033 = vmatpush.bf16.msra.mxu0 0
  %2034 = vmatpush.bf16.msra.mxu0 0
  %2035 = vmatpush.bf16.msra.mxu0 0
  %2036 = vmatpush.bf16.msra.mxu0 0
  %2037 = vmatpush.bf16.msra.mxu0 %v1978
  %2038 = vmatmul.bf16.gmra.mxu0 %v1989
  %v2039 = vpop.f32.mrf.mxu0
  %v2040 = vadd.f32 0.0, %v2039
  %v2041 = vpop.f32.mrf.mxu0
  %v2042 = vadd.f32 0.0, %v2041
  %2043 = vmatmul.bf16.gmra.mxu0 %v1992
  %v2044 = vpop.f32.mrf.mxu0
  %v2045 = vadd.f32 0.0, %v2044
  %v2046 = vpop.f32.mrf.mxu0
  %2047 = vdwg.mxu0
  %2048 = vmatpush.bf16.msra.mxu0 0
  %2049 = vmatpush.bf16.msra.mxu0 0
  %2050 = vmatpush.bf16.msra.mxu0 0
  %2051 = vmatpush.bf16.msra.mxu0 0
  %2052 = vmatpush.bf16.msra.mxu0 0
  %2053 = vmatpush.bf16.msra.mxu0 0
  %2054 = vmatpush.bf16.msra.mxu0 0
  %2055 = vmatpush.bf16.msra.mxu0 %v1979
  %2056 = vmatmul.bf16.gmra.mxu0 %v1989
  %v2057 = vpop.f32.mrf.mxu0
  %v2058 = vadd.f32 0.0, %v2057
  %v2059 = vpop.f32.mrf.mxu0
  %v2060 = vadd.f32 0.0, %v2059
  %2061 = vmatmul.bf16.gmra.mxu0 %v1992
  %v2062 = vpop.f32.mrf.mxu0
  %v2063 = vadd.f32 0.0, %v2062
  %v2064 = vpop.f32.mrf.mxu0
  %2065 = vdwg.mxu0
  %2066 = vmatpush.bf16.msra.mxu0 0
  %2067 = vmatpush.bf16.msra.mxu0 0
  %2068 = vmatpush.bf16.msra.mxu0 0
  %2069 = vmatpush.bf16.msra.mxu0 0
  %2070 = vmatpush.bf16.msra.mxu0 0
  %2071 = vmatpush.bf16.msra.mxu0 0
  %2072 = vmatpush.bf16.msra.mxu0 0
  %2073 = vmatpush.bf16.msra.mxu0 %v1980
  %2074 = vmatmul.bf16.gmra.mxu0 %v1989
  %v2075 = vpop.f32.mrf.mxu0
  %v2076 = vadd.f32 0.0, %v2075
  %v2077 = vpop.f32.mrf.mxu0
  %v2078 = vadd.f32 0.0, %v2077
  %2079 = vmatmul.bf16.gmra.mxu0 %v1992
  %v2080 = vpop.f32.mrf.mxu0
  %v2081 = vadd.f32 0.0, %v2080
  %v2082 = vpop.f32.mrf.mxu0
  %2083 = vdwg.mxu0
  %2084 = vmatpush.bf16.msra.mxu0 0
  %2085 = vmatpush.bf16.msra.mxu0 0
  %2086 = vmatpush.bf16.msra.mxu0 0
  %2087 = vmatpush.bf16.msra.mxu0 0
  %2088 = vmatpush.bf16.msra.mxu0 0
  %2089 = vmatpush.bf16.msra.mxu0 0
  %2090 = vmatpush.bf16.msra.mxu0 0
  %2091 = vmatpush.bf16.msra.mxu0 %v1981
  %2092 = vmatmul.bf16.gmra.mxu0 %v1989
  %v2093 = vpop.f32.mrf.mxu0
  %v2094 = vadd.f32 0.0, %v2093
  %v2095 = vpop.f32.mrf.mxu0
  %v2096 = vadd.f32 0.0, %v2095
  %2097 = vmatmul.bf16.gmra.mxu0 %v1992
  %v2098 = vpop.f32.mrf.mxu0
  %v2099 = vadd.f32 0.0, %v2098
  %v2100 = vpop.f32.mrf.mxu0
  %2101 = vdwg.mxu0
  %v2102 = vadd.f32 %v1931, %v2004
  %v2103 = vadd.f32 %v1932, %v2022
  %v2104 = vadd.f32 %v1933, %v2040
  %v2105 = vadd.f32 %v1934, %v2058
  %v2106 = vadd.f32 %v1935, %v2076
  %v2107 = vadd.f32 %v1936, %v2094
  %v2108 = vadd.f32 %v1937, %v2006
  %v2109 = vadd.f32 %v1938, %v2024
  %v2110 = vadd.f32 %v1939, %v2042
  %v2111 = vadd.f32 %v1940, %v2060
  %v2112 = vadd.f32 %v1941, %v2078
  %v2113 = vadd.f32 %v1942, %v2096
  %v2114 = vadd.f32 %v1943, %v2009
  %v2115 = vadd.f32 %v1944, %v2027
  %v2116 = vadd.f32 %v1945, %v2045
  %v2117 = vadd.f32 %v1946, %v2063
  %v2118 = vadd.f32 %v1947, %v2081
  %v2119 = vadd.f32 %v1948, %v2099
  %s2120 = scalar_lea.vmem %s3, 72
  %v2121 = vld [vmem:[%s2120] sm:$0xf]
  %v2122 = vld [vmem:[%s2120 + $0x4] sm:$0xf]
  %v2123 = vld [vmem:[%s2120 + $0x8] sm:$0xf]
  %v2127 = vunpack.c.l.b16 %v2121
  %v2128 = vunpack.c.l.b16 %v2122
  %v2129 = vunpack.c.l.b16 %v2123
  %v2130 = vpack.c.b16 %v2128, %v2127
  %v2131 = vpack.c.b16 %v2129, %v2129
  %2132 = vrot.lane.b32.xlu0 %v1139, 24
  %v2133 = vpop.permute.xlu0 %2132
  %2134 = vrot.lane.b32.xlu0 %v1140, 24
  %v2135 = vpop.permute.xlu0 %2134
  %2136 = vrot.lane.b32.xlu0 %v1141, 24
  %v2137 = vpop.permute.xlu0 %2136
  %2138 = vrot.lane.b32.xlu0 %v1142, 24
  %v2139 = vpop.permute.xlu0 %2138
  %2140 = vrot.lane.b32.xlu0 %v1143, 24
  %v2141 = vpop.permute.xlu0 %2140
  %2142 = vrot.lane.b32.xlu0 %v1144, 24
  %v2143 = vpop.permute.xlu0 %2142
  %2144 = vrot.lane.b32.xlu0 %v1145, 24
  %v2145 = vpop.permute.xlu0 %2144
  %vm2146 = vcmask 195584
  %v2147 = vsel %vm2146, %v2133, %v2135
  %v2148 = vsel %vm2146, %v2135, %v2137
  %v2149 = vsel %vm2146, %v2137, %v2139
  %v2150 = vsel %vm2146, %v2139, %v2141
  %v2151 = vsel %vm2146, %v2141, %v2143
  %v2152 = vsel %vm2146, %v2143, %v2145
  %v2160 = vsel %vm1199, %v2130, 0
  %v2163 = vsel %vm1199, %v2131, 0
  %2165 = vmatpush.bf16.msra.mxu0 0
  %2166 = vmatpush.bf16.msra.mxu0 0
  %2167 = vmatpush.bf16.msra.mxu0 0
  %2168 = vmatpush.bf16.msra.mxu0 0
  %2169 = vmatpush.bf16.msra.mxu0 0
  %2170 = vmatpush.bf16.msra.mxu0 0
  %2171 = vmatpush.bf16.msra.mxu0 0
  %2172 = vmatpush.bf16.msra.mxu0 %v2147
  %2173 = vmatmul.bf16.gmra.mxu0 %v2160
  %v2174 = vpop.f32.mrf.mxu0
  %v2175 = vadd.f32 0.0, %v2174
  %v2176 = vpop.f32.mrf.mxu0
  %v2177 = vadd.f32 0.0, %v2176
  %2178 = vmatmul.bf16.gmra.mxu0 %v2163
  %v2179 = vpop.f32.mrf.mxu0
  %v2180 = vadd.f32 0.0, %v2179
  %v2181 = vpop.f32.mrf.mxu0
  %2182 = vdwg.mxu0
  %2183 = vmatpush.bf16.msra.mxu0 0
  %2184 = vmatpush.bf16.msra.mxu0 0
  %2185 = vmatpush.bf16.msra.mxu0 0
  %2186 = vmatpush.bf16.msra.mxu0 0
  %2187 = vmatpush.bf16.msra.mxu0 0
  %2188 = vmatpush.bf16.msra.mxu0 0
  %2189 = vmatpush.bf16.msra.mxu0 0
  %2190 = vmatpush.bf16.msra.mxu0 %v2148
  %2191 = vmatmul.bf16.gmra.mxu0 %v2160
  %v2192 = vpop.f32.mrf.mxu0
  %v2193 = vadd.f32 0.0, %v2192
  %v2194 = vpop.f32.mrf.mxu0
  %v2195 = vadd.f32 0.0, %v2194
  %2196 = vmatmul.bf16.gmra.mxu0 %v2163
  %v2197 = vpop.f32.mrf.mxu0
  %v2198 = vadd.f32 0.0, %v2197
  %v2199 = vpop.f32.mrf.mxu0
  %2200 = vdwg.mxu0
  %2201 = vmatpush.bf16.msra.mxu0 0
  %2202 = vmatpush.bf16.msra.mxu0 0
  %2203 = vmatpush.bf16.msra.mxu0 0
  %2204 = vmatpush.bf16.msra.mxu0 0
  %2205 = vmatpush.bf16.msra.mxu0 0
  %2206 = vmatpush.bf16.msra.mxu0 0
  %2207 = vmatpush.bf16.msra.mxu0 0
  %2208 = vmatpush.bf16.msra.mxu0 %v2149
  %2209 = vmatmul.bf16.gmra.mxu0 %v2160
  %v2210 = vpop.f32.mrf.mxu0
  %v2211 = vadd.f32 0.0, %v2210
  %v2212 = vpop.f32.mrf.mxu0
  %v2213 = vadd.f32 0.0, %v2212
  %2214 = vmatmul.bf16.gmra.mxu0 %v2163
  %v2215 = vpop.f32.mrf.mxu0
  %v2216 = vadd.f32 0.0, %v2215
  %v2217 = vpop.f32.mrf.mxu0
  %2218 = vdwg.mxu0
  %2219 = vmatpush.bf16.msra.mxu0 0
  %2220 = vmatpush.bf16.msra.mxu0 0
  %2221 = vmatpush.bf16.msra.mxu0 0
  %2222 = vmatpush.bf16.msra.mxu0 0
  %2223 = vmatpush.bf16.msra.mxu0 0
  %2224 = vmatpush.bf16.msra.mxu0 0
  %2225 = vmatpush.bf16.msra.mxu0 0
  %2226 = vmatpush.bf16.msra.mxu0 %v2150
  %2227 = vmatmul.bf16.gmra.mxu0 %v2160
  %v2228 = vpop.f32.mrf.mxu0
  %v2229 = vadd.f32 0.0, %v2228
  %v2230 = vpop.f32.mrf.mxu0
  %v2231 = vadd.f32 0.0, %v2230
  %2232 = vmatmul.bf16.gmra.mxu0 %v2163
  %v2233 = vpop.f32.mrf.mxu0
  %v2234 = vadd.f32 0.0, %v2233
  %v2235 = vpop.f32.mrf.mxu0
  %2236 = vdwg.mxu0
  %2237 = vmatpush.bf16.msra.mxu0 0
  %2238 = vmatpush.bf16.msra.mxu0 0
  %2239 = vmatpush.bf16.msra.mxu0 0
  %2240 = vmatpush.bf16.msra.mxu0 0
  %2241 = vmatpush.bf16.msra.mxu0 0
  %2242 = vmatpush.bf16.msra.mxu0 0
  %2243 = vmatpush.bf16.msra.mxu0 0
  %2244 = vmatpush.bf16.msra.mxu0 %v2151
  %2245 = vmatmul.bf16.gmra.mxu0 %v2160
  %v2246 = vpop.f32.mrf.mxu0
  %v2247 = vadd.f32 0.0, %v2246
  %v2248 = vpop.f32.mrf.mxu0
  %v2249 = vadd.f32 0.0, %v2248
  %2250 = vmatmul.bf16.gmra.mxu0 %v2163
  %v2251 = vpop.f32.mrf.mxu0
  %v2252 = vadd.f32 0.0, %v2251
  %v2253 = vpop.f32.mrf.mxu0
  %2254 = vdwg.mxu0
  %2255 = vmatpush.bf16.msra.mxu0 0
  %2256 = vmatpush.bf16.msra.mxu0 0
  %2257 = vmatpush.bf16.msra.mxu0 0
  %2258 = vmatpush.bf16.msra.mxu0 0
  %2259 = vmatpush.bf16.msra.mxu0 0
  %2260 = vmatpush.bf16.msra.mxu0 0
  %2261 = vmatpush.bf16.msra.mxu0 0
  %2262 = vmatpush.bf16.msra.mxu0 %v2152
  %2263 = vmatmul.bf16.gmra.mxu0 %v2160
  %v2264 = vpop.f32.mrf.mxu0
  %v2265 = vadd.f32 0.0, %v2264
  %v2266 = vpop.f32.mrf.mxu0
  %v2267 = vadd.f32 0.0, %v2266
  %2268 = vmatmul.bf16.gmra.mxu0 %v2163
  %v2269 = vpop.f32.mrf.mxu0
  %v2270 = vadd.f32 0.0, %v2269
  %v2271 = vpop.f32.mrf.mxu0
  %2272 = vdwg.mxu0
  %v2273 = vadd.f32 %v2102, %v2175
  %v2274 = vadd.f32 %v2103, %v2193
  %v2275 = vadd.f32 %v2104, %v2211
  %v2276 = vadd.f32 %v2105, %v2229
  %v2277 = vadd.f32 %v2106, %v2247
  %v2278 = vadd.f32 %v2107, %v2265
  %v2279 = vadd.f32 %v2108, %v2177
  %v2280 = vadd.f32 %v2109, %v2195
  %v2281 = vadd.f32 %v2110, %v2213
  %v2282 = vadd.f32 %v2111, %v2231
  %v2283 = vadd.f32 %v2112, %v2249
  %v2284 = vadd.f32 %v2113, %v2267
  %v2285 = vadd.f32 %v2114, %v2180
  %v2286 = vadd.f32 %v2115, %v2198
  %v2287 = vadd.f32 %v2116, %v2216
  %v2288 = vadd.f32 %v2117, %v2234
  %v2289 = vadd.f32 %v2118, %v2252
  %v2290 = vadd.f32 %v2119, %v2270
  %s2291 = scalar_lea.vmem %s3, 84
  %v2292 = vld [vmem:[%s2291] sm:$0xf]
  %v2293 = vld [vmem:[%s2291 + $0x4] sm:$0xf]
  %v2294 = vld [vmem:[%s2291 + $0x8] sm:$0xf]
  %v2298 = vunpack.c.l.b16 %v2292
  %v2299 = vunpack.c.l.b16 %v2293
  %v2300 = vunpack.c.l.b16 %v2294
  %v2301 = vpack.c.b16 %v2299, %v2298
  %v2302 = vpack.c.b16 %v2300, %v2300
  %2303 = vrot.lane.b32.xlu0 %v1139, 16
  %v2304 = vpop.permute.xlu0 %2303
  %2305 = vrot.lane.b32.xlu0 %v1140, 16
  %v2306 = vpop.permute.xlu0 %2305
  %2307 = vrot.lane.b32.xlu0 %v1141, 16
  %v2308 = vpop.permute.xlu0 %2307
  %2309 = vrot.lane.b32.xlu0 %v1142, 16
  %v2310 = vpop.permute.xlu0 %2309
  %2311 = vrot.lane.b32.xlu0 %v1143, 16
  %v2312 = vpop.permute.xlu0 %2311
  %2313 = vrot.lane.b32.xlu0 %v1144, 16
  %v2314 = vpop.permute.xlu0 %2313
  %2315 = vrot.lane.b32.xlu0 %v1145, 16
  %v2316 = vpop.permute.xlu0 %2315
  %vm2317 = vcmask 130048
  %v2318 = vsel %vm2317, %v2304, %v2306
  %v2319 = vsel %vm2317, %v2306, %v2308
  %v2320 = vsel %vm2317, %v2308, %v2310
  %v2321 = vsel %vm2317, %v2310, %v2312
  %v2322 = vsel %vm2317, %v2312, %v2314
  %v2323 = vsel %vm2317, %v2314, %v2316
  %v2331 = vsel %vm1199, %v2301, 0
  %v2334 = vsel %vm1199, %v2302, 0
  %2336 = vmatpush.bf16.msra.mxu0 0
  %2337 = vmatpush.bf16.msra.mxu0 0
  %2338 = vmatpush.bf16.msra.mxu0 0
  %2339 = vmatpush.bf16.msra.mxu0 0
  %2340 = vmatpush.bf16.msra.mxu0 0
  %2341 = vmatpush.bf16.msra.mxu0 0
  %2342 = vmatpush.bf16.msra.mxu0 0
  %2343 = vmatpush.bf16.msra.mxu0 %v2318
  %2344 = vmatmul.bf16.gmra.mxu0 %v2331
  %v2345 = vpop.f32.mrf.mxu0
  %v2346 = vadd.f32 0.0, %v2345
  %v2347 = vpop.f32.mrf.mxu0
  %v2348 = vadd.f32 0.0, %v2347
  %2349 = vmatmul.bf16.gmra.mxu0 %v2334
  %v2350 = vpop.f32.mrf.mxu0
  %v2351 = vadd.f32 0.0, %v2350
  %v2352 = vpop.f32.mrf.mxu0
  %2353 = vdwg.mxu0
  %2354 = vmatpush.bf16.msra.mxu0 0
  %2355 = vmatpush.bf16.msra.mxu0 0
  %2356 = vmatpush.bf16.msra.mxu0 0
  %2357 = vmatpush.bf16.msra.mxu0 0
  %2358 = vmatpush.bf16.msra.mxu0 0
  %2359 = vmatpush.bf16.msra.mxu0 0
  %2360 = vmatpush.bf16.msra.mxu0 0
  %2361 = vmatpush.bf16.msra.mxu0 %v2319
  %2362 = vmatmul.bf16.gmra.mxu0 %v2331
  %v2363 = vpop.f32.mrf.mxu0
  %v2364 = vadd.f32 0.0, %v2363
  %v2365 = vpop.f32.mrf.mxu0
  %v2366 = vadd.f32 0.0, %v2365
  %2367 = vmatmul.bf16.gmra.mxu0 %v2334
  %v2368 = vpop.f32.mrf.mxu0
  %v2369 = vadd.f32 0.0, %v2368
  %v2370 = vpop.f32.mrf.mxu0
  %2371 = vdwg.mxu0
  %2372 = vmatpush.bf16.msra.mxu0 0
  %2373 = vmatpush.bf16.msra.mxu0 0
  %2374 = vmatpush.bf16.msra.mxu0 0
  %2375 = vmatpush.bf16.msra.mxu0 0
  %2376 = vmatpush.bf16.msra.mxu0 0
  %2377 = vmatpush.bf16.msra.mxu0 0
  %2378 = vmatpush.bf16.msra.mxu0 0
  %2379 = vmatpush.bf16.msra.mxu0 %v2320
  %2380 = vmatmul.bf16.gmra.mxu0 %v2331
  %v2381 = vpop.f32.mrf.mxu0
  %v2382 = vadd.f32 0.0, %v2381
  %v2383 = vpop.f32.mrf.mxu0
  %v2384 = vadd.f32 0.0, %v2383
  %2385 = vmatmul.bf16.gmra.mxu0 %v2334
  %v2386 = vpop.f32.mrf.mxu0
  %v2387 = vadd.f32 0.0, %v2386
  %v2388 = vpop.f32.mrf.mxu0
  %2389 = vdwg.mxu0
  %2390 = vmatpush.bf16.msra.mxu0 0
  %2391 = vmatpush.bf16.msra.mxu0 0
  %2392 = vmatpush.bf16.msra.mxu0 0
  %2393 = vmatpush.bf16.msra.mxu0 0
  %2394 = vmatpush.bf16.msra.mxu0 0
  %2395 = vmatpush.bf16.msra.mxu0 0
  %2396 = vmatpush.bf16.msra.mxu0 0
  %2397 = vmatpush.bf16.msra.mxu0 %v2321
  %2398 = vmatmul.bf16.gmra.mxu0 %v2331
  %v2399 = vpop.f32.mrf.mxu0
  %v2400 = vadd.f32 0.0, %v2399
  %v2401 = vpop.f32.mrf.mxu0
  %v2402 = vadd.f32 0.0, %v2401
  %2403 = vmatmul.bf16.gmra.mxu0 %v2334
  %v2404 = vpop.f32.mrf.mxu0
  %v2405 = vadd.f32 0.0, %v2404
  %v2406 = vpop.f32.mrf.mxu0
  %2407 = vdwg.mxu0
  %2408 = vmatpush.bf16.msra.mxu0 0
  %2409 = vmatpush.bf16.msra.mxu0 0
  %2410 = vmatpush.bf16.msra.mxu0 0
  %2411 = vmatpush.bf16.msra.mxu0 0
  %2412 = vmatpush.bf16.msra.mxu0 0
  %2413 = vmatpush.bf16.msra.mxu0 0
  %2414 = vmatpush.bf16.msra.mxu0 0
  %2415 = vmatpush.bf16.msra.mxu0 %v2322
  %2416 = vmatmul.bf16.gmra.mxu0 %v2331
  %v2417 = vpop.f32.mrf.mxu0
  %v2418 = vadd.f32 0.0, %v2417
  %v2419 = vpop.f32.mrf.mxu0
  %v2420 = vadd.f32 0.0, %v2419
  %2421 = vmatmul.bf16.gmra.mxu0 %v2334
  %v2422 = vpop.f32.mrf.mxu0
  %v2423 = vadd.f32 0.0, %v2422
  %v2424 = vpop.f32.mrf.mxu0
  %2425 = vdwg.mxu0
  %2426 = vmatpush.bf16.msra.mxu0 0
  %2427 = vmatpush.bf16.msra.mxu0 0
  %2428 = vmatpush.bf16.msra.mxu0 0
  %2429 = vmatpush.bf16.msra.mxu0 0
  %2430 = vmatpush.bf16.msra.mxu0 0
  %2431 = vmatpush.bf16.msra.mxu0 0
  %2432 = vmatpush.bf16.msra.mxu0 0
  %2433 = vmatpush.bf16.msra.mxu0 %v2323
  %2434 = vmatmul.bf16.gmra.mxu0 %v2331
  %v2435 = vpop.f32.mrf.mxu0
  %v2436 = vadd.f32 0.0, %v2435
  %v2437 = vpop.f32.mrf.mxu0
  %v2438 = vadd.f32 0.0, %v2437
  %2439 = vmatmul.bf16.gmra.mxu0 %v2334
  %v2440 = vpop.f32.mrf.mxu0
  %v2441 = vadd.f32 0.0, %v2440
  %v2442 = vpop.f32.mrf.mxu0
  %2443 = vdwg.mxu0
  %v2444 = vadd.f32 %v2273, %v2346
  %v2445 = vadd.f32 %v2274, %v2364
  %v2446 = vadd.f32 %v2275, %v2382
  %v2447 = vadd.f32 %v2276, %v2400
  %v2448 = vadd.f32 %v2277, %v2418
  %v2449 = vadd.f32 %v2278, %v2436
  %v2450 = vadd.f32 %v2279, %v2348
  %v2451 = vadd.f32 %v2280, %v2366
  %v2452 = vadd.f32 %v2281, %v2384
  %v2453 = vadd.f32 %v2282, %v2402
  %v2454 = vadd.f32 %v2283, %v2420
  %v2455 = vadd.f32 %v2284, %v2438
  %v2456 = vadd.f32 %v2285, %v2351
  %v2457 = vadd.f32 %v2286, %v2369
  %v2458 = vadd.f32 %v2287, %v2387
  %v2459 = vadd.f32 %v2288, %v2405
  %v2460 = vadd.f32 %v2289, %v2423
  %v2461 = vadd.f32 %v2290, %v2441
  %s2462 = scalar_lea.vmem %s3, 96
  %v2463 = vld [vmem:[%s2462] sm:$0xf]
  %v2464 = vld [vmem:[%s2462 + $0x4] sm:$0xf]
  %v2465 = vld [vmem:[%s2462 + $0x8] sm:$0xf]
  %v2469 = vunpack.c.l.b16 %v2463
  %v2470 = vunpack.c.l.b16 %v2464
  %v2471 = vunpack.c.l.b16 %v2465
  %v2472 = vpack.c.b16 %v2470, %v2469
  %v2473 = vpack.c.b16 %v2471, %v2471
  %2474 = vrot.lane.b32.xlu0 %v1139, 8
  %v2475 = vpop.permute.xlu0 %2474
  %2476 = vrot.lane.b32.xlu0 %v1140, 8
  %v2477 = vpop.permute.xlu0 %2476
  %2478 = vrot.lane.b32.xlu0 %v1141, 8
  %v2479 = vpop.permute.xlu0 %2478
  %2480 = vrot.lane.b32.xlu0 %v1142, 8
  %v2481 = vpop.permute.xlu0 %2480
  %2482 = vrot.lane.b32.xlu0 %v1143, 8
  %v2483 = vpop.permute.xlu0 %2482
  %2484 = vrot.lane.b32.xlu0 %v1144, 8
  %v2485 = vpop.permute.xlu0 %2484
  %2486 = vrot.lane.b32.xlu0 %v1145, 8
  %v2487 = vpop.permute.xlu0 %2486
  %vm2488 = vcmask 64512
  %v2489 = vsel %vm2488, %v2475, %v2477
  %v2490 = vsel %vm2488, %v2477, %v2479
  %v2491 = vsel %vm2488, %v2479, %v2481
  %v2492 = vsel %vm2488, %v2481, %v2483
  %v2493 = vsel %vm2488, %v2483, %v2485
  %v2494 = vsel %vm2488, %v2485, %v2487
  %v2502 = vsel %vm1199, %v2472, 0
  %v2505 = vsel %vm1199, %v2473, 0
  %2507 = vmatpush.bf16.msra.mxu0 0
  %2508 = vmatpush.bf16.msra.mxu0 0
  %2509 = vmatpush.bf16.msra.mxu0 0
  %2510 = vmatpush.bf16.msra.mxu0 0
  %2511 = vmatpush.bf16.msra.mxu0 0
  %2512 = vmatpush.bf16.msra.mxu0 0
  %2513 = vmatpush.bf16.msra.mxu0 0
  %2514 = vmatpush.bf16.msra.mxu0 %v2489
  %2515 = vmatmul.bf16.gmra.mxu0 %v2502
  %v2516 = vpop.f32.mrf.mxu0
  %v2517 = vadd.f32 0.0, %v2516
  %v2518 = vpop.f32.mrf.mxu0
  %v2519 = vadd.f32 0.0, %v2518
  %2520 = vmatmul.bf16.gmra.mxu0 %v2505
  %v2521 = vpop.f32.mrf.mxu0
  %v2522 = vadd.f32 0.0, %v2521
  %v2523 = vpop.f32.mrf.mxu0
  %2524 = vdwg.mxu0
  %2525 = vmatpush.bf16.msra.mxu0 0
  %2526 = vmatpush.bf16.msra.mxu0 0
  %2527 = vmatpush.bf16.msra.mxu0 0
  %2528 = vmatpush.bf16.msra.mxu0 0
  %2529 = vmatpush.bf16.msra.mxu0 0
  %2530 = vmatpush.bf16.msra.mxu0 0
  %2531 = vmatpush.bf16.msra.mxu0 0
  %2532 = vmatpush.bf16.msra.mxu0 %v2490
  %2533 = vmatmul.bf16.gmra.mxu0 %v2502
  %v2534 = vpop.f32.mrf.mxu0
  %v2535 = vadd.f32 0.0, %v2534
  %v2536 = vpop.f32.mrf.mxu0
  %v2537 = vadd.f32 0.0, %v2536
  %2538 = vmatmul.bf16.gmra.mxu0 %v2505
  %v2539 = vpop.f32.mrf.mxu0
  %v2540 = vadd.f32 0.0, %v2539
  %v2541 = vpop.f32.mrf.mxu0
  %2542 = vdwg.mxu0
  %2543 = vmatpush.bf16.msra.mxu0 0
  %2544 = vmatpush.bf16.msra.mxu0 0
  %2545 = vmatpush.bf16.msra.mxu0 0
  %2546 = vmatpush.bf16.msra.mxu0 0
  %2547 = vmatpush.bf16.msra.mxu0 0
  %2548 = vmatpush.bf16.msra.mxu0 0
  %2549 = vmatpush.bf16.msra.mxu0 0
  %2550 = vmatpush.bf16.msra.mxu0 %v2491
  %2551 = vmatmul.bf16.gmra.mxu0 %v2502
  %v2552 = vpop.f32.mrf.mxu0
  %v2553 = vadd.f32 0.0, %v2552
  %v2554 = vpop.f32.mrf.mxu0
  %v2555 = vadd.f32 0.0, %v2554
  %2556 = vmatmul.bf16.gmra.mxu0 %v2505
  %v2557 = vpop.f32.mrf.mxu0
  %v2558 = vadd.f32 0.0, %v2557
  %v2559 = vpop.f32.mrf.mxu0
  %2560 = vdwg.mxu0
  %2561 = vmatpush.bf16.msra.mxu0 0
  %2562 = vmatpush.bf16.msra.mxu0 0
  %2563 = vmatpush.bf16.msra.mxu0 0
  %2564 = vmatpush.bf16.msra.mxu0 0
  %2565 = vmatpush.bf16.msra.mxu0 0
  %2566 = vmatpush.bf16.msra.mxu0 0
  %2567 = vmatpush.bf16.msra.mxu0 0
  %2568 = vmatpush.bf16.msra.mxu0 %v2492
  %2569 = vmatmul.bf16.gmra.mxu0 %v2502
  %v2570 = vpop.f32.mrf.mxu0
  %v2571 = vadd.f32 0.0, %v2570
  %v2572 = vpop.f32.mrf.mxu0
  %v2573 = vadd.f32 0.0, %v2572
  %2574 = vmatmul.bf16.gmra.mxu0 %v2505
  %v2575 = vpop.f32.mrf.mxu0
  %v2576 = vadd.f32 0.0, %v2575
  %v2577 = vpop.f32.mrf.mxu0
  %2578 = vdwg.mxu0
  %2579 = vmatpush.bf16.msra.mxu0 0
  %2580 = vmatpush.bf16.msra.mxu0 0
  %2581 = vmatpush.bf16.msra.mxu0 0
  %2582 = vmatpush.bf16.msra.mxu0 0
  %2583 = vmatpush.bf16.msra.mxu0 0
  %2584 = vmatpush.bf16.msra.mxu0 0
  %2585 = vmatpush.bf16.msra.mxu0 0
  %2586 = vmatpush.bf16.msra.mxu0 %v2493
  %2587 = vmatmul.bf16.gmra.mxu0 %v2502
  %v2588 = vpop.f32.mrf.mxu0
  %v2589 = vadd.f32 0.0, %v2588
  %v2590 = vpop.f32.mrf.mxu0
  %v2591 = vadd.f32 0.0, %v2590
  %2592 = vmatmul.bf16.gmra.mxu0 %v2505
  %v2593 = vpop.f32.mrf.mxu0
  %v2594 = vadd.f32 0.0, %v2593
  %v2595 = vpop.f32.mrf.mxu0
  %2596 = vdwg.mxu0
  %2597 = vmatpush.bf16.msra.mxu0 0
  %2598 = vmatpush.bf16.msra.mxu0 0
  %2599 = vmatpush.bf16.msra.mxu0 0
  %2600 = vmatpush.bf16.msra.mxu0 0
  %2601 = vmatpush.bf16.msra.mxu0 0
  %2602 = vmatpush.bf16.msra.mxu0 0
  %2603 = vmatpush.bf16.msra.mxu0 0
  %2604 = vmatpush.bf16.msra.mxu0 %v2494
  %2605 = vmatmul.bf16.gmra.mxu0 %v2502
  %v2606 = vpop.f32.mrf.mxu0
  %v2607 = vadd.f32 0.0, %v2606
  %v2608 = vpop.f32.mrf.mxu0
  %v2609 = vadd.f32 0.0, %v2608
  %2610 = vmatmul.bf16.gmra.mxu0 %v2505
  %v2611 = vpop.f32.mrf.mxu0
  %v2612 = vadd.f32 0.0, %v2611
  %v2613 = vpop.f32.mrf.mxu0
  %2614 = vdwg.mxu0
  %v2615 = vadd.f32 %v2444, %v2517
  %v2616 = vadd.f32 %v2445, %v2535
  %v2617 = vadd.f32 %v2446, %v2553
  %v2618 = vadd.f32 %v2447, %v2571
  %v2619 = vadd.f32 %v2448, %v2589
  %v2620 = vadd.f32 %v2449, %v2607
  %v2621 = vadd.f32 %v2450, %v2519
  %v2622 = vadd.f32 %v2451, %v2537
  %v2623 = vadd.f32 %v2452, %v2555
  %v2624 = vadd.f32 %v2453, %v2573
  %v2625 = vadd.f32 %v2454, %v2591
  %v2626 = vadd.f32 %v2455, %v2609
  %v2627 = vadd.f32 %v2456, %v2522
  %v2628 = vadd.f32 %v2457, %v2540
  %v2629 = vadd.f32 %v2458, %v2558
  %v2630 = vadd.f32 %v2459, %v2576
  %v2631 = vadd.f32 %v2460, %v2594
  %v2632 = vadd.f32 %v2461, %v2612
  %s2633 = scalar_lea.vmem %s3, 108
  %v2634 = vld [vmem:[%s2633] sm:$0xf]
  %v2635 = vld [vmem:[%s2633 + $0x4] sm:$0xf]
  %v2636 = vld [vmem:[%s2633 + $0x8] sm:$0xf]
  %v2640 = vunpack.c.l.b16 %v2634
  %v2641 = vunpack.c.l.b16 %v2635
  %v2642 = vunpack.c.l.b16 %v2636
  %v2643 = vpack.c.b16 %v2641, %v2640
  %v2644 = vpack.c.b16 %v2642, %v2642
  %v2646 = vsel %vm1199, %v2643, 0
  %v2649 = vsel %vm1199, %v2644, 0
  %2651 = vmatpush.bf16.msra.mxu0 0
  %2652 = vmatpush.bf16.msra.mxu0 0
  %2653 = vmatpush.bf16.msra.mxu0 0
  %2654 = vmatpush.bf16.msra.mxu0 0
  %2655 = vmatpush.bf16.msra.mxu0 0
  %2656 = vmatpush.bf16.msra.mxu0 0
  %2657 = vmatpush.bf16.msra.mxu0 0
  %2658 = vmatpush.bf16.msra.mxu0 %v1140
  %2659 = vmatmul.bf16.gmra.mxu0 %v2646
  %v2660 = vpop.f32.mrf.mxu0
  %v2661 = vadd.f32 0.0, %v2660
  %v2662 = vpop.f32.mrf.mxu0
  %v2663 = vadd.f32 0.0, %v2662
  %2664 = vmatmul.bf16.gmra.mxu0 %v2649
  %v2665 = vpop.f32.mrf.mxu0
  %v2666 = vadd.f32 0.0, %v2665
  %v2667 = vpop.f32.mrf.mxu0
  %2668 = vdwg.mxu0
  %2669 = vmatpush.bf16.msra.mxu0 0
  %2670 = vmatpush.bf16.msra.mxu0 0
  %2671 = vmatpush.bf16.msra.mxu0 0
  %2672 = vmatpush.bf16.msra.mxu0 0
  %2673 = vmatpush.bf16.msra.mxu0 0
  %2674 = vmatpush.bf16.msra.mxu0 0
  %2675 = vmatpush.bf16.msra.mxu0 0
  %2676 = vmatpush.bf16.msra.mxu0 %v1141
  %2677 = vmatmul.bf16.gmra.mxu0 %v2646
  %v2678 = vpop.f32.mrf.mxu0
  %v2679 = vadd.f32 0.0, %v2678
  %v2680 = vpop.f32.mrf.mxu0
  %v2681 = vadd.f32 0.0, %v2680
  %2682 = vmatmul.bf16.gmra.mxu0 %v2649
  %v2683 = vpop.f32.mrf.mxu0
  %v2684 = vadd.f32 0.0, %v2683
  %v2685 = vpop.f32.mrf.mxu0
  %2686 = vdwg.mxu0
  %2687 = vmatpush.bf16.msra.mxu0 0
  %2688 = vmatpush.bf16.msra.mxu0 0
  %2689 = vmatpush.bf16.msra.mxu0 0
  %2690 = vmatpush.bf16.msra.mxu0 0
  %2691 = vmatpush.bf16.msra.mxu0 0
  %2692 = vmatpush.bf16.msra.mxu0 0
  %2693 = vmatpush.bf16.msra.mxu0 0
  %2694 = vmatpush.bf16.msra.mxu0 %v1142
  %2695 = vmatmul.bf16.gmra.mxu0 %v2646
  %v2696 = vpop.f32.mrf.mxu0
  %v2697 = vadd.f32 0.0, %v2696
  %v2698 = vpop.f32.mrf.mxu0
  %v2699 = vadd.f32 0.0, %v2698
  %2700 = vmatmul.bf16.gmra.mxu0 %v2649
  %v2701 = vpop.f32.mrf.mxu0
  %v2702 = vadd.f32 0.0, %v2701
  %v2703 = vpop.f32.mrf.mxu0
  %2704 = vdwg.mxu0
  %2705 = vmatpush.bf16.msra.mxu0 0
  %2706 = vmatpush.bf16.msra.mxu0 0
  %2707 = vmatpush.bf16.msra.mxu0 0
  %2708 = vmatpush.bf16.msra.mxu0 0
  %2709 = vmatpush.bf16.msra.mxu0 0
  %2710 = vmatpush.bf16.msra.mxu0 0
  %2711 = vmatpush.bf16.msra.mxu0 0
  %2712 = vmatpush.bf16.msra.mxu0 %v1143
  %2713 = vmatmul.bf16.gmra.mxu0 %v2646
  %v2714 = vpop.f32.mrf.mxu0
  %v2715 = vadd.f32 0.0, %v2714
  %v2716 = vpop.f32.mrf.mxu0
  %v2717 = vadd.f32 0.0, %v2716
  %2718 = vmatmul.bf16.gmra.mxu0 %v2649
  %v2719 = vpop.f32.mrf.mxu0
  %v2720 = vadd.f32 0.0, %v2719
  %v2721 = vpop.f32.mrf.mxu0
  %2722 = vdwg.mxu0
  %2723 = vmatpush.bf16.msra.mxu0 0
  %2724 = vmatpush.bf16.msra.mxu0 0
  %2725 = vmatpush.bf16.msra.mxu0 0
  %2726 = vmatpush.bf16.msra.mxu0 0
  %2727 = vmatpush.bf16.msra.mxu0 0
  %2728 = vmatpush.bf16.msra.mxu0 0
  %2729 = vmatpush.bf16.msra.mxu0 0
  %2730 = vmatpush.bf16.msra.mxu0 %v1144
  %2731 = vmatmul.bf16.gmra.mxu0 %v2646
  %v2732 = vpop.f32.mrf.mxu0
  %v2733 = vadd.f32 0.0, %v2732
  %v2734 = vpop.f32.mrf.mxu0
  %v2735 = vadd.f32 0.0, %v2734
  %2736 = vmatmul.bf16.gmra.mxu0 %v2649
  %v2737 = vpop.f32.mrf.mxu0
  %v2738 = vadd.f32 0.0, %v2737
  %v2739 = vpop.f32.mrf.mxu0
  %2740 = vdwg.mxu0
  %2741 = vmatpush.bf16.msra.mxu0 0
  %2742 = vmatpush.bf16.msra.mxu0 0
  %2743 = vmatpush.bf16.msra.mxu0 0
  %2744 = vmatpush.bf16.msra.mxu0 0
  %2745 = vmatpush.bf16.msra.mxu0 0
  %2746 = vmatpush.bf16.msra.mxu0 0
  %2747 = vmatpush.bf16.msra.mxu0 0
  %2748 = vmatpush.bf16.msra.mxu0 %v1145
  %2749 = vmatmul.bf16.gmra.mxu0 %v2646
  %v2750 = vpop.f32.mrf.mxu0
  %v2751 = vadd.f32 0.0, %v2750
  %v2752 = vpop.f32.mrf.mxu0
  %v2753 = vadd.f32 0.0, %v2752
  %2754 = vmatmul.bf16.gmra.mxu0 %v2649
  %v2755 = vpop.f32.mrf.mxu0
  %v2756 = vadd.f32 0.0, %v2755
  %v2757 = vpop.f32.mrf.mxu0
  %2758 = vdwg.mxu0
  %v2759 = vadd.f32 %v2615, %v2661
  %v2760 = vadd.f32 %v2616, %v2679
  %v2761 = vadd.f32 %v2617, %v2697
  %v2762 = vadd.f32 %v2618, %v2715
  %v2763 = vadd.f32 %v2619, %v2733
  %v2764 = vadd.f32 %v2620, %v2751
  %v2765 = vadd.f32 %v2621, %v2663
  %v2766 = vadd.f32 %v2622, %v2681
  %v2767 = vadd.f32 %v2623, %v2699
  %v2768 = vadd.f32 %v2624, %v2717
  %v2769 = vadd.f32 %v2625, %v2735
  %v2770 = vadd.f32 %v2626, %v2753
  %v2771 = vadd.f32 %v2627, %v2666
  %v2772 = vadd.f32 %v2628, %v2684
  %v2773 = vadd.f32 %v2629, %v2702
  %v2774 = vadd.f32 %v2630, %v2720
  %v2775 = vadd.f32 %v2631, %v2738
  %v2776 = vadd.f32 %v2632, %v2756
  %s2777 = scalar_lea.vmem %s3, 120
  %v2778 = vld [vmem:[%s2777] sm:$0xf]
  %v2779 = vld [vmem:[%s2777 + $0x4] sm:$0xf]
  %v2780 = vld [vmem:[%s2777 + $0x8] sm:$0xf]
  %v2784 = vunpack.c.l.b16 %v2778
  %v2785 = vunpack.c.l.b16 %v2779
  %v2786 = vunpack.c.l.b16 %v2780
  %v2787 = vpack.c.b16 %v2785, %v2784
  %v2788 = vpack.c.b16 %v2786, %v2786
  %2789 = vrot.lane.b32.xlu0 %v1140, 64
  %v2790 = vpop.permute.xlu0 %2789
  %2791 = vrot.lane.b32.xlu0 %v1141, 64
  %v2792 = vpop.permute.xlu0 %2791
  %2793 = vrot.lane.b32.xlu0 %v1142, 64
  %v2794 = vpop.permute.xlu0 %2793
  %2795 = vrot.lane.b32.xlu0 %v1143, 64
  %v2796 = vpop.permute.xlu0 %2795
  %2797 = vrot.lane.b32.xlu0 %v1144, 64
  %v2798 = vpop.permute.xlu0 %2797
  %2799 = vrot.lane.b32.xlu0 %v1145, 64
  %v2800 = vpop.permute.xlu0 %2799
  %2801 = vrot.lane.b32.xlu0 %v1146, 64
  %v2802 = vpop.permute.xlu0 %2801
  %vm2803 = vcmask 523264
  %v2804 = vsel %vm2803, %v2790, %v2792
  %v2805 = vsel %vm2803, %v2792, %v2794
  %v2806 = vsel %vm2803, %v2794, %v2796
  %v2807 = vsel %vm2803, %v2796, %v2798
  %v2808 = vsel %vm2803, %v2798, %v2800
  %v2809 = vsel %vm2803, %v2800, %v2802
  %v2817 = vsel %vm1199, %v2787, 0
  %v2820 = vsel %vm1199, %v2788, 0
  %2822 = vmatpush.bf16.msra.mxu0 0
  %2823 = vmatpush.bf16.msra.mxu0 0
  %2824 = vmatpush.bf16.msra.mxu0 0
  %2825 = vmatpush.bf16.msra.mxu0 0
  %2826 = vmatpush.bf16.msra.mxu0 0
  %2827 = vmatpush.bf16.msra.mxu0 0
  %2828 = vmatpush.bf16.msra.mxu0 0
  %2829 = vmatpush.bf16.msra.mxu0 %v2804
  %2830 = vmatmul.bf16.gmra.mxu0 %v2817
  %v2831 = vpop.f32.mrf.mxu0
  %v2832 = vadd.f32 0.0, %v2831
  %v2833 = vpop.f32.mrf.mxu0
  %v2834 = vadd.f32 0.0, %v2833
  %2835 = vmatmul.bf16.gmra.mxu0 %v2820
  %v2836 = vpop.f32.mrf.mxu0
  %v2837 = vadd.f32 0.0, %v2836
  %v2838 = vpop.f32.mrf.mxu0
  %2839 = vdwg.mxu0
  %2840 = vmatpush.bf16.msra.mxu0 0
  %2841 = vmatpush.bf16.msra.mxu0 0
  %2842 = vmatpush.bf16.msra.mxu0 0
  %2843 = vmatpush.bf16.msra.mxu0 0
  %2844 = vmatpush.bf16.msra.mxu0 0
  %2845 = vmatpush.bf16.msra.mxu0 0
  %2846 = vmatpush.bf16.msra.mxu0 0
  %2847 = vmatpush.bf16.msra.mxu0 %v2805
  %2848 = vmatmul.bf16.gmra.mxu0 %v2817
  %v2849 = vpop.f32.mrf.mxu0
  %v2850 = vadd.f32 0.0, %v2849
  %v2851 = vpop.f32.mrf.mxu0
  %v2852 = vadd.f32 0.0, %v2851
  %2853 = vmatmul.bf16.gmra.mxu0 %v2820
  %v2854 = vpop.f32.mrf.mxu0
  %v2855 = vadd.f32 0.0, %v2854
  %v2856 = vpop.f32.mrf.mxu0
  %2857 = vdwg.mxu0
  %2858 = vmatpush.bf16.msra.mxu0 0
  %2859 = vmatpush.bf16.msra.mxu0 0
  %2860 = vmatpush.bf16.msra.mxu0 0
  %2861 = vmatpush.bf16.msra.mxu0 0
  %2862 = vmatpush.bf16.msra.mxu0 0
  %2863 = vmatpush.bf16.msra.mxu0 0
  %2864 = vmatpush.bf16.msra.mxu0 0
  %2865 = vmatpush.bf16.msra.mxu0 %v2806
  %2866 = vmatmul.bf16.gmra.mxu0 %v2817
  %v2867 = vpop.f32.mrf.mxu0
  %v2868 = vadd.f32 0.0, %v2867
  %v2869 = vpop.f32.mrf.mxu0
  %v2870 = vadd.f32 0.0, %v2869
  %2871 = vmatmul.bf16.gmra.mxu0 %v2820
  %v2872 = vpop.f32.mrf.mxu0
  %v2873 = vadd.f32 0.0, %v2872
  %v2874 = vpop.f32.mrf.mxu0
  %2875 = vdwg.mxu0
  %2876 = vmatpush.bf16.msra.mxu0 0
  %2877 = vmatpush.bf16.msra.mxu0 0
  %2878 = vmatpush.bf16.msra.mxu0 0
  %2879 = vmatpush.bf16.msra.mxu0 0
  %2880 = vmatpush.bf16.msra.mxu0 0
  %2881 = vmatpush.bf16.msra.mxu0 0
  %2882 = vmatpush.bf16.msra.mxu0 0
  %2883 = vmatpush.bf16.msra.mxu0 %v2807
  %2884 = vmatmul.bf16.gmra.mxu0 %v2817
  %v2885 = vpop.f32.mrf.mxu0
  %v2886 = vadd.f32 0.0, %v2885
  %v2887 = vpop.f32.mrf.mxu0
  %v2888 = vadd.f32 0.0, %v2887
  %2889 = vmatmul.bf16.gmra.mxu0 %v2820
  %v2890 = vpop.f32.mrf.mxu0
  %v2891 = vadd.f32 0.0, %v2890
  %v2892 = vpop.f32.mrf.mxu0
  %2893 = vdwg.mxu0
  %2894 = vmatpush.bf16.msra.mxu0 0
  %2895 = vmatpush.bf16.msra.mxu0 0
  %2896 = vmatpush.bf16.msra.mxu0 0
  %2897 = vmatpush.bf16.msra.mxu0 0
  %2898 = vmatpush.bf16.msra.mxu0 0
  %2899 = vmatpush.bf16.msra.mxu0 0
  %2900 = vmatpush.bf16.msra.mxu0 0
  %2901 = vmatpush.bf16.msra.mxu0 %v2808
  %2902 = vmatmul.bf16.gmra.mxu0 %v2817
  %v2903 = vpop.f32.mrf.mxu0
  %v2904 = vadd.f32 0.0, %v2903
  %v2905 = vpop.f32.mrf.mxu0
  %v2906 = vadd.f32 0.0, %v2905
  %2907 = vmatmul.bf16.gmra.mxu0 %v2820
  %v2908 = vpop.f32.mrf.mxu0
  %v2909 = vadd.f32 0.0, %v2908
  %v2910 = vpop.f32.mrf.mxu0
  %2911 = vdwg.mxu0
  %2912 = vmatpush.bf16.msra.mxu0 0
  %2913 = vmatpush.bf16.msra.mxu0 0
  %2914 = vmatpush.bf16.msra.mxu0 0
  %2915 = vmatpush.bf16.msra.mxu0 0
  %2916 = vmatpush.bf16.msra.mxu0 0
  %2917 = vmatpush.bf16.msra.mxu0 0
  %2918 = vmatpush.bf16.msra.mxu0 0
  %2919 = vmatpush.bf16.msra.mxu0 %v2809
  %2920 = vmatmul.bf16.gmra.mxu0 %v2817
  %v2921 = vpop.f32.mrf.mxu0
  %v2922 = vadd.f32 0.0, %v2921
  %v2923 = vpop.f32.mrf.mxu0
  %v2924 = vadd.f32 0.0, %v2923
  %2925 = vmatmul.bf16.gmra.mxu0 %v2820
  %v2926 = vpop.f32.mrf.mxu0
  %v2927 = vadd.f32 0.0, %v2926
  %v2928 = vpop.f32.mrf.mxu0
  %2929 = vdwg.mxu0
  %v2930 = vadd.f32 %v2759, %v2832
  %v2931 = vadd.f32 %v2760, %v2850
  %v2932 = vadd.f32 %v2761, %v2868
  %v2933 = vadd.f32 %v2762, %v2886
  %v2934 = vadd.f32 %v2763, %v2904
  %v2935 = vadd.f32 %v2764, %v2922
  %v2936 = vadd.f32 %v2765, %v2834
  %v2937 = vadd.f32 %v2766, %v2852
  %v2938 = vadd.f32 %v2767, %v2870
  %v2939 = vadd.f32 %v2768, %v2888
  %v2940 = vadd.f32 %v2769, %v2906
  %v2941 = vadd.f32 %v2770, %v2924
  %v2942 = vadd.f32 %v2771, %v2837
  %v2943 = vadd.f32 %v2772, %v2855
  %v2944 = vadd.f32 %v2773, %v2873
  %v2945 = vadd.f32 %v2774, %v2891
  %v2946 = vadd.f32 %v2775, %v2909
  %v2947 = vadd.f32 %v2776, %v2927
  %s2948 = scalar_lea.vmem %s3, 132
  %v2949 = vld [vmem:[%s2948] sm:$0xf]
  %v2950 = vld [vmem:[%s2948 + $0x4] sm:$0xf]
  %v2951 = vld [vmem:[%s2948 + $0x8] sm:$0xf]
  %v2955 = vunpack.c.l.b16 %v2949
  %v2956 = vunpack.c.l.b16 %v2950
  %v2957 = vunpack.c.l.b16 %v2951
  %v2958 = vpack.c.b16 %v2956, %v2955
  %v2959 = vpack.c.b16 %v2957, %v2957
  %2960 = vrot.lane.b32.xlu0 %v1140, 56
  %v2961 = vpop.permute.xlu0 %2960
  %2962 = vrot.lane.b32.xlu0 %v1141, 56
  %v2963 = vpop.permute.xlu0 %2962
  %2964 = vrot.lane.b32.xlu0 %v1142, 56
  %v2965 = vpop.permute.xlu0 %2964
  %2966 = vrot.lane.b32.xlu0 %v1143, 56
  %v2967 = vpop.permute.xlu0 %2966
  %2968 = vrot.lane.b32.xlu0 %v1144, 56
  %v2969 = vpop.permute.xlu0 %2968
  %2970 = vrot.lane.b32.xlu0 %v1145, 56
  %v2971 = vpop.permute.xlu0 %2970
  %2972 = vrot.lane.b32.xlu0 %v1146, 56
  %v2973 = vpop.permute.xlu0 %2972
  %vm2974 = vcmask 457728
  %v2975 = vsel %vm2974, %v2961, %v2963
  %v2976 = vsel %vm2974, %v2963, %v2965
  %v2977 = vsel %vm2974, %v2965, %v2967
  %v2978 = vsel %vm2974, %v2967, %v2969
  %v2979 = vsel %vm2974, %v2969, %v2971
  %v2980 = vsel %vm2974, %v2971, %v2973
  %v2988 = vsel %vm1199, %v2958, 0
  %v2991 = vsel %vm1199, %v2959, 0
  %2993 = vmatpush.bf16.msra.mxu0 0
  %2994 = vmatpush.bf16.msra.mxu0 0
  %2995 = vmatpush.bf16.msra.mxu0 0
  %2996 = vmatpush.bf16.msra.mxu0 0
  %2997 = vmatpush.bf16.msra.mxu0 0
  %2998 = vmatpush.bf16.msra.mxu0 0
  %2999 = vmatpush.bf16.msra.mxu0 0
  %3000 = vmatpush.bf16.msra.mxu0 %v2975
  %3001 = vmatmul.bf16.gmra.mxu0 %v2988
  %v3002 = vpop.f32.mrf.mxu0
  %v3003 = vadd.f32 0.0, %v3002
  %v3004 = vpop.f32.mrf.mxu0
  %v3005 = vadd.f32 0.0, %v3004
  %3006 = vmatmul.bf16.gmra.mxu0 %v2991
  %v3007 = vpop.f32.mrf.mxu0
  %v3008 = vadd.f32 0.0, %v3007
  %v3009 = vpop.f32.mrf.mxu0
  %3010 = vdwg.mxu0
  %3011 = vmatpush.bf16.msra.mxu0 0
  %3012 = vmatpush.bf16.msra.mxu0 0
  %3013 = vmatpush.bf16.msra.mxu0 0
  %3014 = vmatpush.bf16.msra.mxu0 0
  %3015 = vmatpush.bf16.msra.mxu0 0
  %3016 = vmatpush.bf16.msra.mxu0 0
  %3017 = vmatpush.bf16.msra.mxu0 0
  %3018 = vmatpush.bf16.msra.mxu0 %v2976
  %3019 = vmatmul.bf16.gmra.mxu0 %v2988
  %v3020 = vpop.f32.mrf.mxu0
  %v3021 = vadd.f32 0.0, %v3020
  %v3022 = vpop.f32.mrf.mxu0
  %v3023 = vadd.f32 0.0, %v3022
  %3024 = vmatmul.bf16.gmra.mxu0 %v2991
  %v3025 = vpop.f32.mrf.mxu0
  %v3026 = vadd.f32 0.0, %v3025
  %v3027 = vpop.f32.mrf.mxu0
  %3028 = vdwg.mxu0
  %3029 = vmatpush.bf16.msra.mxu0 0
  %3030 = vmatpush.bf16.msra.mxu0 0
  %3031 = vmatpush.bf16.msra.mxu0 0
  %3032 = vmatpush.bf16.msra.mxu0 0
  %3033 = vmatpush.bf16.msra.mxu0 0
  %3034 = vmatpush.bf16.msra.mxu0 0
  %3035 = vmatpush.bf16.msra.mxu0 0
  %3036 = vmatpush.bf16.msra.mxu0 %v2977
  %3037 = vmatmul.bf16.gmra.mxu0 %v2988
  %v3038 = vpop.f32.mrf.mxu0
  %v3039 = vadd.f32 0.0, %v3038
  %v3040 = vpop.f32.mrf.mxu0
  %v3041 = vadd.f32 0.0, %v3040
  %3042 = vmatmul.bf16.gmra.mxu0 %v2991
  %v3043 = vpop.f32.mrf.mxu0
  %v3044 = vadd.f32 0.0, %v3043
  %v3045 = vpop.f32.mrf.mxu0
  %3046 = vdwg.mxu0
  %3047 = vmatpush.bf16.msra.mxu0 0
  %3048 = vmatpush.bf16.msra.mxu0 0
  %3049 = vmatpush.bf16.msra.mxu0 0
  %3050 = vmatpush.bf16.msra.mxu0 0
  %3051 = vmatpush.bf16.msra.mxu0 0
  %3052 = vmatpush.bf16.msra.mxu0 0
  %3053 = vmatpush.bf16.msra.mxu0 0
  %3054 = vmatpush.bf16.msra.mxu0 %v2978
  %3055 = vmatmul.bf16.gmra.mxu0 %v2988
  %v3056 = vpop.f32.mrf.mxu0
  %v3057 = vadd.f32 0.0, %v3056
  %v3058 = vpop.f32.mrf.mxu0
  %v3059 = vadd.f32 0.0, %v3058
  %3060 = vmatmul.bf16.gmra.mxu0 %v2991
  %v3061 = vpop.f32.mrf.mxu0
  %v3062 = vadd.f32 0.0, %v3061
  %v3063 = vpop.f32.mrf.mxu0
  %3064 = vdwg.mxu0
  %3065 = vmatpush.bf16.msra.mxu0 0
  %3066 = vmatpush.bf16.msra.mxu0 0
  %3067 = vmatpush.bf16.msra.mxu0 0
  %3068 = vmatpush.bf16.msra.mxu0 0
  %3069 = vmatpush.bf16.msra.mxu0 0
  %3070 = vmatpush.bf16.msra.mxu0 0
  %3071 = vmatpush.bf16.msra.mxu0 0
  %3072 = vmatpush.bf16.msra.mxu0 %v2979
  %3073 = vmatmul.bf16.gmra.mxu0 %v2988
  %v3074 = vpop.f32.mrf.mxu0
  %v3075 = vadd.f32 0.0, %v3074
  %v3076 = vpop.f32.mrf.mxu0
  %v3077 = vadd.f32 0.0, %v3076
  %3078 = vmatmul.bf16.gmra.mxu0 %v2991
  %v3079 = vpop.f32.mrf.mxu0
  %v3080 = vadd.f32 0.0, %v3079
  %v3081 = vpop.f32.mrf.mxu0
  %3082 = vdwg.mxu0
  %3083 = vmatpush.bf16.msra.mxu0 0
  %3084 = vmatpush.bf16.msra.mxu0 0
  %3085 = vmatpush.bf16.msra.mxu0 0
  %3086 = vmatpush.bf16.msra.mxu0 0
  %3087 = vmatpush.bf16.msra.mxu0 0
  %3088 = vmatpush.bf16.msra.mxu0 0
  %3089 = vmatpush.bf16.msra.mxu0 0
  %3090 = vmatpush.bf16.msra.mxu0 %v2980
  %3091 = vmatmul.bf16.gmra.mxu0 %v2988
  %v3092 = vpop.f32.mrf.mxu0
  %v3093 = vadd.f32 0.0, %v3092
  %v3094 = vpop.f32.mrf.mxu0
  %v3095 = vadd.f32 0.0, %v3094
  %3096 = vmatmul.bf16.gmra.mxu0 %v2991
  %v3097 = vpop.f32.mrf.mxu0
  %v3098 = vadd.f32 0.0, %v3097
  %v3099 = vpop.f32.mrf.mxu0
  %3100 = vdwg.mxu0
  %v3101 = vadd.f32 %v2930, %v3003
  %v3102 = vadd.f32 %v2931, %v3021
  %v3103 = vadd.f32 %v2932, %v3039
  %v3104 = vadd.f32 %v2933, %v3057
  %v3105 = vadd.f32 %v2934, %v3075
  %v3106 = vadd.f32 %v2935, %v3093
  %v3107 = vadd.f32 %v2936, %v3005
  %v3108 = vadd.f32 %v2937, %v3023
  %v3109 = vadd.f32 %v2938, %v3041
  %v3110 = vadd.f32 %v2939, %v3059
  %v3111 = vadd.f32 %v2940, %v3077
  %v3112 = vadd.f32 %v2941, %v3095
  %v3113 = vadd.f32 %v2942, %v3008
  %v3114 = vadd.f32 %v2943, %v3026
  %v3115 = vadd.f32 %v2944, %v3044
  %v3116 = vadd.f32 %v2945, %v3062
  %v3117 = vadd.f32 %v2946, %v3080
  %v3118 = vadd.f32 %v2947, %v3098
  %s3119 = scalar_lea.vmem %s3, 144
  %v3120 = vld [vmem:[%s3119] sm:$0xf]
  %v3121 = vld [vmem:[%s3119 + $0x4] sm:$0xf]
  %v3122 = vld [vmem:[%s3119 + $0x8] sm:$0xf]
  %v3126 = vunpack.c.l.b16 %v3120
  %v3127 = vunpack.c.l.b16 %v3121
  %v3128 = vunpack.c.l.b16 %v3122
  %v3129 = vpack.c.b16 %v3127, %v3126
  %v3130 = vpack.c.b16 %v3128, %v3128
  %3131 = vrot.lane.b32.xlu0 %v1140, 48
  %v3132 = vpop.permute.xlu0 %3131
  %3133 = vrot.lane.b32.xlu0 %v1141, 48
  %v3134 = vpop.permute.xlu0 %3133
  %3135 = vrot.lane.b32.xlu0 %v1142, 48
  %v3136 = vpop.permute.xlu0 %3135
  %3137 = vrot.lane.b32.xlu0 %v1143, 48
  %v3138 = vpop.permute.xlu0 %3137
  %3139 = vrot.lane.b32.xlu0 %v1144, 48
  %v3140 = vpop.permute.xlu0 %3139
  %3141 = vrot.lane.b32.xlu0 %v1145, 48
  %v3142 = vpop.permute.xlu0 %3141
  %3143 = vrot.lane.b32.xlu0 %v1146, 48
  %v3144 = vpop.permute.xlu0 %3143
  %vm3145 = vcmask 392192
  %v3146 = vsel %vm3145, %v3132, %v3134
  %v3147 = vsel %vm3145, %v3134, %v3136
  %v3148 = vsel %vm3145, %v3136, %v3138
  %v3149 = vsel %vm3145, %v3138, %v3140
  %v3150 = vsel %vm3145, %v3140, %v3142
  %v3151 = vsel %vm3145, %v3142, %v3144
  %v3159 = vsel %vm1199, %v3129, 0
  %v3162 = vsel %vm1199, %v3130, 0
  %3164 = vmatpush.bf16.msra.mxu0 0
  %3165 = vmatpush.bf16.msra.mxu0 0
  %3166 = vmatpush.bf16.msra.mxu0 0
  %3167 = vmatpush.bf16.msra.mxu0 0
  %3168 = vmatpush.bf16.msra.mxu0 0
  %3169 = vmatpush.bf16.msra.mxu0 0
  %3170 = vmatpush.bf16.msra.mxu0 0
  %3171 = vmatpush.bf16.msra.mxu0 %v3146
  %3172 = vmatmul.bf16.gmra.mxu0 %v3159
  %v3173 = vpop.f32.mrf.mxu0
  %v3174 = vadd.f32 0.0, %v3173
  %v3175 = vpop.f32.mrf.mxu0
  %v3176 = vadd.f32 0.0, %v3175
  %3177 = vmatmul.bf16.gmra.mxu0 %v3162
  %v3178 = vpop.f32.mrf.mxu0
  %v3179 = vadd.f32 0.0, %v3178
  %v3180 = vpop.f32.mrf.mxu0
  %3181 = vdwg.mxu0
  %3182 = vmatpush.bf16.msra.mxu0 0
  %3183 = vmatpush.bf16.msra.mxu0 0
  %3184 = vmatpush.bf16.msra.mxu0 0
  %3185 = vmatpush.bf16.msra.mxu0 0
  %3186 = vmatpush.bf16.msra.mxu0 0
  %3187 = vmatpush.bf16.msra.mxu0 0
  %3188 = vmatpush.bf16.msra.mxu0 0
  %3189 = vmatpush.bf16.msra.mxu0 %v3147
  %3190 = vmatmul.bf16.gmra.mxu0 %v3159
  %v3191 = vpop.f32.mrf.mxu0
  %v3192 = vadd.f32 0.0, %v3191
  %v3193 = vpop.f32.mrf.mxu0
  %v3194 = vadd.f32 0.0, %v3193
  %3195 = vmatmul.bf16.gmra.mxu0 %v3162
  %v3196 = vpop.f32.mrf.mxu0
  %v3197 = vadd.f32 0.0, %v3196
  %v3198 = vpop.f32.mrf.mxu0
  %3199 = vdwg.mxu0
  %3200 = vmatpush.bf16.msra.mxu0 0
  %3201 = vmatpush.bf16.msra.mxu0 0
  %3202 = vmatpush.bf16.msra.mxu0 0
  %3203 = vmatpush.bf16.msra.mxu0 0
  %3204 = vmatpush.bf16.msra.mxu0 0
  %3205 = vmatpush.bf16.msra.mxu0 0
  %3206 = vmatpush.bf16.msra.mxu0 0
  %3207 = vmatpush.bf16.msra.mxu0 %v3148
  %3208 = vmatmul.bf16.gmra.mxu0 %v3159
  %v3209 = vpop.f32.mrf.mxu0
  %v3210 = vadd.f32 0.0, %v3209
  %v3211 = vpop.f32.mrf.mxu0
  %v3212 = vadd.f32 0.0, %v3211
  %3213 = vmatmul.bf16.gmra.mxu0 %v3162
  %v3214 = vpop.f32.mrf.mxu0
  %v3215 = vadd.f32 0.0, %v3214
  %v3216 = vpop.f32.mrf.mxu0
  %3217 = vdwg.mxu0
  %3218 = vmatpush.bf16.msra.mxu0 0
  %3219 = vmatpush.bf16.msra.mxu0 0
  %3220 = vmatpush.bf16.msra.mxu0 0
  %3221 = vmatpush.bf16.msra.mxu0 0
  %3222 = vmatpush.bf16.msra.mxu0 0
  %3223 = vmatpush.bf16.msra.mxu0 0
  %3224 = vmatpush.bf16.msra.mxu0 0
  %3225 = vmatpush.bf16.msra.mxu0 %v3149
  %3226 = vmatmul.bf16.gmra.mxu0 %v3159
  %v3227 = vpop.f32.mrf.mxu0
  %v3228 = vadd.f32 0.0, %v3227
  %v3229 = vpop.f32.mrf.mxu0
  %v3230 = vadd.f32 0.0, %v3229
  %3231 = vmatmul.bf16.gmra.mxu0 %v3162
  %v3232 = vpop.f32.mrf.mxu0
  %v3233 = vadd.f32 0.0, %v3232
  %v3234 = vpop.f32.mrf.mxu0
  %3235 = vdwg.mxu0
  %3236 = vmatpush.bf16.msra.mxu0 0
  %3237 = vmatpush.bf16.msra.mxu0 0
  %3238 = vmatpush.bf16.msra.mxu0 0
  %3239 = vmatpush.bf16.msra.mxu0 0
  %3240 = vmatpush.bf16.msra.mxu0 0
  %3241 = vmatpush.bf16.msra.mxu0 0
  %3242 = vmatpush.bf16.msra.mxu0 0
  %3243 = vmatpush.bf16.msra.mxu0 %v3150
  %3244 = vmatmul.bf16.gmra.mxu0 %v3159
  %v3245 = vpop.f32.mrf.mxu0
  %v3246 = vadd.f32 0.0, %v3245
  %v3247 = vpop.f32.mrf.mxu0
  %v3248 = vadd.f32 0.0, %v3247
  %3249 = vmatmul.bf16.gmra.mxu0 %v3162
  %v3250 = vpop.f32.mrf.mxu0
  %v3251 = vadd.f32 0.0, %v3250
  %v3252 = vpop.f32.mrf.mxu0
  %3253 = vdwg.mxu0
  %3254 = vmatpush.bf16.msra.mxu0 0
  %3255 = vmatpush.bf16.msra.mxu0 0
  %3256 = vmatpush.bf16.msra.mxu0 0
  %3257 = vmatpush.bf16.msra.mxu0 0
  %3258 = vmatpush.bf16.msra.mxu0 0
  %3259 = vmatpush.bf16.msra.mxu0 0
  %3260 = vmatpush.bf16.msra.mxu0 0
  %3261 = vmatpush.bf16.msra.mxu0 %v3151
  %3262 = vmatmul.bf16.gmra.mxu0 %v3159
  %v3263 = vpop.f32.mrf.mxu0
  %v3264 = vadd.f32 0.0, %v3263
  %v3265 = vpop.f32.mrf.mxu0
  %v3266 = vadd.f32 0.0, %v3265
  %3267 = vmatmul.bf16.gmra.mxu0 %v3162
  %v3268 = vpop.f32.mrf.mxu0
  %v3269 = vadd.f32 0.0, %v3268
  %v3270 = vpop.f32.mrf.mxu0
  %3271 = vdwg.mxu0
  %v3272 = vadd.f32 %v3101, %v3174
  %v3273 = vadd.f32 %v3102, %v3192
  %v3274 = vadd.f32 %v3103, %v3210
  %v3275 = vadd.f32 %v3104, %v3228
  %v3276 = vadd.f32 %v3105, %v3246
  %v3277 = vadd.f32 %v3106, %v3264
  %v3278 = vadd.f32 %v3107, %v3176
  %v3279 = vadd.f32 %v3108, %v3194
  %v3280 = vadd.f32 %v3109, %v3212
  %v3281 = vadd.f32 %v3110, %v3230
  %v3282 = vadd.f32 %v3111, %v3248
  %v3283 = vadd.f32 %v3112, %v3266
  %v3284 = vadd.f32 %v3113, %v3179
  %v3285 = vadd.f32 %v3114, %v3197
  %v3286 = vadd.f32 %v3115, %v3215
  %v3287 = vadd.f32 %v3116, %v3233
  %v3288 = vadd.f32 %v3117, %v3251
  %v3289 = vadd.f32 %v3118, %v3269
  %s3290 = scalar_lea.vmem %s3, 156
  %v3291 = vld [vmem:[%s3290] sm:$0xf]
  %v3292 = vld [vmem:[%s3290 + $0x4] sm:$0xf]
  %v3293 = vld [vmem:[%s3290 + $0x8] sm:$0xf]
  %v3297 = vunpack.c.l.b16 %v3291
  %v3298 = vunpack.c.l.b16 %v3292
  %v3299 = vunpack.c.l.b16 %v3293
  %v3300 = vpack.c.b16 %v3298, %v3297
  %v3301 = vpack.c.b16 %v3299, %v3299
  %3302 = vrot.lane.b32.xlu0 %v1140, 40
  %v3303 = vpop.permute.xlu0 %3302
  %3304 = vrot.lane.b32.xlu0 %v1141, 40
  %v3305 = vpop.permute.xlu0 %3304
  %3306 = vrot.lane.b32.xlu0 %v1142, 40
  %v3307 = vpop.permute.xlu0 %3306
  %3308 = vrot.lane.b32.xlu0 %v1143, 40
  %v3309 = vpop.permute.xlu0 %3308
  %3310 = vrot.lane.b32.xlu0 %v1144, 40
  %v3311 = vpop.permute.xlu0 %3310
  %3312 = vrot.lane.b32.xlu0 %v1145, 40
  %v3313 = vpop.permute.xlu0 %3312
  %3314 = vrot.lane.b32.xlu0 %v1146, 40
  %v3315 = vpop.permute.xlu0 %3314
  %vm3316 = vcmask 326656
  %v3317 = vsel %vm3316, %v3303, %v3305
  %v3318 = vsel %vm3316, %v3305, %v3307
  %v3319 = vsel %vm3316, %v3307, %v3309
  %v3320 = vsel %vm3316, %v3309, %v3311
  %v3321 = vsel %vm3316, %v3311, %v3313
  %v3322 = vsel %vm3316, %v3313, %v3315
  %v3330 = vsel %vm1199, %v3300, 0
  %v3333 = vsel %vm1199, %v3301, 0
  %3335 = vmatpush.bf16.msra.mxu0 0
  %3336 = vmatpush.bf16.msra.mxu0 0
  %3337 = vmatpush.bf16.msra.mxu0 0
  %3338 = vmatpush.bf16.msra.mxu0 0
  %3339 = vmatpush.bf16.msra.mxu0 0
  %3340 = vmatpush.bf16.msra.mxu0 0
  %3341 = vmatpush.bf16.msra.mxu0 0
  %3342 = vmatpush.bf16.msra.mxu0 %v3317
  %3343 = vmatmul.bf16.gmra.mxu0 %v3330
  %v3344 = vpop.f32.mrf.mxu0
  %v3345 = vadd.f32 0.0, %v3344
  %v3346 = vpop.f32.mrf.mxu0
  %v3347 = vadd.f32 0.0, %v3346
  %3348 = vmatmul.bf16.gmra.mxu0 %v3333
  %v3349 = vpop.f32.mrf.mxu0
  %v3350 = vadd.f32 0.0, %v3349
  %v3351 = vpop.f32.mrf.mxu0
  %3352 = vdwg.mxu0
  %3353 = vmatpush.bf16.msra.mxu0 0
  %3354 = vmatpush.bf16.msra.mxu0 0
  %3355 = vmatpush.bf16.msra.mxu0 0
  %3356 = vmatpush.bf16.msra.mxu0 0
  %3357 = vmatpush.bf16.msra.mxu0 0
  %3358 = vmatpush.bf16.msra.mxu0 0
  %3359 = vmatpush.bf16.msra.mxu0 0
  %3360 = vmatpush.bf16.msra.mxu0 %v3318
  %3361 = vmatmul.bf16.gmra.mxu0 %v3330
  %v3362 = vpop.f32.mrf.mxu0
  %v3363 = vadd.f32 0.0, %v3362
  %v3364 = vpop.f32.mrf.mxu0
  %v3365 = vadd.f32 0.0, %v3364
  %3366 = vmatmul.bf16.gmra.mxu0 %v3333
  %v3367 = vpop.f32.mrf.mxu0
  %v3368 = vadd.f32 0.0, %v3367
  %v3369 = vpop.f32.mrf.mxu0
  %3370 = vdwg.mxu0
  %3371 = vmatpush.bf16.msra.mxu0 0
  %3372 = vmatpush.bf16.msra.mxu0 0
  %3373 = vmatpush.bf16.msra.mxu0 0
  %3374 = vmatpush.bf16.msra.mxu0 0
  %3375 = vmatpush.bf16.msra.mxu0 0
  %3376 = vmatpush.bf16.msra.mxu0 0
  %3377 = vmatpush.bf16.msra.mxu0 0
  %3378 = vmatpush.bf16.msra.mxu0 %v3319
  %3379 = vmatmul.bf16.gmra.mxu0 %v3330
  %v3380 = vpop.f32.mrf.mxu0
  %v3381 = vadd.f32 0.0, %v3380
  %v3382 = vpop.f32.mrf.mxu0
  %v3383 = vadd.f32 0.0, %v3382
  %3384 = vmatmul.bf16.gmra.mxu0 %v3333
  %v3385 = vpop.f32.mrf.mxu0
  %v3386 = vadd.f32 0.0, %v3385
  %v3387 = vpop.f32.mrf.mxu0
  %3388 = vdwg.mxu0
  %3389 = vmatpush.bf16.msra.mxu0 0
  %3390 = vmatpush.bf16.msra.mxu0 0
  %3391 = vmatpush.bf16.msra.mxu0 0
  %3392 = vmatpush.bf16.msra.mxu0 0
  %3393 = vmatpush.bf16.msra.mxu0 0
  %3394 = vmatpush.bf16.msra.mxu0 0
  %3395 = vmatpush.bf16.msra.mxu0 0
  %3396 = vmatpush.bf16.msra.mxu0 %v3320
  %3397 = vmatmul.bf16.gmra.mxu0 %v3330
  %v3398 = vpop.f32.mrf.mxu0
  %v3399 = vadd.f32 0.0, %v3398
  %v3400 = vpop.f32.mrf.mxu0
  %v3401 = vadd.f32 0.0, %v3400
  %3402 = vmatmul.bf16.gmra.mxu0 %v3333
  %v3403 = vpop.f32.mrf.mxu0
  %v3404 = vadd.f32 0.0, %v3403
  %v3405 = vpop.f32.mrf.mxu0
  %3406 = vdwg.mxu0
  %3407 = vmatpush.bf16.msra.mxu0 0
  %3408 = vmatpush.bf16.msra.mxu0 0
  %3409 = vmatpush.bf16.msra.mxu0 0
  %3410 = vmatpush.bf16.msra.mxu0 0
  %3411 = vmatpush.bf16.msra.mxu0 0
  %3412 = vmatpush.bf16.msra.mxu0 0
  %3413 = vmatpush.bf16.msra.mxu0 0
  %3414 = vmatpush.bf16.msra.mxu0 %v3321
  %3415 = vmatmul.bf16.gmra.mxu0 %v3330
  %v3416 = vpop.f32.mrf.mxu0
  %v3417 = vadd.f32 0.0, %v3416
  %v3418 = vpop.f32.mrf.mxu0
  %v3419 = vadd.f32 0.0, %v3418
  %3420 = vmatmul.bf16.gmra.mxu0 %v3333
  %v3421 = vpop.f32.mrf.mxu0
  %v3422 = vadd.f32 0.0, %v3421
  %v3423 = vpop.f32.mrf.mxu0
  %3424 = vdwg.mxu0
  %3425 = vmatpush.bf16.msra.mxu0 0
  %3426 = vmatpush.bf16.msra.mxu0 0
  %3427 = vmatpush.bf16.msra.mxu0 0
  %3428 = vmatpush.bf16.msra.mxu0 0
  %3429 = vmatpush.bf16.msra.mxu0 0
  %3430 = vmatpush.bf16.msra.mxu0 0
  %3431 = vmatpush.bf16.msra.mxu0 0
  %3432 = vmatpush.bf16.msra.mxu0 %v3322
  %3433 = vmatmul.bf16.gmra.mxu0 %v3330
  %v3434 = vpop.f32.mrf.mxu0
  %v3435 = vadd.f32 0.0, %v3434
  %v3436 = vpop.f32.mrf.mxu0
  %v3437 = vadd.f32 0.0, %v3436
  %3438 = vmatmul.bf16.gmra.mxu0 %v3333
  %v3439 = vpop.f32.mrf.mxu0
  %v3440 = vadd.f32 0.0, %v3439
  %v3441 = vpop.f32.mrf.mxu0
  %3442 = vdwg.mxu0
  %v3443 = vadd.f32 %v3272, %v3345
  %v3444 = vadd.f32 %v3273, %v3363
  %v3445 = vadd.f32 %v3274, %v3381
  %v3446 = vadd.f32 %v3275, %v3399
  %v3447 = vadd.f32 %v3276, %v3417
  %v3448 = vadd.f32 %v3277, %v3435
  %v3449 = vadd.f32 %v3278, %v3347
  %v3450 = vadd.f32 %v3279, %v3365
  %v3451 = vadd.f32 %v3280, %v3383
  %v3452 = vadd.f32 %v3281, %v3401
  %v3453 = vadd.f32 %v3282, %v3419
  %v3454 = vadd.f32 %v3283, %v3437
  %v3455 = vadd.f32 %v3284, %v3350
  %v3456 = vadd.f32 %v3285, %v3368
  %v3457 = vadd.f32 %v3286, %v3386
  %v3458 = vadd.f32 %v3287, %v3404
  %v3459 = vadd.f32 %v3288, %v3422
  %v3460 = vadd.f32 %v3289, %v3440
  %s3461 = scalar_lea.vmem %s3, 168
  %v3462 = vld [vmem:[%s3461] sm:$0xf]
  %v3463 = vld [vmem:[%s3461 + $0x4] sm:$0xf]
  %v3464 = vld [vmem:[%s3461 + $0x8] sm:$0xf]
  %v3468 = vunpack.c.l.b16 %v3462
  %v3469 = vunpack.c.l.b16 %v3463
  %v3470 = vunpack.c.l.b16 %v3464
  %v3471 = vpack.c.b16 %v3469, %v3468
  %v3472 = vpack.c.b16 %v3470, %v3470
  %3473 = vrot.lane.b32.xlu0 %v1146, 32
  %v3474 = vpop.permute.xlu0 %3473
  %v3475 = vsel %vm1975, %v1974, %v3474
  %v3478 = vsel %vm1199, %v3471, 0
  %v3481 = vsel %vm1199, %v3472, 0
  %3483 = vmatpush.bf16.msra.mxu0 0
  %3484 = vmatpush.bf16.msra.mxu0 0
  %3485 = vmatpush.bf16.msra.mxu0 0
  %3486 = vmatpush.bf16.msra.mxu0 0
  %3487 = vmatpush.bf16.msra.mxu0 0
  %3488 = vmatpush.bf16.msra.mxu0 0
  %3489 = vmatpush.bf16.msra.mxu0 0
  %3490 = vmatpush.bf16.msra.mxu0 %v1977
  %3491 = vmatmul.bf16.gmra.mxu0 %v3478
  %v3492 = vpop.f32.mrf.mxu0
  %v3493 = vadd.f32 0.0, %v3492
  %v3494 = vpop.f32.mrf.mxu0
  %v3495 = vadd.f32 0.0, %v3494
  %3496 = vmatmul.bf16.gmra.mxu0 %v3481
  %v3497 = vpop.f32.mrf.mxu0
  %v3498 = vadd.f32 0.0, %v3497
  %v3499 = vpop.f32.mrf.mxu0
  %3500 = vdwg.mxu0
  %3501 = vmatpush.bf16.msra.mxu0 0
  %3502 = vmatpush.bf16.msra.mxu0 0
  %3503 = vmatpush.bf16.msra.mxu0 0
  %3504 = vmatpush.bf16.msra.mxu0 0
  %3505 = vmatpush.bf16.msra.mxu0 0
  %3506 = vmatpush.bf16.msra.mxu0 0
  %3507 = vmatpush.bf16.msra.mxu0 0
  %3508 = vmatpush.bf16.msra.mxu0 %v1978
  %3509 = vmatmul.bf16.gmra.mxu0 %v3478
  %v3510 = vpop.f32.mrf.mxu0
  %v3511 = vadd.f32 0.0, %v3510
  %v3512 = vpop.f32.mrf.mxu0
  %v3513 = vadd.f32 0.0, %v3512
  %3514 = vmatmul.bf16.gmra.mxu0 %v3481
  %v3515 = vpop.f32.mrf.mxu0
  %v3516 = vadd.f32 0.0, %v3515
  %v3517 = vpop.f32.mrf.mxu0
  %3518 = vdwg.mxu0
  %3519 = vmatpush.bf16.msra.mxu0 0
  %3520 = vmatpush.bf16.msra.mxu0 0
  %3521 = vmatpush.bf16.msra.mxu0 0
  %3522 = vmatpush.bf16.msra.mxu0 0
  %3523 = vmatpush.bf16.msra.mxu0 0
  %3524 = vmatpush.bf16.msra.mxu0 0
  %3525 = vmatpush.bf16.msra.mxu0 0
  %3526 = vmatpush.bf16.msra.mxu0 %v1979
  %3527 = vmatmul.bf16.gmra.mxu0 %v3478
  %v3528 = vpop.f32.mrf.mxu0
  %v3529 = vadd.f32 0.0, %v3528
  %v3530 = vpop.f32.mrf.mxu0
  %v3531 = vadd.f32 0.0, %v3530
  %3532 = vmatmul.bf16.gmra.mxu0 %v3481
  %v3533 = vpop.f32.mrf.mxu0
  %v3534 = vadd.f32 0.0, %v3533
  %v3535 = vpop.f32.mrf.mxu0
  %3536 = vdwg.mxu0
  %3537 = vmatpush.bf16.msra.mxu0 0
  %3538 = vmatpush.bf16.msra.mxu0 0
  %3539 = vmatpush.bf16.msra.mxu0 0
  %3540 = vmatpush.bf16.msra.mxu0 0
  %3541 = vmatpush.bf16.msra.mxu0 0
  %3542 = vmatpush.bf16.msra.mxu0 0
  %3543 = vmatpush.bf16.msra.mxu0 0
  %3544 = vmatpush.bf16.msra.mxu0 %v1980
  %3545 = vmatmul.bf16.gmra.mxu0 %v3478
  %v3546 = vpop.f32.mrf.mxu0
  %v3547 = vadd.f32 0.0, %v3546
  %v3548 = vpop.f32.mrf.mxu0
  %v3549 = vadd.f32 0.0, %v3548
  %3550 = vmatmul.bf16.gmra.mxu0 %v3481
  %v3551 = vpop.f32.mrf.mxu0
  %v3552 = vadd.f32 0.0, %v3551
  %v3553 = vpop.f32.mrf.mxu0
  %3554 = vdwg.mxu0
  %3555 = vmatpush.bf16.msra.mxu0 0
  %3556 = vmatpush.bf16.msra.mxu0 0
  %3557 = vmatpush.bf16.msra.mxu0 0
  %3558 = vmatpush.bf16.msra.mxu0 0
  %3559 = vmatpush.bf16.msra.mxu0 0
  %3560 = vmatpush.bf16.msra.mxu0 0
  %3561 = vmatpush.bf16.msra.mxu0 0
  %3562 = vmatpush.bf16.msra.mxu0 %v1981
  %3563 = vmatmul.bf16.gmra.mxu0 %v3478
  %v3564 = vpop.f32.mrf.mxu0
  %v3565 = vadd.f32 0.0, %v3564
  %v3566 = vpop.f32.mrf.mxu0
  %v3567 = vadd.f32 0.0, %v3566
  %3568 = vmatmul.bf16.gmra.mxu0 %v3481
  %v3569 = vpop.f32.mrf.mxu0
  %v3570 = vadd.f32 0.0, %v3569
  %v3571 = vpop.f32.mrf.mxu0
  %3572 = vdwg.mxu0
  %3573 = vmatpush.bf16.msra.mxu0 0
  %3574 = vmatpush.bf16.msra.mxu0 0
  %3575 = vmatpush.bf16.msra.mxu0 0
  %3576 = vmatpush.bf16.msra.mxu0 0
  %3577 = vmatpush.bf16.msra.mxu0 0
  %3578 = vmatpush.bf16.msra.mxu0 0
  %3579 = vmatpush.bf16.msra.mxu0 0
  %3580 = vmatpush.bf16.msra.mxu0 %v3475
  %3581 = vmatmul.bf16.gmra.mxu0 %v3478
  %v3582 = vpop.f32.mrf.mxu0
  %v3583 = vadd.f32 0.0, %v3582
  %v3584 = vpop.f32.mrf.mxu0
  %v3585 = vadd.f32 0.0, %v3584
  %3586 = vmatmul.bf16.gmra.mxu0 %v3481
  %v3587 = vpop.f32.mrf.mxu0
  %v3588 = vadd.f32 0.0, %v3587
  %v3589 = vpop.f32.mrf.mxu0
  %3590 = vdwg.mxu0
  %v3591 = vadd.f32 %v3443, %v3493
  %v3592 = vadd.f32 %v3444, %v3511
  %v3593 = vadd.f32 %v3445, %v3529
  %v3594 = vadd.f32 %v3446, %v3547
  %v3595 = vadd.f32 %v3447, %v3565
  %v3596 = vadd.f32 %v3448, %v3583
  %v3597 = vadd.f32 %v3449, %v3495
  %v3598 = vadd.f32 %v3450, %v3513
  %v3599 = vadd.f32 %v3451, %v3531
  %v3600 = vadd.f32 %v3452, %v3549
  %v3601 = vadd.f32 %v3453, %v3567
  %v3602 = vadd.f32 %v3454, %v3585
  %v3603 = vadd.f32 %v3455, %v3498
  %v3604 = vadd.f32 %v3456, %v3516
  %v3605 = vadd.f32 %v3457, %v3534
  %v3606 = vadd.f32 %v3458, %v3552
  %v3607 = vadd.f32 %v3459, %v3570
  %v3608 = vadd.f32 %v3460, %v3588
  %s3609 = scalar_lea.vmem %s3, 180
  %v3610 = vld [vmem:[%s3609] sm:$0xf]
  %v3611 = vld [vmem:[%s3609 + $0x4] sm:$0xf]
  %v3612 = vld [vmem:[%s3609 + $0x8] sm:$0xf]
  %v3616 = vunpack.c.l.b16 %v3610
  %v3617 = vunpack.c.l.b16 %v3611
  %v3618 = vunpack.c.l.b16 %v3612
  %v3619 = vpack.c.b16 %v3617, %v3616
  %v3620 = vpack.c.b16 %v3618, %v3618
  %3621 = vrot.lane.b32.xlu0 %v1146, 96
  %v3622 = vpop.permute.xlu0 %3621
  %3623 = vrot.lane.b32.xlu0 %v1147, 96
  %v3624 = vpop.permute.xlu0 %3623
  %v3625 = vsel %vm1804, %v1803, %v3622
  %v3626 = vsel %vm1804, %v3622, %v3624
  %v3630 = vsel %vm1199, %v3619, 0
  %v3633 = vsel %vm1199, %v3620, 0
  %3635 = vmatpush.bf16.msra.mxu0 0
  %3636 = vmatpush.bf16.msra.mxu0 0
  %3637 = vmatpush.bf16.msra.mxu0 0
  %3638 = vmatpush.bf16.msra.mxu0 0
  %3639 = vmatpush.bf16.msra.mxu0 0
  %3640 = vmatpush.bf16.msra.mxu0 0
  %3641 = vmatpush.bf16.msra.mxu0 0
  %3642 = vmatpush.bf16.msra.mxu0 %v1807
  %3643 = vmatmul.bf16.gmra.mxu0 %v3630
  %v3644 = vpop.f32.mrf.mxu0
  %v3645 = vadd.f32 0.0, %v3644
  %v3646 = vpop.f32.mrf.mxu0
  %v3647 = vadd.f32 0.0, %v3646
  %3648 = vmatmul.bf16.gmra.mxu0 %v3633
  %v3649 = vpop.f32.mrf.mxu0
  %v3650 = vadd.f32 0.0, %v3649
  %v3651 = vpop.f32.mrf.mxu0
  %3652 = vdwg.mxu0
  %3653 = vmatpush.bf16.msra.mxu0 0
  %3654 = vmatpush.bf16.msra.mxu0 0
  %3655 = vmatpush.bf16.msra.mxu0 0
  %3656 = vmatpush.bf16.msra.mxu0 0
  %3657 = vmatpush.bf16.msra.mxu0 0
  %3658 = vmatpush.bf16.msra.mxu0 0
  %3659 = vmatpush.bf16.msra.mxu0 0
  %3660 = vmatpush.bf16.msra.mxu0 %v1808
  %3661 = vmatmul.bf16.gmra.mxu0 %v3630
  %v3662 = vpop.f32.mrf.mxu0
  %v3663 = vadd.f32 0.0, %v3662
  %v3664 = vpop.f32.mrf.mxu0
  %v3665 = vadd.f32 0.0, %v3664
  %3666 = vmatmul.bf16.gmra.mxu0 %v3633
  %v3667 = vpop.f32.mrf.mxu0
  %v3668 = vadd.f32 0.0, %v3667
  %v3669 = vpop.f32.mrf.mxu0
  %3670 = vdwg.mxu0
  %3671 = vmatpush.bf16.msra.mxu0 0
  %3672 = vmatpush.bf16.msra.mxu0 0
  %3673 = vmatpush.bf16.msra.mxu0 0
  %3674 = vmatpush.bf16.msra.mxu0 0
  %3675 = vmatpush.bf16.msra.mxu0 0
  %3676 = vmatpush.bf16.msra.mxu0 0
  %3677 = vmatpush.bf16.msra.mxu0 0
  %3678 = vmatpush.bf16.msra.mxu0 %v1809
  %3679 = vmatmul.bf16.gmra.mxu0 %v3630
  %v3680 = vpop.f32.mrf.mxu0
  %v3681 = vadd.f32 0.0, %v3680
  %v3682 = vpop.f32.mrf.mxu0
  %v3683 = vadd.f32 0.0, %v3682
  %3684 = vmatmul.bf16.gmra.mxu0 %v3633
  %v3685 = vpop.f32.mrf.mxu0
  %v3686 = vadd.f32 0.0, %v3685
  %v3687 = vpop.f32.mrf.mxu0
  %3688 = vdwg.mxu0
  %3689 = vmatpush.bf16.msra.mxu0 0
  %3690 = vmatpush.bf16.msra.mxu0 0
  %3691 = vmatpush.bf16.msra.mxu0 0
  %3692 = vmatpush.bf16.msra.mxu0 0
  %3693 = vmatpush.bf16.msra.mxu0 0
  %3694 = vmatpush.bf16.msra.mxu0 0
  %3695 = vmatpush.bf16.msra.mxu0 0
  %3696 = vmatpush.bf16.msra.mxu0 %v1810
  %3697 = vmatmul.bf16.gmra.mxu0 %v3630
  %v3698 = vpop.f32.mrf.mxu0
  %v3699 = vadd.f32 0.0, %v3698
  %v3700 = vpop.f32.mrf.mxu0
  %v3701 = vadd.f32 0.0, %v3700
  %3702 = vmatmul.bf16.gmra.mxu0 %v3633
  %v3703 = vpop.f32.mrf.mxu0
  %v3704 = vadd.f32 0.0, %v3703
  %v3705 = vpop.f32.mrf.mxu0
  %3706 = vdwg.mxu0
  %3707 = vmatpush.bf16.msra.mxu0 0
  %3708 = vmatpush.bf16.msra.mxu0 0
  %3709 = vmatpush.bf16.msra.mxu0 0
  %3710 = vmatpush.bf16.msra.mxu0 0
  %3711 = vmatpush.bf16.msra.mxu0 0
  %3712 = vmatpush.bf16.msra.mxu0 0
  %3713 = vmatpush.bf16.msra.mxu0 0
  %3714 = vmatpush.bf16.msra.mxu0 %v3625
  %3715 = vmatmul.bf16.gmra.mxu0 %v3630
  %v3716 = vpop.f32.mrf.mxu0
  %v3717 = vadd.f32 0.0, %v3716
  %v3718 = vpop.f32.mrf.mxu0
  %v3719 = vadd.f32 0.0, %v3718
  %3720 = vmatmul.bf16.gmra.mxu0 %v3633
  %v3721 = vpop.f32.mrf.mxu0
  %v3722 = vadd.f32 0.0, %v3721
  %v3723 = vpop.f32.mrf.mxu0
  %3724 = vdwg.mxu0
  %3725 = vmatpush.bf16.msra.mxu0 0
  %3726 = vmatpush.bf16.msra.mxu0 0
  %3727 = vmatpush.bf16.msra.mxu0 0
  %3728 = vmatpush.bf16.msra.mxu0 0
  %3729 = vmatpush.bf16.msra.mxu0 0
  %3730 = vmatpush.bf16.msra.mxu0 0
  %3731 = vmatpush.bf16.msra.mxu0 0
  %3732 = vmatpush.bf16.msra.mxu0 %v3626
  %3733 = vmatmul.bf16.gmra.mxu0 %v3630
  %v3734 = vpop.f32.mrf.mxu0
  %v3735 = vadd.f32 0.0, %v3734
  %v3736 = vpop.f32.mrf.mxu0
  %v3737 = vadd.f32 0.0, %v3736
  %3738 = vmatmul.bf16.gmra.mxu0 %v3633
  %v3739 = vpop.f32.mrf.mxu0
  %v3740 = vadd.f32 0.0, %v3739
  %v3741 = vpop.f32.mrf.mxu0
  %3742 = vdwg.mxu0
  %v3743 = vadd.f32 %v3591, %v3645
  %v3744 = vadd.f32 %v3592, %v3663
  %v3745 = vadd.f32 %v3593, %v3681
  %v3746 = vadd.f32 %v3594, %v3699
  %v3747 = vadd.f32 %v3595, %v3717
  %v3748 = vadd.f32 %v3596, %v3735
  %v3749 = vadd.f32 %v3597, %v3647
  %v3750 = vadd.f32 %v3598, %v3665
  %v3751 = vadd.f32 %v3599, %v3683
  %v3752 = vadd.f32 %v3600, %v3701
  %v3753 = vadd.f32 %v3601, %v3719
  %v3754 = vadd.f32 %v3602, %v3737
  %v3755 = vadd.f32 %v3603, %v3650
  %v3756 = vadd.f32 %v3604, %v3668
  %v3757 = vadd.f32 %v3605, %v3686
  %v3758 = vadd.f32 %v3606, %v3704
  %v3759 = vadd.f32 %v3607, %v3722
  %v3760 = vadd.f32 %v3608, %v3740
  %s3761 = scalar_lea.vmem %s3, 192
  %v3762 = vld [vmem:[%s3761] sm:$0xf]
  %v3763 = vld [vmem:[%s3761 + $0x4] sm:$0xf]
  %v3764 = vld [vmem:[%s3761 + $0x8] sm:$0xf]
  %v3768 = vunpack.c.l.b16 %v3762
  %v3769 = vunpack.c.l.b16 %v3763
  %v3770 = vunpack.c.l.b16 %v3764
  %v3771 = vpack.c.b16 %v3769, %v3768
  %v3772 = vpack.c.b16 %v3770, %v3770
  %3773 = vrot.lane.b32.xlu0 %v1141, 88
  %v3774 = vpop.permute.xlu0 %3773
  %3775 = vrot.lane.b32.xlu0 %v1142, 88
  %v3776 = vpop.permute.xlu0 %3775
  %3777 = vrot.lane.b32.xlu0 %v1143, 88
  %v3778 = vpop.permute.xlu0 %3777
  %3779 = vrot.lane.b32.xlu0 %v1144, 88
  %v3780 = vpop.permute.xlu0 %3779
  %3781 = vrot.lane.b32.xlu0 %v1145, 88
  %v3782 = vpop.permute.xlu0 %3781
  %3783 = vrot.lane.b32.xlu0 %v1146, 88
  %v3784 = vpop.permute.xlu0 %3783
  %3785 = vrot.lane.b32.xlu0 %v1147, 88
  %v3786 = vpop.permute.xlu0 %3785
  %vm3787 = vcmask 719872
  %v3788 = vsel %vm3787, %v3774, %v3776
  %v3789 = vsel %vm3787, %v3776, %v3778
  %v3790 = vsel %vm3787, %v3778, %v3780
  %v3791 = vsel %vm3787, %v3780, %v3782
  %v3792 = vsel %vm3787, %v3782, %v3784
  %v3793 = vsel %vm3787, %v3784, %v3786
  %v3801 = vsel %vm1199, %v3771, 0
  %v3804 = vsel %vm1199, %v3772, 0
  %3806 = vmatpush.bf16.msra.mxu0 0
  %3807 = vmatpush.bf16.msra.mxu0 0
  %3808 = vmatpush.bf16.msra.mxu0 0
  %3809 = vmatpush.bf16.msra.mxu0 0
  %3810 = vmatpush.bf16.msra.mxu0 0
  %3811 = vmatpush.bf16.msra.mxu0 0
  %3812 = vmatpush.bf16.msra.mxu0 0
  %3813 = vmatpush.bf16.msra.mxu0 %v3788
  %3814 = vmatmul.bf16.gmra.mxu0 %v3801
  %v3815 = vpop.f32.mrf.mxu0
  %v3816 = vadd.f32 0.0, %v3815
  %v3817 = vpop.f32.mrf.mxu0
  %v3818 = vadd.f32 0.0, %v3817
  %3819 = vmatmul.bf16.gmra.mxu0 %v3804
  %v3820 = vpop.f32.mrf.mxu0
  %v3821 = vadd.f32 0.0, %v3820
  %v3822 = vpop.f32.mrf.mxu0
  %3823 = vdwg.mxu0
  %3824 = vmatpush.bf16.msra.mxu0 0
  %3825 = vmatpush.bf16.msra.mxu0 0
  %3826 = vmatpush.bf16.msra.mxu0 0
  %3827 = vmatpush.bf16.msra.mxu0 0
  %3828 = vmatpush.bf16.msra.mxu0 0
  %3829 = vmatpush.bf16.msra.mxu0 0
  %3830 = vmatpush.bf16.msra.mxu0 0
  %3831 = vmatpush.bf16.msra.mxu0 %v3789
  %3832 = vmatmul.bf16.gmra.mxu0 %v3801
  %v3833 = vpop.f32.mrf.mxu0
  %v3834 = vadd.f32 0.0, %v3833
  %v3835 = vpop.f32.mrf.mxu0
  %v3836 = vadd.f32 0.0, %v3835
  %3837 = vmatmul.bf16.gmra.mxu0 %v3804
  %v3838 = vpop.f32.mrf.mxu0
  %v3839 = vadd.f32 0.0, %v3838
  %v3840 = vpop.f32.mrf.mxu0
  %3841 = vdwg.mxu0
  %3842 = vmatpush.bf16.msra.mxu0 0
  %3843 = vmatpush.bf16.msra.mxu0 0
  %3844 = vmatpush.bf16.msra.mxu0 0
  %3845 = vmatpush.bf16.msra.mxu0 0
  %3846 = vmatpush.bf16.msra.mxu0 0
  %3847 = vmatpush.bf16.msra.mxu0 0
  %3848 = vmatpush.bf16.msra.mxu0 0
  %3849 = vmatpush.bf16.msra.mxu0 %v3790
  %3850 = vmatmul.bf16.gmra.mxu0 %v3801
  %v3851 = vpop.f32.mrf.mxu0
  %v3852 = vadd.f32 0.0, %v3851
  %v3853 = vpop.f32.mrf.mxu0
  %v3854 = vadd.f32 0.0, %v3853
  %3855 = vmatmul.bf16.gmra.mxu0 %v3804
  %v3856 = vpop.f32.mrf.mxu0
  %v3857 = vadd.f32 0.0, %v3856
  %v3858 = vpop.f32.mrf.mxu0
  %3859 = vdwg.mxu0
  %3860 = vmatpush.bf16.msra.mxu0 0
  %3861 = vmatpush.bf16.msra.mxu0 0
  %3862 = vmatpush.bf16.msra.mxu0 0
  %3863 = vmatpush.bf16.msra.mxu0 0
  %3864 = vmatpush.bf16.msra.mxu0 0
  %3865 = vmatpush.bf16.msra.mxu0 0
  %3866 = vmatpush.bf16.msra.mxu0 0
  %3867 = vmatpush.bf16.msra.mxu0 %v3791
  %3868 = vmatmul.bf16.gmra.mxu0 %v3801
  %v3869 = vpop.f32.mrf.mxu0
  %v3870 = vadd.f32 0.0, %v3869
  %v3871 = vpop.f32.mrf.mxu0
  %v3872 = vadd.f32 0.0, %v3871
  %3873 = vmatmul.bf16.gmra.mxu0 %v3804
  %v3874 = vpop.f32.mrf.mxu0
  %v3875 = vadd.f32 0.0, %v3874
  %v3876 = vpop.f32.mrf.mxu0
  %3877 = vdwg.mxu0
  %3878 = vmatpush.bf16.msra.mxu0 0
  %3879 = vmatpush.bf16.msra.mxu0 0
  %3880 = vmatpush.bf16.msra.mxu0 0
  %3881 = vmatpush.bf16.msra.mxu0 0
  %3882 = vmatpush.bf16.msra.mxu0 0
  %3883 = vmatpush.bf16.msra.mxu0 0
  %3884 = vmatpush.bf16.msra.mxu0 0
  %3885 = vmatpush.bf16.msra.mxu0 %v3792
  %3886 = vmatmul.bf16.gmra.mxu0 %v3801
  %v3887 = vpop.f32.mrf.mxu0
  %v3888 = vadd.f32 0.0, %v3887
  %v3889 = vpop.f32.mrf.mxu0
  %v3890 = vadd.f32 0.0, %v3889
  %3891 = vmatmul.bf16.gmra.mxu0 %v3804
  %v3892 = vpop.f32.mrf.mxu0
  %v3893 = vadd.f32 0.0, %v3892
  %v3894 = vpop.f32.mrf.mxu0
  %3895 = vdwg.mxu0
  %3896 = vmatpush.bf16.msra.mxu0 0
  %3897 = vmatpush.bf16.msra.mxu0 0
  %3898 = vmatpush.bf16.msra.mxu0 0
  %3899 = vmatpush.bf16.msra.mxu0 0
  %3900 = vmatpush.bf16.msra.mxu0 0
  %3901 = vmatpush.bf16.msra.mxu0 0
  %3902 = vmatpush.bf16.msra.mxu0 0
  %3903 = vmatpush.bf16.msra.mxu0 %v3793
  %3904 = vmatmul.bf16.gmra.mxu0 %v3801
  %v3905 = vpop.f32.mrf.mxu0
  %v3906 = vadd.f32 0.0, %v3905
  %v3907 = vpop.f32.mrf.mxu0
  %v3908 = vadd.f32 0.0, %v3907
  %3909 = vmatmul.bf16.gmra.mxu0 %v3804
  %v3910 = vpop.f32.mrf.mxu0
  %v3911 = vadd.f32 0.0, %v3910
  %v3912 = vpop.f32.mrf.mxu0
  %3913 = vdwg.mxu0
  %v3914 = vadd.f32 %v3743, %v3816
  %v3915 = vadd.f32 %v3744, %v3834
  %v3916 = vadd.f32 %v3745, %v3852
  %v3917 = vadd.f32 %v3746, %v3870
  %v3918 = vadd.f32 %v3747, %v3888
  %v3919 = vadd.f32 %v3748, %v3906
  %v3920 = vadd.f32 %v3749, %v3818
  %v3921 = vadd.f32 %v3750, %v3836
  %v3922 = vadd.f32 %v3751, %v3854
  %v3923 = vadd.f32 %v3752, %v3872
  %v3924 = vadd.f32 %v3753, %v3890
  %v3925 = vadd.f32 %v3754, %v3908
  %v3926 = vadd.f32 %v3755, %v3821
  %v3927 = vadd.f32 %v3756, %v3839
  %v3928 = vadd.f32 %v3757, %v3857
  %v3929 = vadd.f32 %v3758, %v3875
  %v3930 = vadd.f32 %v3759, %v3893
  %v3931 = vadd.f32 %v3760, %v3911
  %s3932 = scalar_lea.vmem %s3, 204
  %v3933 = vld [vmem:[%s3932] sm:$0xf]
  %v3934 = vld [vmem:[%s3932 + $0x4] sm:$0xf]
  %v3935 = vld [vmem:[%s3932 + $0x8] sm:$0xf]
  %v3939 = vunpack.c.l.b16 %v3933
  %v3940 = vunpack.c.l.b16 %v3934
  %v3941 = vunpack.c.l.b16 %v3935
  %v3942 = vpack.c.b16 %v3940, %v3939
  %v3943 = vpack.c.b16 %v3941, %v3941
  %3944 = vrot.lane.b32.xlu0 %v1141, 80
  %v3945 = vpop.permute.xlu0 %3944
  %3946 = vrot.lane.b32.xlu0 %v1142, 80
  %v3947 = vpop.permute.xlu0 %3946
  %3948 = vrot.lane.b32.xlu0 %v1143, 80
  %v3949 = vpop.permute.xlu0 %3948
  %3950 = vrot.lane.b32.xlu0 %v1144, 80
  %v3951 = vpop.permute.xlu0 %3950
  %3952 = vrot.lane.b32.xlu0 %v1145, 80
  %v3953 = vpop.permute.xlu0 %3952
  %3954 = vrot.lane.b32.xlu0 %v1146, 80
  %v3955 = vpop.permute.xlu0 %3954
  %3956 = vrot.lane.b32.xlu0 %v1147, 80
  %v3957 = vpop.permute.xlu0 %3956
  %vm3958 = vcmask 654336
  %v3959 = vsel %vm3958, %v3945, %v3947
  %v3960 = vsel %vm3958, %v3947, %v3949
  %v3961 = vsel %vm3958, %v3949, %v3951
  %v3962 = vsel %vm3958, %v3951, %v3953
  %v3963 = vsel %vm3958, %v3953, %v3955
  %v3964 = vsel %vm3958, %v3955, %v3957
  %v3972 = vsel %vm1199, %v3942, 0
  %v3975 = vsel %vm1199, %v3943, 0
  %3977 = vmatpush.bf16.msra.mxu0 0
  %3978 = vmatpush.bf16.msra.mxu0 0
  %3979 = vmatpush.bf16.msra.mxu0 0
  %3980 = vmatpush.bf16.msra.mxu0 0
  %3981 = vmatpush.bf16.msra.mxu0 0
  %3982 = vmatpush.bf16.msra.mxu0 0
  %3983 = vmatpush.bf16.msra.mxu0 0
  %3984 = vmatpush.bf16.msra.mxu0 %v3959
  %3985 = vmatmul.bf16.gmra.mxu0 %v3972
  %v3986 = vpop.f32.mrf.mxu0
  %v3987 = vadd.f32 0.0, %v3986
  %v3988 = vpop.f32.mrf.mxu0
  %v3989 = vadd.f32 0.0, %v3988
  %3990 = vmatmul.bf16.gmra.mxu0 %v3975
  %v3991 = vpop.f32.mrf.mxu0
  %v3992 = vadd.f32 0.0, %v3991
  %v3993 = vpop.f32.mrf.mxu0
  %3994 = vdwg.mxu0
  %3995 = vmatpush.bf16.msra.mxu0 0
  %3996 = vmatpush.bf16.msra.mxu0 0
  %3997 = vmatpush.bf16.msra.mxu0 0
  %3998 = vmatpush.bf16.msra.mxu0 0
  %3999 = vmatpush.bf16.msra.mxu0 0
  %4000 = vmatpush.bf16.msra.mxu0 0
  %4001 = vmatpush.bf16.msra.mxu0 0
  %4002 = vmatpush.bf16.msra.mxu0 %v3960
  %4003 = vmatmul.bf16.gmra.mxu0 %v3972
  %v4004 = vpop.f32.mrf.mxu0
  %v4005 = vadd.f32 0.0, %v4004
  %v4006 = vpop.f32.mrf.mxu0
  %v4007 = vadd.f32 0.0, %v4006
  %4008 = vmatmul.bf16.gmra.mxu0 %v3975
  %v4009 = vpop.f32.mrf.mxu0
  %v4010 = vadd.f32 0.0, %v4009
  %v4011 = vpop.f32.mrf.mxu0
  %4012 = vdwg.mxu0
  %4013 = vmatpush.bf16.msra.mxu0 0
  %4014 = vmatpush.bf16.msra.mxu0 0
  %4015 = vmatpush.bf16.msra.mxu0 0
  %4016 = vmatpush.bf16.msra.mxu0 0
  %4017 = vmatpush.bf16.msra.mxu0 0
  %4018 = vmatpush.bf16.msra.mxu0 0
  %4019 = vmatpush.bf16.msra.mxu0 0
  %4020 = vmatpush.bf16.msra.mxu0 %v3961
  %4021 = vmatmul.bf16.gmra.mxu0 %v3972
  %v4022 = vpop.f32.mrf.mxu0
  %v4023 = vadd.f32 0.0, %v4022
  %v4024 = vpop.f32.mrf.mxu0
  %v4025 = vadd.f32 0.0, %v4024
  %4026 = vmatmul.bf16.gmra.mxu0 %v3975
  %v4027 = vpop.f32.mrf.mxu0
  %v4028 = vadd.f32 0.0, %v4027
  %v4029 = vpop.f32.mrf.mxu0
  %4030 = vdwg.mxu0
  %4031 = vmatpush.bf16.msra.mxu0 0
  %4032 = vmatpush.bf16.msra.mxu0 0
  %4033 = vmatpush.bf16.msra.mxu0 0
  %4034 = vmatpush.bf16.msra.mxu0 0
  %4035 = vmatpush.bf16.msra.mxu0 0
  %4036 = vmatpush.bf16.msra.mxu0 0
  %4037 = vmatpush.bf16.msra.mxu0 0
  %4038 = vmatpush.bf16.msra.mxu0 %v3962
  %4039 = vmatmul.bf16.gmra.mxu0 %v3972
  %v4040 = vpop.f32.mrf.mxu0
  %v4041 = vadd.f32 0.0, %v4040
  %v4042 = vpop.f32.mrf.mxu0
  %v4043 = vadd.f32 0.0, %v4042
  %4044 = vmatmul.bf16.gmra.mxu0 %v3975
  %v4045 = vpop.f32.mrf.mxu0
  %v4046 = vadd.f32 0.0, %v4045
  %v4047 = vpop.f32.mrf.mxu0
  %4048 = vdwg.mxu0
  %4049 = vmatpush.bf16.msra.mxu0 0
  %4050 = vmatpush.bf16.msra.mxu0 0
  %4051 = vmatpush.bf16.msra.mxu0 0
  %4052 = vmatpush.bf16.msra.mxu0 0
  %4053 = vmatpush.bf16.msra.mxu0 0
  %4054 = vmatpush.bf16.msra.mxu0 0
  %4055 = vmatpush.bf16.msra.mxu0 0
  %4056 = vmatpush.bf16.msra.mxu0 %v3963
  %4057 = vmatmul.bf16.gmra.mxu0 %v3972
  %v4058 = vpop.f32.mrf.mxu0
  %v4059 = vadd.f32 0.0, %v4058
  %v4060 = vpop.f32.mrf.mxu0
  %v4061 = vadd.f32 0.0, %v4060
  %4062 = vmatmul.bf16.gmra.mxu0 %v3975
  %v4063 = vpop.f32.mrf.mxu0
  %v4064 = vadd.f32 0.0, %v4063
  %v4065 = vpop.f32.mrf.mxu0
  %4066 = vdwg.mxu0
  %4067 = vmatpush.bf16.msra.mxu0 0
  %4068 = vmatpush.bf16.msra.mxu0 0
  %4069 = vmatpush.bf16.msra.mxu0 0
  %4070 = vmatpush.bf16.msra.mxu0 0
  %4071 = vmatpush.bf16.msra.mxu0 0
  %4072 = vmatpush.bf16.msra.mxu0 0
  %4073 = vmatpush.bf16.msra.mxu0 0
  %4074 = vmatpush.bf16.msra.mxu0 %v3964
  %4075 = vmatmul.bf16.gmra.mxu0 %v3972
  %v4076 = vpop.f32.mrf.mxu0
  %v4077 = vadd.f32 0.0, %v4076
  %v4078 = vpop.f32.mrf.mxu0
  %v4079 = vadd.f32 0.0, %v4078
  %4080 = vmatmul.bf16.gmra.mxu0 %v3975
  %v4081 = vpop.f32.mrf.mxu0
  %v4082 = vadd.f32 0.0, %v4081
  %v4083 = vpop.f32.mrf.mxu0
  %4084 = vdwg.mxu0
  %v4085 = vadd.f32 %v3914, %v3987
  %v4086 = vadd.f32 %v3915, %v4005
  %v4087 = vadd.f32 %v3916, %v4023
  %v4088 = vadd.f32 %v3917, %v4041
  %v4089 = vadd.f32 %v3918, %v4059
  %v4090 = vadd.f32 %v3919, %v4077
  %v4091 = vadd.f32 %v3920, %v3989
  %v4092 = vadd.f32 %v3921, %v4007
  %v4093 = vadd.f32 %v3922, %v4025
  %v4094 = vadd.f32 %v3923, %v4043
  %v4095 = vadd.f32 %v3924, %v4061
  %v4096 = vadd.f32 %v3925, %v4079
  %v4097 = vadd.f32 %v3926, %v3992
  %v4098 = vadd.f32 %v3927, %v4010
  %v4099 = vadd.f32 %v3928, %v4028
  %v4100 = vadd.f32 %v3929, %v4046
  %v4101 = vadd.f32 %v3930, %v4064
  %v4102 = vadd.f32 %v3931, %v4082
  %s4103 = scalar_lea.vmem %s3, 216
  %v4104 = vld [vmem:[%s4103] sm:$0xf]
  %v4105 = vld [vmem:[%s4103 + $0x4] sm:$0xf]
  %v4106 = vld [vmem:[%s4103 + $0x8] sm:$0xf]
  %v4110 = vunpack.c.l.b16 %v4104
  %v4111 = vunpack.c.l.b16 %v4105
  %v4112 = vunpack.c.l.b16 %v4106
  %v4113 = vpack.c.b16 %v4111, %v4110
  %v4114 = vpack.c.b16 %v4112, %v4112
  %4115 = vrot.lane.b32.xlu0 %v1141, 72
  %v4116 = vpop.permute.xlu0 %4115
  %4117 = vrot.lane.b32.xlu0 %v1142, 72
  %v4118 = vpop.permute.xlu0 %4117
  %4119 = vrot.lane.b32.xlu0 %v1143, 72
  %v4120 = vpop.permute.xlu0 %4119
  %4121 = vrot.lane.b32.xlu0 %v1144, 72
  %v4122 = vpop.permute.xlu0 %4121
  %4123 = vrot.lane.b32.xlu0 %v1145, 72
  %v4124 = vpop.permute.xlu0 %4123
  %4125 = vrot.lane.b32.xlu0 %v1146, 72
  %v4126 = vpop.permute.xlu0 %4125
  %4127 = vrot.lane.b32.xlu0 %v1147, 72
  %v4128 = vpop.permute.xlu0 %4127
  %vm4129 = vcmask 588800
  %v4130 = vsel %vm4129, %v4116, %v4118
  %v4131 = vsel %vm4129, %v4118, %v4120
  %v4132 = vsel %vm4129, %v4120, %v4122
  %v4133 = vsel %vm4129, %v4122, %v4124
  %v4134 = vsel %vm4129, %v4124, %v4126
  %v4135 = vsel %vm4129, %v4126, %v4128
  %v4143 = vsel %vm1199, %v4113, 0
  %v4146 = vsel %vm1199, %v4114, 0
  %4148 = vmatpush.bf16.msra.mxu0 0
  %4149 = vmatpush.bf16.msra.mxu0 0
  %4150 = vmatpush.bf16.msra.mxu0 0
  %4151 = vmatpush.bf16.msra.mxu0 0
  %4152 = vmatpush.bf16.msra.mxu0 0
  %4153 = vmatpush.bf16.msra.mxu0 0
  %4154 = vmatpush.bf16.msra.mxu0 0
  %4155 = vmatpush.bf16.msra.mxu0 %v4130
  %4156 = vmatmul.bf16.gmra.mxu0 %v4143
  %v4157 = vpop.f32.mrf.mxu0
  %v4158 = vadd.f32 0.0, %v4157
  %v4159 = vpop.f32.mrf.mxu0
  %v4160 = vadd.f32 0.0, %v4159
  %4161 = vmatmul.bf16.gmra.mxu0 %v4146
  %v4162 = vpop.f32.mrf.mxu0
  %v4163 = vadd.f32 0.0, %v4162
  %v4164 = vpop.f32.mrf.mxu0
  %4165 = vdwg.mxu0
  %4166 = vmatpush.bf16.msra.mxu0 0
  %4167 = vmatpush.bf16.msra.mxu0 0
  %4168 = vmatpush.bf16.msra.mxu0 0
  %4169 = vmatpush.bf16.msra.mxu0 0
  %4170 = vmatpush.bf16.msra.mxu0 0
  %4171 = vmatpush.bf16.msra.mxu0 0
  %4172 = vmatpush.bf16.msra.mxu0 0
  %4173 = vmatpush.bf16.msra.mxu0 %v4131
  %4174 = vmatmul.bf16.gmra.mxu0 %v4143
  %v4175 = vpop.f32.mrf.mxu0
  %v4176 = vadd.f32 0.0, %v4175
  %v4177 = vpop.f32.mrf.mxu0
  %v4178 = vadd.f32 0.0, %v4177
  %4179 = vmatmul.bf16.gmra.mxu0 %v4146
  %v4180 = vpop.f32.mrf.mxu0
  %v4181 = vadd.f32 0.0, %v4180
  %v4182 = vpop.f32.mrf.mxu0
  %4183 = vdwg.mxu0
  %4184 = vmatpush.bf16.msra.mxu0 0
  %4185 = vmatpush.bf16.msra.mxu0 0
  %4186 = vmatpush.bf16.msra.mxu0 0
  %4187 = vmatpush.bf16.msra.mxu0 0
  %4188 = vmatpush.bf16.msra.mxu0 0
  %4189 = vmatpush.bf16.msra.mxu0 0
  %4190 = vmatpush.bf16.msra.mxu0 0
  %4191 = vmatpush.bf16.msra.mxu0 %v4132
  %4192 = vmatmul.bf16.gmra.mxu0 %v4143
  %v4193 = vpop.f32.mrf.mxu0
  %v4194 = vadd.f32 0.0, %v4193
  %v4195 = vpop.f32.mrf.mxu0
  %v4196 = vadd.f32 0.0, %v4195
  %4197 = vmatmul.bf16.gmra.mxu0 %v4146
  %v4198 = vpop.f32.mrf.mxu0
  %v4199 = vadd.f32 0.0, %v4198
  %v4200 = vpop.f32.mrf.mxu0
  %4201 = vdwg.mxu0
  %4202 = vmatpush.bf16.msra.mxu0 0
  %4203 = vmatpush.bf16.msra.mxu0 0
  %4204 = vmatpush.bf16.msra.mxu0 0
  %4205 = vmatpush.bf16.msra.mxu0 0
  %4206 = vmatpush.bf16.msra.mxu0 0
  %4207 = vmatpush.bf16.msra.mxu0 0
  %4208 = vmatpush.bf16.msra.mxu0 0
  %4209 = vmatpush.bf16.msra.mxu0 %v4133
  %4210 = vmatmul.bf16.gmra.mxu0 %v4143
  %v4211 = vpop.f32.mrf.mxu0
  %v4212 = vadd.f32 0.0, %v4211
  %v4213 = vpop.f32.mrf.mxu0
  %v4214 = vadd.f32 0.0, %v4213
  %4215 = vmatmul.bf16.gmra.mxu0 %v4146
  %v4216 = vpop.f32.mrf.mxu0
  %v4217 = vadd.f32 0.0, %v4216
  %v4218 = vpop.f32.mrf.mxu0
  %4219 = vdwg.mxu0
  %4220 = vmatpush.bf16.msra.mxu0 0
  %4221 = vmatpush.bf16.msra.mxu0 0
  %4222 = vmatpush.bf16.msra.mxu0 0
  %4223 = vmatpush.bf16.msra.mxu0 0
  %4224 = vmatpush.bf16.msra.mxu0 0
  %4225 = vmatpush.bf16.msra.mxu0 0
  %4226 = vmatpush.bf16.msra.mxu0 0
  %4227 = vmatpush.bf16.msra.mxu0 %v4134
  %4228 = vmatmul.bf16.gmra.mxu0 %v4143
  %v4229 = vpop.f32.mrf.mxu0
  %v4230 = vadd.f32 0.0, %v4229
  %v4231 = vpop.f32.mrf.mxu0
  %v4232 = vadd.f32 0.0, %v4231
  %4233 = vmatmul.bf16.gmra.mxu0 %v4146
  %v4234 = vpop.f32.mrf.mxu0
  %v4235 = vadd.f32 0.0, %v4234
  %v4236 = vpop.f32.mrf.mxu0
  %4237 = vdwg.mxu0
  %4238 = vmatpush.bf16.msra.mxu0 0
  %4239 = vmatpush.bf16.msra.mxu0 0
  %4240 = vmatpush.bf16.msra.mxu0 0
  %4241 = vmatpush.bf16.msra.mxu0 0
  %4242 = vmatpush.bf16.msra.mxu0 0
  %4243 = vmatpush.bf16.msra.mxu0 0
  %4244 = vmatpush.bf16.msra.mxu0 0
  %4245 = vmatpush.bf16.msra.mxu0 %v4135
  %4246 = vmatmul.bf16.gmra.mxu0 %v4143
  %v4247 = vpop.f32.mrf.mxu0
  %v4248 = vadd.f32 0.0, %v4247
  %v4249 = vpop.f32.mrf.mxu0
  %v4250 = vadd.f32 0.0, %v4249
  %4251 = vmatmul.bf16.gmra.mxu0 %v4146
  %v4252 = vpop.f32.mrf.mxu0
  %v4253 = vadd.f32 0.0, %v4252
  %v4254 = vpop.f32.mrf.mxu0
  %4255 = vdwg.mxu0
  %v4256 = vadd.f32 %v4085, %v4158
  %v4257 = vadd.f32 %v4086, %v4176
  %v4258 = vadd.f32 %v4087, %v4194
  %v4259 = vadd.f32 %v4088, %v4212
  %v4260 = vadd.f32 %v4089, %v4230
  %v4261 = vadd.f32 %v4090, %v4248
  %v4262 = vadd.f32 %v4091, %v4160
  %v4263 = vadd.f32 %v4092, %v4178
  %v4264 = vadd.f32 %v4093, %v4196
  %v4265 = vadd.f32 %v4094, %v4214
  %v4266 = vadd.f32 %v4095, %v4232
  %v4267 = vadd.f32 %v4096, %v4250
  %v4268 = vadd.f32 %v4097, %v4163
  %v4269 = vadd.f32 %v4098, %v4181
  %v4270 = vadd.f32 %v4099, %v4199
  %v4271 = vadd.f32 %v4100, %v4217
  %v4272 = vadd.f32 %v4101, %v4235
  %v4273 = vadd.f32 %v4102, %v4253
  %s4274 = scalar_lea.vmem %s3, 228
  %v4275 = vld [vmem:[%s4274] sm:$0xf]
  %v4276 = vld [vmem:[%s4274 + $0x4] sm:$0xf]
  %v4277 = vld [vmem:[%s4274 + $0x8] sm:$0xf]
  %v4281 = vunpack.c.l.b16 %v4275
  %v4282 = vunpack.c.l.b16 %v4276
  %v4283 = vunpack.c.l.b16 %v4277
  %v4284 = vpack.c.b16 %v4282, %v4281
  %v4285 = vpack.c.b16 %v4283, %v4283
  %4286 = vrot.lane.b32.xlu0 %v1147, 64
  %v4287 = vpop.permute.xlu0 %4286
  %v4288 = vsel %vm2803, %v2802, %v4287
  %v4291 = vsel %vm1199, %v4284, 0
  %v4294 = vsel %vm1199, %v4285, 0
  %4296 = vmatpush.bf16.msra.mxu0 0
  %4297 = vmatpush.bf16.msra.mxu0 0
  %4298 = vmatpush.bf16.msra.mxu0 0
  %4299 = vmatpush.bf16.msra.mxu0 0
  %4300 = vmatpush.bf16.msra.mxu0 0
  %4301 = vmatpush.bf16.msra.mxu0 0
  %4302 = vmatpush.bf16.msra.mxu0 0
  %4303 = vmatpush.bf16.msra.mxu0 %v2805
  %4304 = vmatmul.bf16.gmra.mxu0 %v4291
  %v4305 = vpop.f32.mrf.mxu0
  %v4306 = vadd.f32 0.0, %v4305
  %v4307 = vpop.f32.mrf.mxu0
  %v4308 = vadd.f32 0.0, %v4307
  %4309 = vmatmul.bf16.gmra.mxu0 %v4294
  %v4310 = vpop.f32.mrf.mxu0
  %v4311 = vadd.f32 0.0, %v4310
  %v4312 = vpop.f32.mrf.mxu0
  %4313 = vdwg.mxu0
  %4314 = vmatpush.bf16.msra.mxu0 0
  %4315 = vmatpush.bf16.msra.mxu0 0
  %4316 = vmatpush.bf16.msra.mxu0 0
  %4317 = vmatpush.bf16.msra.mxu0 0
  %4318 = vmatpush.bf16.msra.mxu0 0
  %4319 = vmatpush.bf16.msra.mxu0 0
  %4320 = vmatpush.bf16.msra.mxu0 0
  %4321 = vmatpush.bf16.msra.mxu0 %v2806
  %4322 = vmatmul.bf16.gmra.mxu0 %v4291
  %v4323 = vpop.f32.mrf.mxu0
  %v4324 = vadd.f32 0.0, %v4323
  %v4325 = vpop.f32.mrf.mxu0
  %v4326 = vadd.f32 0.0, %v4325
  %4327 = vmatmul.bf16.gmra.mxu0 %v4294
  %v4328 = vpop.f32.mrf.mxu0
  %v4329 = vadd.f32 0.0, %v4328
  %v4330 = vpop.f32.mrf.mxu0
  %4331 = vdwg.mxu0
  %4332 = vmatpush.bf16.msra.mxu0 0
  %4333 = vmatpush.bf16.msra.mxu0 0
  %4334 = vmatpush.bf16.msra.mxu0 0
  %4335 = vmatpush.bf16.msra.mxu0 0
  %4336 = vmatpush.bf16.msra.mxu0 0
  %4337 = vmatpush.bf16.msra.mxu0 0
  %4338 = vmatpush.bf16.msra.mxu0 0
  %4339 = vmatpush.bf16.msra.mxu0 %v2807
  %4340 = vmatmul.bf16.gmra.mxu0 %v4291
  %v4341 = vpop.f32.mrf.mxu0
  %v4342 = vadd.f32 0.0, %v4341
  %v4343 = vpop.f32.mrf.mxu0
  %v4344 = vadd.f32 0.0, %v4343
  %4345 = vmatmul.bf16.gmra.mxu0 %v4294
  %v4346 = vpop.f32.mrf.mxu0
  %v4347 = vadd.f32 0.0, %v4346
  %v4348 = vpop.f32.mrf.mxu0
  %4349 = vdwg.mxu0
  %4350 = vmatpush.bf16.msra.mxu0 0
  %4351 = vmatpush.bf16.msra.mxu0 0
  %4352 = vmatpush.bf16.msra.mxu0 0
  %4353 = vmatpush.bf16.msra.mxu0 0
  %4354 = vmatpush.bf16.msra.mxu0 0
  %4355 = vmatpush.bf16.msra.mxu0 0
  %4356 = vmatpush.bf16.msra.mxu0 0
  %4357 = vmatpush.bf16.msra.mxu0 %v2808
  %4358 = vmatmul.bf16.gmra.mxu0 %v4291
  %v4359 = vpop.f32.mrf.mxu0
  %v4360 = vadd.f32 0.0, %v4359
  %v4361 = vpop.f32.mrf.mxu0
  %v4362 = vadd.f32 0.0, %v4361
  %4363 = vmatmul.bf16.gmra.mxu0 %v4294
  %v4364 = vpop.f32.mrf.mxu0
  %v4365 = vadd.f32 0.0, %v4364
  %v4366 = vpop.f32.mrf.mxu0
  %4367 = vdwg.mxu0
  %4368 = vmatpush.bf16.msra.mxu0 0
  %4369 = vmatpush.bf16.msra.mxu0 0
  %4370 = vmatpush.bf16.msra.mxu0 0
  %4371 = vmatpush.bf16.msra.mxu0 0
  %4372 = vmatpush.bf16.msra.mxu0 0
  %4373 = vmatpush.bf16.msra.mxu0 0
  %4374 = vmatpush.bf16.msra.mxu0 0
  %4375 = vmatpush.bf16.msra.mxu0 %v2809
  %4376 = vmatmul.bf16.gmra.mxu0 %v4291
  %v4377 = vpop.f32.mrf.mxu0
  %v4378 = vadd.f32 0.0, %v4377
  %v4379 = vpop.f32.mrf.mxu0
  %v4380 = vadd.f32 0.0, %v4379
  %4381 = vmatmul.bf16.gmra.mxu0 %v4294
  %v4382 = vpop.f32.mrf.mxu0
  %v4383 = vadd.f32 0.0, %v4382
  %v4384 = vpop.f32.mrf.mxu0
  %4385 = vdwg.mxu0
  %4386 = vmatpush.bf16.msra.mxu0 0
  %4387 = vmatpush.bf16.msra.mxu0 0
  %4388 = vmatpush.bf16.msra.mxu0 0
  %4389 = vmatpush.bf16.msra.mxu0 0
  %4390 = vmatpush.bf16.msra.mxu0 0
  %4391 = vmatpush.bf16.msra.mxu0 0
  %4392 = vmatpush.bf16.msra.mxu0 0
  %4393 = vmatpush.bf16.msra.mxu0 %v4288
  %4394 = vmatmul.bf16.gmra.mxu0 %v4291
  %v4395 = vpop.f32.mrf.mxu0
  %v4396 = vadd.f32 0.0, %v4395
  %v4397 = vpop.f32.mrf.mxu0
  %v4398 = vadd.f32 0.0, %v4397
  %4399 = vmatmul.bf16.gmra.mxu0 %v4294
  %v4400 = vpop.f32.mrf.mxu0
  %v4401 = vadd.f32 0.0, %v4400
  %v4402 = vpop.f32.mrf.mxu0
  %4403 = vdwg.mxu0
  %v4404 = vadd.f32 %v4256, %v4306
  %v4405 = vadd.f32 %v4257, %v4324
  %v4406 = vadd.f32 %v4258, %v4342
  %v4407 = vadd.f32 %v4259, %v4360
  %v4408 = vadd.f32 %v4260, %v4378
  %v4409 = vadd.f32 %v4261, %v4396
  %v4410 = vadd.f32 %v4262, %v4308
  %v4411 = vadd.f32 %v4263, %v4326
  %v4412 = vadd.f32 %v4264, %v4344
  %v4413 = vadd.f32 %v4265, %v4362
  %v4414 = vadd.f32 %v4266, %v4380
  %v4415 = vadd.f32 %v4267, %v4398
  %v4416 = vadd.f32 %v4268, %v4311
  %v4417 = vadd.f32 %v4269, %v4329
  %v4418 = vadd.f32 %v4270, %v4347
  %v4419 = vadd.f32 %v4271, %v4365
  %v4420 = vadd.f32 %v4272, %v4383
  %v4421 = vadd.f32 %v4273, %v4401
  %s4422 = scalar_lea.vmem %s3, 240
  %v4423 = vld [vmem:[%s4422] sm:$0xf]
  %v4424 = vld [vmem:[%s4422 + $0x4] sm:$0xf]
  %v4425 = vld [vmem:[%s4422 + $0x8] sm:$0xf]
  %v4429 = vunpack.c.l.b16 %v4423
  %v4430 = vunpack.c.l.b16 %v4424
  %v4431 = vunpack.c.l.b16 %v4425
  %v4432 = vpack.c.b16 %v4430, %v4429
  %v4433 = vpack.c.b16 %v4431, %v4431
  %v4435 = vsel %vm1199, %v4432, 0
  %v4438 = vsel %vm1199, %v4433, 0
  %4440 = vmatpush.bf16.msra.mxu0 0
  %4441 = vmatpush.bf16.msra.mxu0 0
  %4442 = vmatpush.bf16.msra.mxu0 0
  %4443 = vmatpush.bf16.msra.mxu0 0
  %4444 = vmatpush.bf16.msra.mxu0 0
  %4445 = vmatpush.bf16.msra.mxu0 0
  %4446 = vmatpush.bf16.msra.mxu0 0
  %4447 = vmatpush.bf16.msra.mxu0 %v1142
  %4448 = vmatmul.bf16.gmra.mxu0 %v4435
  %v4449 = vpop.f32.mrf.mxu0
  %v4450 = vadd.f32 0.0, %v4449
  %v4451 = vpop.f32.mrf.mxu0
  %v4452 = vadd.f32 0.0, %v4451
  %4453 = vmatmul.bf16.gmra.mxu0 %v4438
  %v4454 = vpop.f32.mrf.mxu0
  %v4455 = vadd.f32 0.0, %v4454
  %v4456 = vpop.f32.mrf.mxu0
  %4457 = vdwg.mxu0
  %4458 = vmatpush.bf16.msra.mxu0 0
  %4459 = vmatpush.bf16.msra.mxu0 0
  %4460 = vmatpush.bf16.msra.mxu0 0
  %4461 = vmatpush.bf16.msra.mxu0 0
  %4462 = vmatpush.bf16.msra.mxu0 0
  %4463 = vmatpush.bf16.msra.mxu0 0
  %4464 = vmatpush.bf16.msra.mxu0 0
  %4465 = vmatpush.bf16.msra.mxu0 %v1143
  %4466 = vmatmul.bf16.gmra.mxu0 %v4435
  %v4467 = vpop.f32.mrf.mxu0
  %v4468 = vadd.f32 0.0, %v4467
  %v4469 = vpop.f32.mrf.mxu0
  %v4470 = vadd.f32 0.0, %v4469
  %4471 = vmatmul.bf16.gmra.mxu0 %v4438
  %v4472 = vpop.f32.mrf.mxu0
  %v4473 = vadd.f32 0.0, %v4472
  %v4474 = vpop.f32.mrf.mxu0
  %4475 = vdwg.mxu0
  %4476 = vmatpush.bf16.msra.mxu0 0
  %4477 = vmatpush.bf16.msra.mxu0 0
  %4478 = vmatpush.bf16.msra.mxu0 0
  %4479 = vmatpush.bf16.msra.mxu0 0
  %4480 = vmatpush.bf16.msra.mxu0 0
  %4481 = vmatpush.bf16.msra.mxu0 0
  %4482 = vmatpush.bf16.msra.mxu0 0
  %4483 = vmatpush.bf16.msra.mxu0 %v1144
  %4484 = vmatmul.bf16.gmra.mxu0 %v4435
  %v4485 = vpop.f32.mrf.mxu0
  %v4486 = vadd.f32 0.0, %v4485
  %v4487 = vpop.f32.mrf.mxu0
  %v4488 = vadd.f32 0.0, %v4487
  %4489 = vmatmul.bf16.gmra.mxu0 %v4438
  %v4490 = vpop.f32.mrf.mxu0
  %v4491 = vadd.f32 0.0, %v4490
  %v4492 = vpop.f32.mrf.mxu0
  %4493 = vdwg.mxu0
  %4494 = vmatpush.bf16.msra.mxu0 0
  %4495 = vmatpush.bf16.msra.mxu0 0
  %4496 = vmatpush.bf16.msra.mxu0 0
  %4497 = vmatpush.bf16.msra.mxu0 0
  %4498 = vmatpush.bf16.msra.mxu0 0
  %4499 = vmatpush.bf16.msra.mxu0 0
  %4500 = vmatpush.bf16.msra.mxu0 0
  %4501 = vmatpush.bf16.msra.mxu0 %v1145
  %4502 = vmatmul.bf16.gmra.mxu0 %v4435
  %v4503 = vpop.f32.mrf.mxu0
  %v4504 = vadd.f32 0.0, %v4503
  %v4505 = vpop.f32.mrf.mxu0
  %v4506 = vadd.f32 0.0, %v4505
  %4507 = vmatmul.bf16.gmra.mxu0 %v4438
  %v4508 = vpop.f32.mrf.mxu0
  %v4509 = vadd.f32 0.0, %v4508
  %v4510 = vpop.f32.mrf.mxu0
  %4511 = vdwg.mxu0
  %4512 = vmatpush.bf16.msra.mxu0 0
  %4513 = vmatpush.bf16.msra.mxu0 0
  %4514 = vmatpush.bf16.msra.mxu0 0
  %4515 = vmatpush.bf16.msra.mxu0 0
  %4516 = vmatpush.bf16.msra.mxu0 0
  %4517 = vmatpush.bf16.msra.mxu0 0
  %4518 = vmatpush.bf16.msra.mxu0 0
  %4519 = vmatpush.bf16.msra.mxu0 %v1146
  %4520 = vmatmul.bf16.gmra.mxu0 %v4435
  %v4521 = vpop.f32.mrf.mxu0
  %v4522 = vadd.f32 0.0, %v4521
  %v4523 = vpop.f32.mrf.mxu0
  %v4524 = vadd.f32 0.0, %v4523
  %4525 = vmatmul.bf16.gmra.mxu0 %v4438
  %v4526 = vpop.f32.mrf.mxu0
  %v4527 = vadd.f32 0.0, %v4526
  %v4528 = vpop.f32.mrf.mxu0
  %4529 = vdwg.mxu0
  %4530 = vmatpush.bf16.msra.mxu0 0
  %4531 = vmatpush.bf16.msra.mxu0 0
  %4532 = vmatpush.bf16.msra.mxu0 0
  %4533 = vmatpush.bf16.msra.mxu0 0
  %4534 = vmatpush.bf16.msra.mxu0 0
  %4535 = vmatpush.bf16.msra.mxu0 0
  %4536 = vmatpush.bf16.msra.mxu0 0
  %4537 = vmatpush.bf16.msra.mxu0 %v1147
  %4538 = vmatmul.bf16.gmra.mxu0 %v4435
  %v4539 = vpop.f32.mrf.mxu0
  %v4540 = vadd.f32 0.0, %v4539
  %v4541 = vpop.f32.mrf.mxu0
  %v4542 = vadd.f32 0.0, %v4541
  %4543 = vmatmul.bf16.gmra.mxu0 %v4438
  %v4544 = vpop.f32.mrf.mxu0
  %v4545 = vadd.f32 0.0, %v4544
  %v4546 = vpop.f32.mrf.mxu0
  %4547 = vdwg.mxu0
  %v4548 = vadd.f32 %v4404, %v4450
  %v4549 = vadd.f32 %v4405, %v4468
  %v4550 = vadd.f32 %v4406, %v4486
  %v4551 = vadd.f32 %v4407, %v4504
  %v4552 = vadd.f32 %v4408, %v4522
  %v4553 = vadd.f32 %v4409, %v4540
  %v4554 = vadd.f32 %v4410, %v4452
  %v4555 = vadd.f32 %v4411, %v4470
  %v4556 = vadd.f32 %v4412, %v4488
  %v4557 = vadd.f32 %v4413, %v4506
  %v4558 = vadd.f32 %v4414, %v4524
  %v4559 = vadd.f32 %v4415, %v4542
  %v4560 = vadd.f32 %v4416, %v4455
  %v4561 = vadd.f32 %v4417, %v4473
  %v4562 = vadd.f32 %v4418, %v4491
  %v4563 = vadd.f32 %v4419, %v4509
  %v4564 = vadd.f32 %v4420, %v4527
  %v4565 = vadd.f32 %v4421, %v4545
  %s4566 = scalar_lea.vmem %s3, 252
  %v4567 = vld [vmem:[%s4566] sm:$0xf]
  %v4568 = vld [vmem:[%s4566 + $0x4] sm:$0xf]
  %v4569 = vld [vmem:[%s4566 + $0x8] sm:$0xf]
  %v4573 = vunpack.c.l.b16 %v4567
  %v4574 = vunpack.c.l.b16 %v4568
  %v4575 = vunpack.c.l.b16 %v4569
  %v4576 = vpack.c.b16 %v4574, %v4573
  %v4577 = vpack.c.b16 %v4575, %v4575
  %4579 = vrot.lane.b32.xlu0 %v1146, 120
  %v4580 = vpop.permute.xlu0 %4579
  %4581 = vrot.lane.b32.xlu0 %v1147, 120
  %v4582 = vpop.permute.xlu0 %4581
  %4583 = vrot.lane.b32.xlu0 0, 120
  %v4584 = vpop.permute.xlu0 %4583
  %v4585 = vsel %vm1186, %v1185, %v4580
  %v4586 = vsel %vm1186, %v4580, %v4582
  %v4587 = vsel %vm1186, %v4582, %v4584
  %v4592 = vsel %vm1199, %v4576, 0
  %v4595 = vsel %vm1199, %v4577, 0
  %4597 = vmatpush.bf16.msra.mxu0 0
  %4598 = vmatpush.bf16.msra.mxu0 0
  %4599 = vmatpush.bf16.msra.mxu0 0
  %4600 = vmatpush.bf16.msra.mxu0 0
  %4601 = vmatpush.bf16.msra.mxu0 0
  %4602 = vmatpush.bf16.msra.mxu0 0
  %4603 = vmatpush.bf16.msra.mxu0 0
  %4604 = vmatpush.bf16.msra.mxu0 %v1190
  %4605 = vmatmul.bf16.gmra.mxu0 %v4592
  %v4606 = vpop.f32.mrf.mxu0
  %v4607 = vadd.f32 0.0, %v4606
  %v4608 = vpop.f32.mrf.mxu0
  %v4609 = vadd.f32 0.0, %v4608
  %4610 = vmatmul.bf16.gmra.mxu0 %v4595
  %v4611 = vpop.f32.mrf.mxu0
  %v4612 = vadd.f32 0.0, %v4611
  %v4613 = vpop.f32.mrf.mxu0
  %4614 = vdwg.mxu0
  %4615 = vmatpush.bf16.msra.mxu0 0
  %4616 = vmatpush.bf16.msra.mxu0 0
  %4617 = vmatpush.bf16.msra.mxu0 0
  %4618 = vmatpush.bf16.msra.mxu0 0
  %4619 = vmatpush.bf16.msra.mxu0 0
  %4620 = vmatpush.bf16.msra.mxu0 0
  %4621 = vmatpush.bf16.msra.mxu0 0
  %4622 = vmatpush.bf16.msra.mxu0 %v1191
  %4623 = vmatmul.bf16.gmra.mxu0 %v4592
  %v4624 = vpop.f32.mrf.mxu0
  %v4625 = vadd.f32 0.0, %v4624
  %v4626 = vpop.f32.mrf.mxu0
  %v4627 = vadd.f32 0.0, %v4626
  %4628 = vmatmul.bf16.gmra.mxu0 %v4595
  %v4629 = vpop.f32.mrf.mxu0
  %v4630 = vadd.f32 0.0, %v4629
  %v4631 = vpop.f32.mrf.mxu0
  %4632 = vdwg.mxu0
  %4633 = vmatpush.bf16.msra.mxu0 0
  %4634 = vmatpush.bf16.msra.mxu0 0
  %4635 = vmatpush.bf16.msra.mxu0 0
  %4636 = vmatpush.bf16.msra.mxu0 0
  %4637 = vmatpush.bf16.msra.mxu0 0
  %4638 = vmatpush.bf16.msra.mxu0 0
  %4639 = vmatpush.bf16.msra.mxu0 0
  %4640 = vmatpush.bf16.msra.mxu0 %v1192
  %4641 = vmatmul.bf16.gmra.mxu0 %v4592
  %v4642 = vpop.f32.mrf.mxu0
  %v4643 = vadd.f32 0.0, %v4642
  %v4644 = vpop.f32.mrf.mxu0
  %v4645 = vadd.f32 0.0, %v4644
  %4646 = vmatmul.bf16.gmra.mxu0 %v4595
  %v4647 = vpop.f32.mrf.mxu0
  %v4648 = vadd.f32 0.0, %v4647
  %v4649 = vpop.f32.mrf.mxu0
  %4650 = vdwg.mxu0
  %4651 = vmatpush.bf16.msra.mxu0 0
  %4652 = vmatpush.bf16.msra.mxu0 0
  %4653 = vmatpush.bf16.msra.mxu0 0
  %4654 = vmatpush.bf16.msra.mxu0 0
  %4655 = vmatpush.bf16.msra.mxu0 0
  %4656 = vmatpush.bf16.msra.mxu0 0
  %4657 = vmatpush.bf16.msra.mxu0 0
  %4658 = vmatpush.bf16.msra.mxu0 %v4585
  %4659 = vmatmul.bf16.gmra.mxu0 %v4592
  %v4660 = vpop.f32.mrf.mxu0
  %v4661 = vadd.f32 0.0, %v4660
  %v4662 = vpop.f32.mrf.mxu0
  %v4663 = vadd.f32 0.0, %v4662
  %4664 = vmatmul.bf16.gmra.mxu0 %v4595
  %v4665 = vpop.f32.mrf.mxu0
  %v4666 = vadd.f32 0.0, %v4665
  %v4667 = vpop.f32.mrf.mxu0
  %4668 = vdwg.mxu0
  %4669 = vmatpush.bf16.msra.mxu0 0
  %4670 = vmatpush.bf16.msra.mxu0 0
  %4671 = vmatpush.bf16.msra.mxu0 0
  %4672 = vmatpush.bf16.msra.mxu0 0
  %4673 = vmatpush.bf16.msra.mxu0 0
  %4674 = vmatpush.bf16.msra.mxu0 0
  %4675 = vmatpush.bf16.msra.mxu0 0
  %4676 = vmatpush.bf16.msra.mxu0 %v4586
  %4677 = vmatmul.bf16.gmra.mxu0 %v4592
  %v4678 = vpop.f32.mrf.mxu0
  %v4679 = vadd.f32 0.0, %v4678
  %v4680 = vpop.f32.mrf.mxu0
  %v4681 = vadd.f32 0.0, %v4680
  %4682 = vmatmul.bf16.gmra.mxu0 %v4595
  %v4683 = vpop.f32.mrf.mxu0
  %v4684 = vadd.f32 0.0, %v4683
  %v4685 = vpop.f32.mrf.mxu0
  %4686 = vdwg.mxu0
  %4687 = vmatpush.bf16.msra.mxu0 0
  %4688 = vmatpush.bf16.msra.mxu0 0
  %4689 = vmatpush.bf16.msra.mxu0 0
  %4690 = vmatpush.bf16.msra.mxu0 0
  %4691 = vmatpush.bf16.msra.mxu0 0
  %4692 = vmatpush.bf16.msra.mxu0 0
  %4693 = vmatpush.bf16.msra.mxu0 0
  %4694 = vmatpush.bf16.msra.mxu0 %v4587
  %4695 = vmatmul.bf16.gmra.mxu0 %v4592
  %v4696 = vpop.f32.mrf.mxu0
  %v4697 = vadd.f32 0.0, %v4696
  %v4698 = vpop.f32.mrf.mxu0
  %v4699 = vadd.f32 0.0, %v4698
  %4700 = vmatmul.bf16.gmra.mxu0 %v4595
  %v4701 = vpop.f32.mrf.mxu0
  %v4702 = vadd.f32 0.0, %v4701
  %v4703 = vpop.f32.mrf.mxu0
  %4704 = vdwg.mxu0
  %v4705 = vadd.f32 %v4548, %v4607
  %v4706 = vadd.f32 %v4549, %v4625
  %v4707 = vadd.f32 %v4550, %v4643
  %v4708 = vadd.f32 %v4551, %v4661
  %v4709 = vadd.f32 %v4552, %v4679
  %v4710 = vadd.f32 %v4553, %v4697
  %v4711 = vadd.f32 %v4554, %v4609
  %v4712 = vadd.f32 %v4555, %v4627
  %v4713 = vadd.f32 %v4556, %v4645
  %v4714 = vadd.f32 %v4557, %v4663
  %v4715 = vadd.f32 %v4558, %v4681
  %v4716 = vadd.f32 %v4559, %v4699
  %v4717 = vadd.f32 %v4560, %v4612
  %v4718 = vadd.f32 %v4561, %v4630
  %v4719 = vadd.f32 %v4562, %v4648
  %v4720 = vadd.f32 %v4563, %v4666
  %v4721 = vadd.f32 %v4564, %v4684
  %v4722 = vadd.f32 %v4565, %v4702
  %s4723 = scalar_lea.vmem %s3, 264
  %v4724 = vld [vmem:[%s4723] sm:$0xf]
  %v4725 = vld [vmem:[%s4723 + $0x4] sm:$0xf]
  %v4726 = vld [vmem:[%s4723 + $0x8] sm:$0xf]
  %v4730 = vunpack.c.l.b16 %v4724
  %v4731 = vunpack.c.l.b16 %v4725
  %v4732 = vunpack.c.l.b16 %v4726
  %v4733 = vpack.c.b16 %v4731, %v4730
  %v4734 = vpack.c.b16 %v4732, %v4732
  %4735 = vrot.lane.b32.xlu0 %v1146, 112
  %v4736 = vpop.permute.xlu0 %4735
  %4737 = vrot.lane.b32.xlu0 %v1147, 112
  %v4738 = vpop.permute.xlu0 %4737
  %4739 = vrot.lane.b32.xlu0 0, 112
  %v4740 = vpop.permute.xlu0 %4739
  %v4741 = vsel %vm1462, %v1461, %v4736
  %v4742 = vsel %vm1462, %v4736, %v4738
  %v4743 = vsel %vm1462, %v4738, %v4740
  %v4748 = vsel %vm1199, %v4733, 0
  %v4751 = vsel %vm1199, %v4734, 0
  %4753 = vmatpush.bf16.msra.mxu0 0
  %4754 = vmatpush.bf16.msra.mxu0 0
  %4755 = vmatpush.bf16.msra.mxu0 0
  %4756 = vmatpush.bf16.msra.mxu0 0
  %4757 = vmatpush.bf16.msra.mxu0 0
  %4758 = vmatpush.bf16.msra.mxu0 0
  %4759 = vmatpush.bf16.msra.mxu0 0
  %4760 = vmatpush.bf16.msra.mxu0 %v1466
  %4761 = vmatmul.bf16.gmra.mxu0 %v4748
  %v4762 = vpop.f32.mrf.mxu0
  %v4763 = vadd.f32 0.0, %v4762
  %v4764 = vpop.f32.mrf.mxu0
  %v4765 = vadd.f32 0.0, %v4764
  %4766 = vmatmul.bf16.gmra.mxu0 %v4751
  %v4767 = vpop.f32.mrf.mxu0
  %v4768 = vadd.f32 0.0, %v4767
  %v4769 = vpop.f32.mrf.mxu0
  %4770 = vdwg.mxu0
  %4771 = vmatpush.bf16.msra.mxu0 0
  %4772 = vmatpush.bf16.msra.mxu0 0
  %4773 = vmatpush.bf16.msra.mxu0 0
  %4774 = vmatpush.bf16.msra.mxu0 0
  %4775 = vmatpush.bf16.msra.mxu0 0
  %4776 = vmatpush.bf16.msra.mxu0 0
  %4777 = vmatpush.bf16.msra.mxu0 0
  %4778 = vmatpush.bf16.msra.mxu0 %v1467
  %4779 = vmatmul.bf16.gmra.mxu0 %v4748
  %v4780 = vpop.f32.mrf.mxu0
  %v4781 = vadd.f32 0.0, %v4780
  %v4782 = vpop.f32.mrf.mxu0
  %v4783 = vadd.f32 0.0, %v4782
  %4784 = vmatmul.bf16.gmra.mxu0 %v4751
  %v4785 = vpop.f32.mrf.mxu0
  %v4786 = vadd.f32 0.0, %v4785
  %v4787 = vpop.f32.mrf.mxu0
  %4788 = vdwg.mxu0
  %4789 = vmatpush.bf16.msra.mxu0 0
  %4790 = vmatpush.bf16.msra.mxu0 0
  %4791 = vmatpush.bf16.msra.mxu0 0
  %4792 = vmatpush.bf16.msra.mxu0 0
  %4793 = vmatpush.bf16.msra.mxu0 0
  %4794 = vmatpush.bf16.msra.mxu0 0
  %4795 = vmatpush.bf16.msra.mxu0 0
  %4796 = vmatpush.bf16.msra.mxu0 %v1468
  %4797 = vmatmul.bf16.gmra.mxu0 %v4748
  %v4798 = vpop.f32.mrf.mxu0
  %v4799 = vadd.f32 0.0, %v4798
  %v4800 = vpop.f32.mrf.mxu0
  %v4801 = vadd.f32 0.0, %v4800
  %4802 = vmatmul.bf16.gmra.mxu0 %v4751
  %v4803 = vpop.f32.mrf.mxu0
  %v4804 = vadd.f32 0.0, %v4803
  %v4805 = vpop.f32.mrf.mxu0
  %4806 = vdwg.mxu0
  %4807 = vmatpush.bf16.msra.mxu0 0
  %4808 = vmatpush.bf16.msra.mxu0 0
  %4809 = vmatpush.bf16.msra.mxu0 0
  %4810 = vmatpush.bf16.msra.mxu0 0
  %4811 = vmatpush.bf16.msra.mxu0 0
  %4812 = vmatpush.bf16.msra.mxu0 0
  %4813 = vmatpush.bf16.msra.mxu0 0
  %4814 = vmatpush.bf16.msra.mxu0 %v4741
  %4815 = vmatmul.bf16.gmra.mxu0 %v4748
  %v4816 = vpop.f32.mrf.mxu0
  %v4817 = vadd.f32 0.0, %v4816
  %v4818 = vpop.f32.mrf.mxu0
  %v4819 = vadd.f32 0.0, %v4818
  %4820 = vmatmul.bf16.gmra.mxu0 %v4751
  %v4821 = vpop.f32.mrf.mxu0
  %v4822 = vadd.f32 0.0, %v4821
  %v4823 = vpop.f32.mrf.mxu0
  %4824 = vdwg.mxu0
  %4825 = vmatpush.bf16.msra.mxu0 0
  %4826 = vmatpush.bf16.msra.mxu0 0
  %4827 = vmatpush.bf16.msra.mxu0 0
  %4828 = vmatpush.bf16.msra.mxu0 0
  %4829 = vmatpush.bf16.msra.mxu0 0
  %4830 = vmatpush.bf16.msra.mxu0 0
  %4831 = vmatpush.bf16.msra.mxu0 0
  %4832 = vmatpush.bf16.msra.mxu0 %v4742
  %4833 = vmatmul.bf16.gmra.mxu0 %v4748
  %v4834 = vpop.f32.mrf.mxu0
  %v4835 = vadd.f32 0.0, %v4834
  %v4836 = vpop.f32.mrf.mxu0
  %v4837 = vadd.f32 0.0, %v4836
  %4838 = vmatmul.bf16.gmra.mxu0 %v4751
  %v4839 = vpop.f32.mrf.mxu0
  %v4840 = vadd.f32 0.0, %v4839
  %v4841 = vpop.f32.mrf.mxu0
  %4842 = vdwg.mxu0
  %4843 = vmatpush.bf16.msra.mxu0 0
  %4844 = vmatpush.bf16.msra.mxu0 0
  %4845 = vmatpush.bf16.msra.mxu0 0
  %4846 = vmatpush.bf16.msra.mxu0 0
  %4847 = vmatpush.bf16.msra.mxu0 0
  %4848 = vmatpush.bf16.msra.mxu0 0
  %4849 = vmatpush.bf16.msra.mxu0 0
  %4850 = vmatpush.bf16.msra.mxu0 %v4743
  %4851 = vmatmul.bf16.gmra.mxu0 %v4748
  %v4852 = vpop.f32.mrf.mxu0
  %v4853 = vadd.f32 0.0, %v4852
  %v4854 = vpop.f32.mrf.mxu0
  %v4855 = vadd.f32 0.0, %v4854
  %4856 = vmatmul.bf16.gmra.mxu0 %v4751
  %v4857 = vpop.f32.mrf.mxu0
  %v4858 = vadd.f32 0.0, %v4857
  %v4859 = vpop.f32.mrf.mxu0
  %4860 = vdwg.mxu0
  %v4861 = vadd.f32 %v4705, %v4763
  %v4862 = vadd.f32 %v4706, %v4781
  %v4863 = vadd.f32 %v4707, %v4799
  %v4864 = vadd.f32 %v4708, %v4817
  %v4865 = vadd.f32 %v4709, %v4835
  %v4866 = vadd.f32 %v4710, %v4853
  %v4867 = vadd.f32 %v4711, %v4765
  %v4868 = vadd.f32 %v4712, %v4783
  %v4869 = vadd.f32 %v4713, %v4801
  %v4870 = vadd.f32 %v4714, %v4819
  %v4871 = vadd.f32 %v4715, %v4837
  %v4872 = vadd.f32 %v4716, %v4855
  %v4873 = vadd.f32 %v4717, %v4768
  %v4874 = vadd.f32 %v4718, %v4786
  %v4875 = vadd.f32 %v4719, %v4804
  %v4876 = vadd.f32 %v4720, %v4822
  %v4877 = vadd.f32 %v4721, %v4840
  %v4878 = vadd.f32 %v4722, %v4858
  %s4879 = scalar_lea.vmem %s3, 276
  %v4880 = vld [vmem:[%s4879] sm:$0xf]
  %v4881 = vld [vmem:[%s4879 + $0x4] sm:$0xf]
  %v4882 = vld [vmem:[%s4879 + $0x8] sm:$0xf]
  %v4886 = vunpack.c.l.b16 %v4880
  %v4887 = vunpack.c.l.b16 %v4881
  %v4888 = vunpack.c.l.b16 %v4882
  %v4889 = vpack.c.b16 %v4887, %v4886
  %v4890 = vpack.c.b16 %v4888, %v4888
  %4891 = vrot.lane.b32.xlu0 %v1146, 104
  %v4892 = vpop.permute.xlu0 %4891
  %4893 = vrot.lane.b32.xlu0 %v1147, 104
  %v4894 = vpop.permute.xlu0 %4893
  %4895 = vrot.lane.b32.xlu0 0, 104
  %v4896 = vpop.permute.xlu0 %4895
  %v4897 = vsel %vm1633, %v1632, %v4892
  %v4898 = vsel %vm1633, %v4892, %v4894
  %v4899 = vsel %vm1633, %v4894, %v4896
  %v4904 = vsel %vm1199, %v4889, 0
  %v4907 = vsel %vm1199, %v4890, 0
  %4909 = vmatpush.bf16.msra.mxu0 0
  %4910 = vmatpush.bf16.msra.mxu0 0
  %4911 = vmatpush.bf16.msra.mxu0 0
  %4912 = vmatpush.bf16.msra.mxu0 0
  %4913 = vmatpush.bf16.msra.mxu0 0
  %4914 = vmatpush.bf16.msra.mxu0 0
  %4915 = vmatpush.bf16.msra.mxu0 0
  %4916 = vmatpush.bf16.msra.mxu0 %v1637
  %4917 = vmatmul.bf16.gmra.mxu0 %v4904
  %v4918 = vpop.f32.mrf.mxu0
  %v4919 = vadd.f32 0.0, %v4918
  %v4920 = vpop.f32.mrf.mxu0
  %v4921 = vadd.f32 0.0, %v4920
  %4922 = vmatmul.bf16.gmra.mxu0 %v4907
  %v4923 = vpop.f32.mrf.mxu0
  %v4924 = vadd.f32 0.0, %v4923
  %v4925 = vpop.f32.mrf.mxu0
  %4926 = vdwg.mxu0
  %4927 = vmatpush.bf16.msra.mxu0 0
  %4928 = vmatpush.bf16.msra.mxu0 0
  %4929 = vmatpush.bf16.msra.mxu0 0
  %4930 = vmatpush.bf16.msra.mxu0 0
  %4931 = vmatpush.bf16.msra.mxu0 0
  %4932 = vmatpush.bf16.msra.mxu0 0
  %4933 = vmatpush.bf16.msra.mxu0 0
  %4934 = vmatpush.bf16.msra.mxu0 %v1638
  %4935 = vmatmul.bf16.gmra.mxu0 %v4904
  %v4936 = vpop.f32.mrf.mxu0
  %v4937 = vadd.f32 0.0, %v4936
  %v4938 = vpop.f32.mrf.mxu0
  %v4939 = vadd.f32 0.0, %v4938
  %4940 = vmatmul.bf16.gmra.mxu0 %v4907
  %v4941 = vpop.f32.mrf.mxu0
  %v4942 = vadd.f32 0.0, %v4941
  %v4943 = vpop.f32.mrf.mxu0
  %4944 = vdwg.mxu0
  %4945 = vmatpush.bf16.msra.mxu0 0
  %4946 = vmatpush.bf16.msra.mxu0 0
  %4947 = vmatpush.bf16.msra.mxu0 0
  %4948 = vmatpush.bf16.msra.mxu0 0
  %4949 = vmatpush.bf16.msra.mxu0 0
  %4950 = vmatpush.bf16.msra.mxu0 0
  %4951 = vmatpush.bf16.msra.mxu0 0
  %4952 = vmatpush.bf16.msra.mxu0 %v1639
  %4953 = vmatmul.bf16.gmra.mxu0 %v4904
  %v4954 = vpop.f32.mrf.mxu0
  %v4955 = vadd.f32 0.0, %v4954
  %v4956 = vpop.f32.mrf.mxu0
  %v4957 = vadd.f32 0.0, %v4956
  %4958 = vmatmul.bf16.gmra.mxu0 %v4907
  %v4959 = vpop.f32.mrf.mxu0
  %v4960 = vadd.f32 0.0, %v4959
  %v4961 = vpop.f32.mrf.mxu0
  %4962 = vdwg.mxu0
  %4963 = vmatpush.bf16.msra.mxu0 0
  %4964 = vmatpush.bf16.msra.mxu0 0
  %4965 = vmatpush.bf16.msra.mxu0 0
  %4966 = vmatpush.bf16.msra.mxu0 0
  %4967 = vmatpush.bf16.msra.mxu0 0
  %4968 = vmatpush.bf16.msra.mxu0 0
  %4969 = vmatpush.bf16.msra.mxu0 0
  %4970 = vmatpush.bf16.msra.mxu0 %v4897
  %4971 = vmatmul.bf16.gmra.mxu0 %v4904
  %v4972 = vpop.f32.mrf.mxu0
  %v4973 = vadd.f32 0.0, %v4972
  %v4974 = vpop.f32.mrf.mxu0
  %v4975 = vadd.f32 0.0, %v4974
  %4976 = vmatmul.bf16.gmra.mxu0 %v4907
  %v4977 = vpop.f32.mrf.mxu0
  %v4978 = vadd.f32 0.0, %v4977
  %v4979 = vpop.f32.mrf.mxu0
  %4980 = vdwg.mxu0
  %4981 = vmatpush.bf16.msra.mxu0 0
  %4982 = vmatpush.bf16.msra.mxu0 0
  %4983 = vmatpush.bf16.msra.mxu0 0
  %4984 = vmatpush.bf16.msra.mxu0 0
  %4985 = vmatpush.bf16.msra.mxu0 0
  %4986 = vmatpush.bf16.msra.mxu0 0
  %4987 = vmatpush.bf16.msra.mxu0 0
  %4988 = vmatpush.bf16.msra.mxu0 %v4898
  %4989 = vmatmul.bf16.gmra.mxu0 %v4904
  %v4990 = vpop.f32.mrf.mxu0
  %v4991 = vadd.f32 0.0, %v4990
  %v4992 = vpop.f32.mrf.mxu0
  %v4993 = vadd.f32 0.0, %v4992
  %4994 = vmatmul.bf16.gmra.mxu0 %v4907
  %v4995 = vpop.f32.mrf.mxu0
  %v4996 = vadd.f32 0.0, %v4995
  %v4997 = vpop.f32.mrf.mxu0
  %4998 = vdwg.mxu0
  %4999 = vmatpush.bf16.msra.mxu0 0
  %5000 = vmatpush.bf16.msra.mxu0 0
  %5001 = vmatpush.bf16.msra.mxu0 0
  %5002 = vmatpush.bf16.msra.mxu0 0
  %5003 = vmatpush.bf16.msra.mxu0 0
  %5004 = vmatpush.bf16.msra.mxu0 0
  %5005 = vmatpush.bf16.msra.mxu0 0
  %5006 = vmatpush.bf16.msra.mxu0 %v4899
  %5007 = vmatmul.bf16.gmra.mxu0 %v4904
  %v5008 = vpop.f32.mrf.mxu0
  %v5009 = vadd.f32 0.0, %v5008
  %v5010 = vpop.f32.mrf.mxu0
  %v5011 = vadd.f32 0.0, %v5010
  %5012 = vmatmul.bf16.gmra.mxu0 %v4907
  %v5013 = vpop.f32.mrf.mxu0
  %v5014 = vadd.f32 0.0, %v5013
  %v5015 = vpop.f32.mrf.mxu0
  %5016 = vdwg.mxu0
  %v5017 = vadd.f32 %v4861, %v4919
  %v5018 = vadd.f32 %v4862, %v4937
  %v5019 = vadd.f32 %v4863, %v4955
  %v5020 = vadd.f32 %v4864, %v4973
  %v5021 = vadd.f32 %v4865, %v4991
  %v5022 = vadd.f32 %v4866, %v5009
  %v5023 = vadd.f32 %v4867, %v4921
  %v5024 = vadd.f32 %v4868, %v4939
  %v5025 = vadd.f32 %v4869, %v4957
  %v5026 = vadd.f32 %v4870, %v4975
  %v5027 = vadd.f32 %v4871, %v4993
  %v5028 = vadd.f32 %v4872, %v5011
  %v5029 = vadd.f32 %v4873, %v4924
  %v5030 = vadd.f32 %v4874, %v4942
  %v5031 = vadd.f32 %v4875, %v4960
  %v5032 = vadd.f32 %v4876, %v4978
  %v5033 = vadd.f32 %v4877, %v4996
  %v5034 = vadd.f32 %v4878, %v5014
  %s5035 = scalar_lea.vmem %s3, 288
  %v5036 = vld [vmem:[%s5035] sm:$0xf]
  %v5037 = vld [vmem:[%s5035 + $0x4] sm:$0xf]
  %v5038 = vld [vmem:[%s5035 + $0x8] sm:$0xf]
  %v5042 = vunpack.c.l.b16 %v5036
  %v5043 = vunpack.c.l.b16 %v5037
  %v5044 = vunpack.c.l.b16 %v5038
  %v5045 = vpack.c.b16 %v5043, %v5042
  %v5046 = vpack.c.b16 %v5044, %v5044
  %5047 = vrot.lane.b32.xlu0 0, 96
  %v5048 = vpop.permute.xlu0 %5047
  %v5049 = vsel %vm1804, %v3624, %v5048
  %v5052 = vsel %vm1199, %v5045, 0
  %v5055 = vsel %vm1199, %v5046, 0
  %5057 = vmatpush.bf16.msra.mxu0 0
  %5058 = vmatpush.bf16.msra.mxu0 0
  %5059 = vmatpush.bf16.msra.mxu0 0
  %5060 = vmatpush.bf16.msra.mxu0 0
  %5061 = vmatpush.bf16.msra.mxu0 0
  %5062 = vmatpush.bf16.msra.mxu0 0
  %5063 = vmatpush.bf16.msra.mxu0 0
  %5064 = vmatpush.bf16.msra.mxu0 %v1808
  %5065 = vmatmul.bf16.gmra.mxu0 %v5052
  %v5066 = vpop.f32.mrf.mxu0
  %v5067 = vadd.f32 0.0, %v5066
  %v5068 = vpop.f32.mrf.mxu0
  %v5069 = vadd.f32 0.0, %v5068
  %5070 = vmatmul.bf16.gmra.mxu0 %v5055
  %v5071 = vpop.f32.mrf.mxu0
  %v5072 = vadd.f32 0.0, %v5071
  %v5073 = vpop.f32.mrf.mxu0
  %5074 = vdwg.mxu0
  %5075 = vmatpush.bf16.msra.mxu0 0
  %5076 = vmatpush.bf16.msra.mxu0 0
  %5077 = vmatpush.bf16.msra.mxu0 0
  %5078 = vmatpush.bf16.msra.mxu0 0
  %5079 = vmatpush.bf16.msra.mxu0 0
  %5080 = vmatpush.bf16.msra.mxu0 0
  %5081 = vmatpush.bf16.msra.mxu0 0
  %5082 = vmatpush.bf16.msra.mxu0 %v1809
  %5083 = vmatmul.bf16.gmra.mxu0 %v5052
  %v5084 = vpop.f32.mrf.mxu0
  %v5085 = vadd.f32 0.0, %v5084
  %v5086 = vpop.f32.mrf.mxu0
  %v5087 = vadd.f32 0.0, %v5086
  %5088 = vmatmul.bf16.gmra.mxu0 %v5055
  %v5089 = vpop.f32.mrf.mxu0
  %v5090 = vadd.f32 0.0, %v5089
  %v5091 = vpop.f32.mrf.mxu0
  %5092 = vdwg.mxu0
  %5093 = vmatpush.bf16.msra.mxu0 0
  %5094 = vmatpush.bf16.msra.mxu0 0
  %5095 = vmatpush.bf16.msra.mxu0 0
  %5096 = vmatpush.bf16.msra.mxu0 0
  %5097 = vmatpush.bf16.msra.mxu0 0
  %5098 = vmatpush.bf16.msra.mxu0 0
  %5099 = vmatpush.bf16.msra.mxu0 0
  %5100 = vmatpush.bf16.msra.mxu0 %v1810
  %5101 = vmatmul.bf16.gmra.mxu0 %v5052
  %v5102 = vpop.f32.mrf.mxu0
  %v5103 = vadd.f32 0.0, %v5102
  %v5104 = vpop.f32.mrf.mxu0
  %v5105 = vadd.f32 0.0, %v5104
  %5106 = vmatmul.bf16.gmra.mxu0 %v5055
  %v5107 = vpop.f32.mrf.mxu0
  %v5108 = vadd.f32 0.0, %v5107
  %v5109 = vpop.f32.mrf.mxu0
  %5110 = vdwg.mxu0
  %5111 = vmatpush.bf16.msra.mxu0 0
  %5112 = vmatpush.bf16.msra.mxu0 0
  %5113 = vmatpush.bf16.msra.mxu0 0
  %5114 = vmatpush.bf16.msra.mxu0 0
  %5115 = vmatpush.bf16.msra.mxu0 0
  %5116 = vmatpush.bf16.msra.mxu0 0
  %5117 = vmatpush.bf16.msra.mxu0 0
  %5118 = vmatpush.bf16.msra.mxu0 %v3625
  %5119 = vmatmul.bf16.gmra.mxu0 %v5052
  %v5120 = vpop.f32.mrf.mxu0
  %v5121 = vadd.f32 0.0, %v5120
  %v5122 = vpop.f32.mrf.mxu0
  %v5123 = vadd.f32 0.0, %v5122
  %5124 = vmatmul.bf16.gmra.mxu0 %v5055
  %v5125 = vpop.f32.mrf.mxu0
  %v5126 = vadd.f32 0.0, %v5125
  %v5127 = vpop.f32.mrf.mxu0
  %5128 = vdwg.mxu0
  %5129 = vmatpush.bf16.msra.mxu0 0
  %5130 = vmatpush.bf16.msra.mxu0 0
  %5131 = vmatpush.bf16.msra.mxu0 0
  %5132 = vmatpush.bf16.msra.mxu0 0
  %5133 = vmatpush.bf16.msra.mxu0 0
  %5134 = vmatpush.bf16.msra.mxu0 0
  %5135 = vmatpush.bf16.msra.mxu0 0
  %5136 = vmatpush.bf16.msra.mxu0 %v3626
  %5137 = vmatmul.bf16.gmra.mxu0 %v5052
  %v5138 = vpop.f32.mrf.mxu0
  %v5139 = vadd.f32 0.0, %v5138
  %v5140 = vpop.f32.mrf.mxu0
  %v5141 = vadd.f32 0.0, %v5140
  %5142 = vmatmul.bf16.gmra.mxu0 %v5055
  %v5143 = vpop.f32.mrf.mxu0
  %v5144 = vadd.f32 0.0, %v5143
  %v5145 = vpop.f32.mrf.mxu0
  %5146 = vdwg.mxu0
  %5147 = vmatpush.bf16.msra.mxu0 0
  %5148 = vmatpush.bf16.msra.mxu0 0
  %5149 = vmatpush.bf16.msra.mxu0 0
  %5150 = vmatpush.bf16.msra.mxu0 0
  %5151 = vmatpush.bf16.msra.mxu0 0
  %5152 = vmatpush.bf16.msra.mxu0 0
  %5153 = vmatpush.bf16.msra.mxu0 0
  %5154 = vmatpush.bf16.msra.mxu0 %v5049
  %5155 = vmatmul.bf16.gmra.mxu0 %v5052
  %v5156 = vpop.f32.mrf.mxu0
  %v5157 = vadd.f32 0.0, %v5156
  %v5158 = vpop.f32.mrf.mxu0
  %v5159 = vadd.f32 0.0, %v5158
  %5160 = vmatmul.bf16.gmra.mxu0 %v5055
  %v5161 = vpop.f32.mrf.mxu0
  %v5162 = vadd.f32 0.0, %v5161
  %v5163 = vpop.f32.mrf.mxu0
  %5164 = vdwg.mxu0
  %v5165 = vadd.f32 %v5017, %v5067
  %v5166 = vadd.f32 %v5018, %v5085
  %v5167 = vadd.f32 %v5019, %v5103
  %v5168 = vadd.f32 %v5020, %v5121
  %v5169 = vadd.f32 %v5021, %v5139
  %v5170 = vadd.f32 %v5022, %v5157
  %v5171 = vadd.f32 %v5023, %v5069
  %v5172 = vadd.f32 %v5024, %v5087
  %v5173 = vadd.f32 %v5025, %v5105
  %v5174 = vadd.f32 %v5026, %v5123
  %v5175 = vadd.f32 %v5027, %v5141
  %v5176 = vadd.f32 %v5028, %v5159
  %v5177 = vadd.f32 %v5029, %v5072
  %v5178 = vadd.f32 %v5030, %v5090
  %v5179 = vadd.f32 %v5031, %v5108
  %v5180 = vadd.f32 %v5032, %v5126
  %v5181 = vadd.f32 %v5033, %v5144
  %v5182 = vadd.f32 %v5034, %v5162
  %v5183 = vld [vmem:[%s4] sm:$0xff]
  %v5184 = vld [vmem:[%s4 + $0x8] sm:$0xff]
  %v5185 = vld [vmem:[%s4 + $0x10] sm:$0xff]
  %5189 = vrot.lane.b32.xlu0 %v5165, 120
  %v5190 = vpop.permute.xlu0 %5189
  %5191 = vrot.lane.b32.xlu0 %v5171, 120
  %v5192 = vpop.permute.xlu0 %5191
  %5193 = vrot.lane.b32.xlu0 %v5177, 120
  %v5194 = vpop.permute.xlu0 %5193
  %v5198 = vmax.f32 %v5165, %v5190
  %v5199 = vmax.f32 %v5171, %v5192
  %v5200 = vmax.f32 %v5177, %v5194
  %5204 = vrot.lane.b32.xlu0 %v5198, 32
  %v5205 = vpop.permute.xlu0 %5204
  %5206 = vrot.lane.b32.xlu0 %v5199, 32
  %v5207 = vpop.permute.xlu0 %5206
  %5208 = vrot.lane.b32.xlu0 %v5200, 32
  %v5209 = vpop.permute.xlu0 %5208
  %v5213 = vmax.f32 %v5198, %v5205
  %v5214 = vmax.f32 %v5199, %v5207
  %v5215 = vmax.f32 %v5200, %v5209
  %5217 = vset.pattern.permute.xlu0 0
  %5218 = vperm.xlu0 %5217, %v5183
  %v5219 = vpop.permute.xlu0 %5218
  %5222 = vset.pattern.permute.xlu0 0
  %5223 = vperm.xlu0 %5222, %v5184
  %v5224 = vpop.permute.xlu0 %5223
  %5227 = vset.pattern.permute.xlu0 0
  %5228 = vperm.xlu0 %5227, %v5185
  %v5229 = vpop.permute.xlu0 %5228
  %v5231 = vadd.f32 %v5213, %v5219
  %v5232 = vadd.f32 %v5214, %v5224
  %v5233 = vadd.f32 %v5215, %v5229
  %v5234 = vmax.f32 %v5231, 0.0
  %v5235 = vmax.f32 %v5232, 0.0
  %v5236 = vmax.f32 %v5233, 0.0
  %5240 = vrot.lane.b32.xlu0 %v5166, 120
  %v5241 = vpop.permute.xlu0 %5240
  %5242 = vrot.lane.b32.xlu0 %v5172, 120
  %v5243 = vpop.permute.xlu0 %5242
  %5244 = vrot.lane.b32.xlu0 %v5178, 120
  %v5245 = vpop.permute.xlu0 %5244
  %v5249 = vmax.f32 %v5166, %v5241
  %v5250 = vmax.f32 %v5172, %v5243
  %v5251 = vmax.f32 %v5178, %v5245
  %5255 = vrot.lane.b32.xlu0 %v5249, 32
  %v5256 = vpop.permute.xlu0 %5255
  %5257 = vrot.lane.b32.xlu0 %v5250, 32
  %v5258 = vpop.permute.xlu0 %5257
  %5259 = vrot.lane.b32.xlu0 %v5251, 32
  %v5260 = vpop.permute.xlu0 %5259
  %v5264 = vmax.f32 %v5198, %v5256
  %v5265 = vmax.f32 %v5199, %v5258
  %v5266 = vmax.f32 %v5200, %v5260
  %v5267 = vadd.f32 %v5264, %v5219
  %v5268 = vadd.f32 %v5265, %v5224
  %v5269 = vadd.f32 %v5266, %v5229
  %v5270 = vmax.f32 %v5267, 0.0
  %v5271 = vmax.f32 %v5268, 0.0
  %v5272 = vmax.f32 %v5269, 0.0
  %5276 = vrot.lane.b32.xlu0 %v5167, 120
  %v5277 = vpop.permute.xlu0 %5276
  %5278 = vrot.lane.b32.xlu0 %v5173, 120
  %v5279 = vpop.permute.xlu0 %5278
  %5280 = vrot.lane.b32.xlu0 %v5179, 120
  %v5281 = vpop.permute.xlu0 %5280
  %v5285 = vmax.f32 %v5167, %v5277
  %v5286 = vmax.f32 %v5173, %v5279
  %v5287 = vmax.f32 %v5179, %v5281
  %5291 = vrot.lane.b32.xlu0 %v5285, 32
  %v5292 = vpop.permute.xlu0 %5291
  %5293 = vrot.lane.b32.xlu0 %v5286, 32
  %v5294 = vpop.permute.xlu0 %5293
  %5295 = vrot.lane.b32.xlu0 %v5287, 32
  %v5296 = vpop.permute.xlu0 %5295
  %v5300 = vmax.f32 %v5249, %v5292
  %v5301 = vmax.f32 %v5250, %v5294
  %v5302 = vmax.f32 %v5251, %v5296
  %v5303 = vadd.f32 %v5300, %v5219
  %v5304 = vadd.f32 %v5301, %v5224
  %v5305 = vadd.f32 %v5302, %v5229
  %v5306 = vmax.f32 %v5303, 0.0
  %v5307 = vmax.f32 %v5304, 0.0
  %v5308 = vmax.f32 %v5305, 0.0
  %5312 = vrot.lane.b32.xlu0 %v5168, 120
  %v5313 = vpop.permute.xlu0 %5312
  %5314 = vrot.lane.b32.xlu0 %v5174, 120
  %v5315 = vpop.permute.xlu0 %5314
  %5316 = vrot.lane.b32.xlu0 %v5180, 120
  %v5317 = vpop.permute.xlu0 %5316
  %v5321 = vmax.f32 %v5168, %v5313
  %v5322 = vmax.f32 %v5174, %v5315
  %v5323 = vmax.f32 %v5180, %v5317
  %5327 = vrot.lane.b32.xlu0 %v5321, 32
  %v5328 = vpop.permute.xlu0 %5327
  %5329 = vrot.lane.b32.xlu0 %v5322, 32
  %v5330 = vpop.permute.xlu0 %5329
  %5331 = vrot.lane.b32.xlu0 %v5323, 32
  %v5332 = vpop.permute.xlu0 %5331
  %v5336 = vmax.f32 %v5321, %v5328
  %v5337 = vmax.f32 %v5322, %v5330
  %v5338 = vmax.f32 %v5323, %v5332
  %v5339 = vadd.f32 %v5336, %v5219
  %v5340 = vadd.f32 %v5337, %v5224
  %v5341 = vadd.f32 %v5338, %v5229
  %v5342 = vmax.f32 %v5339, 0.0
  %v5343 = vmax.f32 %v5340, 0.0
  %v5344 = vmax.f32 %v5341, 0.0
  %5348 = vrot.lane.b32.xlu0 %v5169, 120
  %v5349 = vpop.permute.xlu0 %5348
  %5350 = vrot.lane.b32.xlu0 %v5175, 120
  %v5351 = vpop.permute.xlu0 %5350
  %5352 = vrot.lane.b32.xlu0 %v5181, 120
  %v5353 = vpop.permute.xlu0 %5352
  %v5357 = vmax.f32 %v5169, %v5349
  %v5358 = vmax.f32 %v5175, %v5351
  %v5359 = vmax.f32 %v5181, %v5353
  %5363 = vrot.lane.b32.xlu0 %v5357, 32
  %v5364 = vpop.permute.xlu0 %5363
  %5365 = vrot.lane.b32.xlu0 %v5358, 32
  %v5366 = vpop.permute.xlu0 %5365
  %5367 = vrot.lane.b32.xlu0 %v5359, 32
  %v5368 = vpop.permute.xlu0 %5367
  %v5372 = vmax.f32 %v5321, %v5364
  %v5373 = vmax.f32 %v5322, %v5366
  %v5374 = vmax.f32 %v5323, %v5368
  %v5375 = vadd.f32 %v5372, %v5219
  %v5376 = vadd.f32 %v5373, %v5224
  %v5377 = vadd.f32 %v5374, %v5229
  %v5378 = vmax.f32 %v5375, 0.0
  %v5379 = vmax.f32 %v5376, 0.0
  %v5380 = vmax.f32 %v5377, 0.0
  %5384 = vrot.lane.b32.xlu0 %v5170, 120
  %v5385 = vpop.permute.xlu0 %5384
  %5386 = vrot.lane.b32.xlu0 %v5176, 120
  %v5387 = vpop.permute.xlu0 %5386
  %5388 = vrot.lane.b32.xlu0 %v5182, 120
  %v5389 = vpop.permute.xlu0 %5388
  %v5393 = vmax.f32 %v5170, %v5385
  %v5394 = vmax.f32 %v5176, %v5387
  %v5395 = vmax.f32 %v5182, %v5389
  %5399 = vrot.lane.b32.xlu0 %v5393, 32
  %v5400 = vpop.permute.xlu0 %5399
  %5401 = vrot.lane.b32.xlu0 %v5394, 32
  %v5402 = vpop.permute.xlu0 %5401
  %5403 = vrot.lane.b32.xlu0 %v5395, 32
  %v5404 = vpop.permute.xlu0 %5403
  %v5408 = vmax.f32 %v5357, %v5400
  %v5409 = vmax.f32 %v5358, %v5402
  %v5410 = vmax.f32 %v5359, %v5404
  %v5411 = vadd.f32 %v5408, %v5219
  %v5412 = vadd.f32 %v5409, %v5224
  %v5413 = vadd.f32 %v5410, %v5229
  %v5414 = vmax.f32 %v5411, 0.0
  %v5415 = vmax.f32 %v5412, 0.0
  %v5416 = vmax.f32 %v5413, 0.0
  %5420 = vrot.lane.b32.xlu0 %v5234, 112
  %v5421 = vpop.permute.xlu0 %5420
  %5422 = vrot.lane.b32.xlu0 %v5235, 112
  %v5423 = vpop.permute.xlu0 %5422
  %5424 = vrot.lane.b32.xlu0 %v5236, 112
  %v5425 = vpop.permute.xlu0 %5424
  %5432 = vrot.lane.b32.xlu0 %v5270, 96
  %v5433 = vpop.permute.xlu0 %5432
  %5434 = vrot.lane.b32.xlu0 %v5271, 96
  %v5435 = vpop.permute.xlu0 %5434
  %5436 = vrot.lane.b32.xlu0 %v5272, 96
  %v5437 = vpop.permute.xlu0 %5436
  %5441 = vrot.lane.b32.xlu0 %v5270, 80
  %v5442 = vpop.permute.xlu0 %5441
  %5443 = vrot.lane.b32.xlu0 %v5271, 80
  %v5444 = vpop.permute.xlu0 %5443
  %5445 = vrot.lane.b32.xlu0 %v5272, 80
  %v5446 = vpop.permute.xlu0 %5445
  %5453 = vrot.lane.b32.xlu0 %v5306, 64
  %v5454 = vpop.permute.xlu0 %5453
  %5455 = vrot.lane.b32.xlu0 %v5307, 64
  %v5456 = vpop.permute.xlu0 %5455
  %5457 = vrot.lane.b32.xlu0 %v5308, 64
  %v5458 = vpop.permute.xlu0 %5457
  %5462 = vrot.lane.b32.xlu0 %v5306, 48
  %v5463 = vpop.permute.xlu0 %5462
  %5464 = vrot.lane.b32.xlu0 %v5307, 48
  %v5465 = vpop.permute.xlu0 %5464
  %5466 = vrot.lane.b32.xlu0 %v5308, 48
  %v5467 = vpop.permute.xlu0 %5466
  %5471 = vrot.lane.b32.xlu0 %v5306, 32
  %v5472 = vpop.permute.xlu0 %5471
  %5473 = vrot.lane.b32.xlu0 %v5307, 32
  %v5474 = vpop.permute.xlu0 %5473
  %5475 = vrot.lane.b32.xlu0 %v5308, 32
  %v5476 = vpop.permute.xlu0 %5475
  %5480 = vrot.lane.b32.xlu0 %v5306, 16
  %v5481 = vpop.permute.xlu0 %5480
  %5482 = vrot.lane.b32.xlu0 %v5307, 16
  %v5483 = vpop.permute.xlu0 %5482
  %5484 = vrot.lane.b32.xlu0 %v5308, 16
  %v5485 = vpop.permute.xlu0 %5484
  %5492 = vrot.lane.b32.xlu0 %v5342, 112
  %v5493 = vpop.permute.xlu0 %5492
  %5494 = vrot.lane.b32.xlu0 %v5343, 112
  %v5495 = vpop.permute.xlu0 %5494
  %5496 = vrot.lane.b32.xlu0 %v5344, 112
  %v5497 = vpop.permute.xlu0 %5496
  %5504 = vrot.lane.b32.xlu0 %v5378, 96
  %v5505 = vpop.permute.xlu0 %5504
  %5506 = vrot.lane.b32.xlu0 %v5379, 96
  %v5507 = vpop.permute.xlu0 %5506
  %5508 = vrot.lane.b32.xlu0 %v5380, 96
  %v5509 = vpop.permute.xlu0 %5508
  %5513 = vrot.lane.b32.xlu0 %v5378, 80
  %v5514 = vpop.permute.xlu0 %5513
  %5515 = vrot.lane.b32.xlu0 %v5379, 80
  %v5516 = vpop.permute.xlu0 %5515
  %5517 = vrot.lane.b32.xlu0 %v5380, 80
  %v5518 = vpop.permute.xlu0 %5517
  %5525 = vrot.lane.b32.xlu0 %v5414, 64
  %v5526 = vpop.permute.xlu0 %5525
  %5527 = vrot.lane.b32.xlu0 %v5415, 64
  %v5528 = vpop.permute.xlu0 %5527
  %5529 = vrot.lane.b32.xlu0 %v5416, 64
  %v5530 = vpop.permute.xlu0 %5529
  %5534 = vrot.lane.b32.xlu0 %v5414, 48
  %v5535 = vpop.permute.xlu0 %5534
  %5536 = vrot.lane.b32.xlu0 %v5415, 48
  %v5537 = vpop.permute.xlu0 %5536
  %5538 = vrot.lane.b32.xlu0 %v5416, 48
  %v5539 = vpop.permute.xlu0 %5538
  %5543 = vrot.lane.b32.xlu0 %v5414, 32
  %v5544 = vpop.permute.xlu0 %5543
  %5545 = vrot.lane.b32.xlu0 %v5415, 32
  %v5546 = vpop.permute.xlu0 %5545
  %5547 = vrot.lane.b32.xlu0 %v5416, 32
  %v5548 = vpop.permute.xlu0 %5547
  %5552 = vrot.lane.b32.xlu0 %v5414, 16
  %v5553 = vpop.permute.xlu0 %5552
  %5554 = vrot.lane.b32.xlu0 %v5415, 16
  %v5555 = vpop.permute.xlu0 %5554
  %5556 = vrot.lane.b32.xlu0 %v5416, 16
  %v5557 = vpop.permute.xlu0 %5556
  %v5561 = vld [vmem:[%s5] sm:$0xff]
  %v5562 = vld [vmem:[%s5 + $0x8] sm:$0xff]
  %v5563 = vld [vmem:[%s5 + $0x10] sm:$0xff]
  %v5564 = vld [vmem:[%s5 + $0x18] sm:$0xff]
  %v5565 = vld [vmem:[%s5 + $0x20] sm:$0xff]
  %v5566 = vld [vmem:[%s5 + $0x28] sm:$0xff]
  %v5567 = vld [vmem:[%s5 + $0x30] sm:$0xff]
  %v5568 = vld [vmem:[%s5 + $0x38] sm:$0xff]
  %v5569 = vld [vmem:[%s5 + $0x40] sm:$0xff]
  %v5570 = vld [vmem:[%s5 + $0x48] sm:$0xff]
  %v5571 = vld [vmem:[%s5 + $0x50] sm:$0xff]
  %v5572 = vld [vmem:[%s5 + $0x58] sm:$0xff]
  %v5573 = vld [vmem:[%s5 + $0x60] sm:$0xff]
  %v5574 = vld [vmem:[%s5 + $0x68] sm:$0xff]
  %v5575 = vld [vmem:[%s5 + $0x70] sm:$0xff]
  %v5576 = vld [vmem:[%s5 + $0x78] sm:$0xff]
  %v5577 = vld [vmem:[%s5 + $0x80] sm:$0xff]
  %v5578 = vld [vmem:[%s5 + $0x88] sm:$0xff]
  %v5579 = vld [vmem:[%s5 + $0x90] sm:$0xff]
  %v5580 = vld [vmem:[%s5 + $0x98] sm:$0xff]
  %v5581 = vld [vmem:[%s5 + $0xa0] sm:$0xff]
  %v5582 = vld [vmem:[%s5 + $0xa8] sm:$0xff]
  %v5583 = vld [vmem:[%s5 + $0xb0] sm:$0xff]
  %v5584 = vld [vmem:[%s5 + $0xb8] sm:$0xff]
  %v5585 = vld [vmem:[%s6] sm:$0xff]
  %v5586 = vld [vmem:[%s6 + $0x8] sm:$0xff]
  %v5587 = vld [vmem:[%s6 + $0x10] sm:$0xff]
  %v5588 = vld [vmem:[%s6 + $0x18] sm:$0xff]
  %v5589 = vld [vmem:[%s6 + $0x20] sm:$0xff]
  %v5590 = vld [vmem:[%s6 + $0x28] sm:$0xff]
  %v5591 = vld [vmem:[%s6 + $0x30] sm:$0xff]
  %v5592 = vld [vmem:[%s6 + $0x38] sm:$0xff]
  %5594 = vset.pattern.permute.xlu0 0
  %5595 = vperm.xlu0 %5594, %v5585
  %v5596 = vpop.permute.xlu0 %5595
  %5599 = vset.pattern.permute.xlu0 0
  %5600 = vperm.xlu0 %5599, %v5586
  %v5601 = vpop.permute.xlu0 %5600
  %5604 = vset.pattern.permute.xlu0 0
  %5605 = vperm.xlu0 %5604, %v5587
  %v5606 = vpop.permute.xlu0 %5605
  %5609 = vset.pattern.permute.xlu0 0
  %5610 = vperm.xlu0 %5609, %v5588
  %v5611 = vpop.permute.xlu0 %5610
  %5614 = vset.pattern.permute.xlu0 0
  %5615 = vperm.xlu0 %5614, %v5589
  %v5616 = vpop.permute.xlu0 %5615
  %5619 = vset.pattern.permute.xlu0 0
  %5620 = vperm.xlu0 %5619, %v5590
  %v5621 = vpop.permute.xlu0 %5620
  %5624 = vset.pattern.permute.xlu0 0
  %5625 = vperm.xlu0 %5624, %v5591
  %v5626 = vpop.permute.xlu0 %5625
  %5629 = vset.pattern.permute.xlu0 0
  %5630 = vperm.xlu0 %5629, %v5592
  %v5631 = vpop.permute.xlu0 %5630
  %5633 = vmatpush.msra.mxu0 %v5463
  %5634 = vmatpush.msra.mxu0 %v5458
  %5635 = vmatpush.msra.mxu0 %v5456
  %5636 = vmatpush.msra.mxu0 %v5454
  %5637 = vmatpush.msra.mxu0 %v5446
  %5638 = vmatpush.msra.mxu0 %v5444
  %5639 = vmatpush.msra.mxu0 %v5442
  %5640 = vmatpush.msra.mxu0 %v5437
  %5641 = vmatpush.msra.mxu0 %v5435
  %5642 = vmatpush.msra.mxu0 %v5433
  %5643 = vmatpush.msra.mxu0 %v5425
  %5644 = vmatpush.msra.mxu0 %v5423
  %5645 = vmatpush.msra.mxu0 %v5421
  %5646 = vmatpush.msra.mxu0 %v5236
  %5647 = vmatpush.msra.mxu0 %v5235
  %5648 = vmatpush.msra.mxu0 %v5234
  %5649 = vmatmul.f32.gmra.mxu0 %v5561
  %v5650 = vpop.f32.mrf.mxu0
  %v5651 = vadd.f32 %v5596, %v5650
  %5652 = vmatmul.f32.gmra.mxu0 %v5564
  %v5653 = vpop.f32.mrf.mxu0
  %v5654 = vadd.f32 %v5601, %v5653
  %5655 = vmatmul.f32.gmra.mxu0 %v5567
  %v5656 = vpop.f32.mrf.mxu0
  %v5657 = vadd.f32 %v5606, %v5656
  %5658 = vmatmul.f32.gmra.mxu0 %v5570
  %v5659 = vpop.f32.mrf.mxu0
  %v5660 = vadd.f32 %v5611, %v5659
  %5661 = vmatmul.f32.gmra.mxu0 %v5573
  %v5662 = vpop.f32.mrf.mxu0
  %v5663 = vadd.f32 %v5616, %v5662
  %5664 = vmatmul.f32.gmra.mxu0 %v5576
  %v5665 = vpop.f32.mrf.mxu0
  %v5666 = vadd.f32 %v5621, %v5665
  %5667 = vmatmul.f32.gmra.mxu0 %v5579
  %v5668 = vpop.f32.mrf.mxu0
  %v5669 = vadd.f32 %v5626, %v5668
  %5670 = vmatmul.f32.gmra.mxu0 %v5582
  %v5671 = vpop.f32.mrf.mxu0
  %v5672 = vadd.f32 %v5631, %v5671
  %5673 = vdwg.mxu0
  %5674 = vmatpush.msra.mxu0 %v5507
  %5675 = vmatpush.msra.mxu0 %v5505
  %5676 = vmatpush.msra.mxu0 %v5497
  %5677 = vmatpush.msra.mxu0 %v5495
  %5678 = vmatpush.msra.mxu0 %v5493
  %5679 = vmatpush.msra.mxu0 %v5344
  %5680 = vmatpush.msra.mxu0 %v5343
  %5681 = vmatpush.msra.mxu0 %v5342
  %5682 = vmatpush.msra.mxu0 %v5485
  %5683 = vmatpush.msra.mxu0 %v5483
  %5684 = vmatpush.msra.mxu0 %v5481
  %5685 = vmatpush.msra.mxu0 %v5476
  %5686 = vmatpush.msra.mxu0 %v5474
  %5687 = vmatpush.msra.mxu0 %v5472
  %5688 = vmatpush.msra.mxu0 %v5467
  %5689 = vmatpush.msra.mxu0 %v5465
  %5690 = vmatmul.f32.gmra.mxu0 %v5562
  %v5691 = vpop.f32.mrf.mxu0
  %v5692 = vadd.f32 %v5651, %v5691
  %5693 = vmatmul.f32.gmra.mxu0 %v5565
  %v5694 = vpop.f32.mrf.mxu0
  %v5695 = vadd.f32 %v5654, %v5694
  %5696 = vmatmul.f32.gmra.mxu0 %v5568
  %v5697 = vpop.f32.mrf.mxu0
  %v5698 = vadd.f32 %v5657, %v5697
  %5699 = vmatmul.f32.gmra.mxu0 %v5571
  %v5700 = vpop.f32.mrf.mxu0
  %v5701 = vadd.f32 %v5660, %v5700
  %5702 = vmatmul.f32.gmra.mxu0 %v5574
  %v5703 = vpop.f32.mrf.mxu0
  %v5704 = vadd.f32 %v5663, %v5703
  %5705 = vmatmul.f32.gmra.mxu0 %v5577
  %v5706 = vpop.f32.mrf.mxu0
  %v5707 = vadd.f32 %v5666, %v5706
  %5708 = vmatmul.f32.gmra.mxu0 %v5580
  %v5709 = vpop.f32.mrf.mxu0
  %v5710 = vadd.f32 %v5669, %v5709
  %5711 = vmatmul.f32.gmra.mxu0 %v5583
  %v5712 = vpop.f32.mrf.mxu0
  %v5713 = vadd.f32 %v5672, %v5712
  %5714 = vdwg.mxu0
  %5715 = vmatpush.msra.mxu0 %v5557
  %5716 = vmatpush.msra.mxu0 %v5555
  %5717 = vmatpush.msra.mxu0 %v5553
  %5718 = vmatpush.msra.mxu0 %v5548
  %5719 = vmatpush.msra.mxu0 %v5546
  %5720 = vmatpush.msra.mxu0 %v5544
  %5721 = vmatpush.msra.mxu0 %v5539
  %5722 = vmatpush.msra.mxu0 %v5537
  %5723 = vmatpush.msra.mxu0 %v5535
  %5724 = vmatpush.msra.mxu0 %v5530
  %5725 = vmatpush.msra.mxu0 %v5528
  %5726 = vmatpush.msra.mxu0 %v5526
  %5727 = vmatpush.msra.mxu0 %v5518
  %5728 = vmatpush.msra.mxu0 %v5516
  %5729 = vmatpush.msra.mxu0 %v5514
  %5730 = vmatpush.msra.mxu0 %v5509
  %5731 = vmatmul.f32.gmra.mxu0 %v5563
  %v5732 = vpop.f32.mrf.mxu0
  %v5733 = vadd.f32 %v5692, %v5732
  %5734 = vmatmul.f32.gmra.mxu0 %v5566
  %v5735 = vpop.f32.mrf.mxu0
  %v5736 = vadd.f32 %v5695, %v5735
  %5737 = vmatmul.f32.gmra.mxu0 %v5569
  %v5738 = vpop.f32.mrf.mxu0
  %v5739 = vadd.f32 %v5698, %v5738
  %5740 = vmatmul.f32.gmra.mxu0 %v5572
  %v5741 = vpop.f32.mrf.mxu0
  %v5742 = vadd.f32 %v5701, %v5741
  %5743 = vmatmul.f32.gmra.mxu0 %v5575
  %v5744 = vpop.f32.mrf.mxu0
  %v5745 = vadd.f32 %v5704, %v5744
  %5746 = vmatmul.f32.gmra.mxu0 %v5578
  %v5747 = vpop.f32.mrf.mxu0
  %v5748 = vadd.f32 %v5707, %v5747
  %5749 = vmatmul.f32.gmra.mxu0 %v5581
  %v5750 = vpop.f32.mrf.mxu0
  %v5751 = vadd.f32 %v5710, %v5750
  %5752 = vmatmul.f32.gmra.mxu0 %v5584
  %v5753 = vpop.f32.mrf.mxu0
  %v5754 = vadd.f32 %v5713, %v5753
  %5755 = vdwg.mxu0
  %v5756 = vmax.f32 %v5733, 0.0
  %v5757 = vmax.f32 %v5736, 0.0
  %v5758 = vmax.f32 %v5739, 0.0
  %v5759 = vmax.f32 %v5742, 0.0
  %v5760 = vmax.f32 %v5745, 0.0
  %v5761 = vmax.f32 %v5748, 0.0
  %v5762 = vmax.f32 %v5751, 0.0
  %v5763 = vmax.f32 %v5754, 0.0
  %vm5764 = vcmask 64512
  %v5765 = vsel %vm5764, %v5756, 0.0
  %v5766 = vsel %vm5764, %v5757, 0.0
  %v5767 = vsel %vm5764, %v5758, 0.0
  %v5768 = vsel %vm5764, %v5759, 0.0
  %v5769 = vsel %vm5764, %v5760, 0.0
  %v5770 = vsel %vm5764, %v5761, 0.0
  %v5771 = vsel %vm5764, %v5762, 0.0
  %v5772 = vsel %vm5764, %v5763, 0.0
  %v5773 = vld [vmem:[%s7] sm:$0xff]
  %v5774 = vld [vmem:[%s7 + $0x8] sm:$0xff]
  %v5775 = vld [vmem:[%s7 + $0x10] sm:$0xff]
  %v5776 = vld [vmem:[%s7 + $0x18] sm:$0xff]
  %v5777 = vld [vmem:[%s7 + $0x20] sm:$0xff]
  %v5778 = vld [vmem:[%s7 + $0x28] sm:$0xff]
  %v5779 = vld [vmem:[%s7 + $0x30] sm:$0xff]
  %v5780 = vld [vmem:[%s7 + $0x38] sm:$0xff]
  %v5781 = vld [vmem:[%s7 + $0x40] sm:$0xff]
  %v5782 = vld [vmem:[%s7 + $0x48] sm:$0xff]
  %v5783 = vld [vmem:[%s7 + $0x50] sm:$0xff]
  %v5784 = vld [vmem:[%s7 + $0x58] sm:$0xff]
  %v5785 = vld [vmem:[%s7 + $0x60] sm:$0xff]
  %v5786 = vld [vmem:[%s7 + $0x68] sm:$0xff]
  %v5787 = vld [vmem:[%s7 + $0x70] sm:$0xff]
  %v5788 = vld [vmem:[%s7 + $0x78] sm:$0xff]
  %v5789 = vld [vmem:[%s8] sm:$0xff]
  %v5790 = vld [vmem:[%s8 + $0x8] sm:$0xff]
  %v5791 = vld [vmem:[%s8 + $0x10] sm:$0xff]
  %v5792 = vld [vmem:[%s8 + $0x18] sm:$0xff]
  %v5793 = vld [vmem:[%s8 + $0x20] sm:$0xff]
  %v5794 = vld [vmem:[%s8 + $0x28] sm:$0xff]
  %v5795 = vld [vmem:[%s8 + $0x30] sm:$0xff]
  %v5796 = vld [vmem:[%s8 + $0x38] sm:$0xff]
  %v5797 = vld [vmem:[%s8 + $0x40] sm:$0xff]
  %v5798 = vld [vmem:[%s8 + $0x48] sm:$0xff]
  %v5799 = vld [vmem:[%s8 + $0x50] sm:$0xff]
  %v5800 = vld [vmem:[%s8 + $0x58] sm:$0xff]
  %v5801 = vld [vmem:[%s8 + $0x60] sm:$0xff]
  %v5802 = vld [vmem:[%s8 + $0x68] sm:$0xff]
  %v5803 = vld [vmem:[%s8 + $0x70] sm:$0xff]
  %v5804 = vld [vmem:[%s8 + $0x78] sm:$0xff]
  %5806 = vset.pattern.permute.xlu0 0
  %5807 = vperm.xlu0 %5806, %v5789
  %v5808 = vpop.permute.xlu0 %5807
  %5811 = vset.pattern.permute.xlu0 0
  %5812 = vperm.xlu0 %5811, %v5790
  %v5813 = vpop.permute.xlu0 %5812
  %5816 = vset.pattern.permute.xlu0 0
  %5817 = vperm.xlu0 %5816, %v5791
  %v5818 = vpop.permute.xlu0 %5817
  %5821 = vset.pattern.permute.xlu0 0
  %5822 = vperm.xlu0 %5821, %v5792
  %v5823 = vpop.permute.xlu0 %5822
  %5826 = vset.pattern.permute.xlu0 0
  %5827 = vperm.xlu0 %5826, %v5793
  %v5828 = vpop.permute.xlu0 %5827
  %5831 = vset.pattern.permute.xlu0 0
  %5832 = vperm.xlu0 %5831, %v5794
  %v5833 = vpop.permute.xlu0 %5832
  %5836 = vset.pattern.permute.xlu0 0
  %5837 = vperm.xlu0 %5836, %v5795
  %v5838 = vpop.permute.xlu0 %5837
  %5841 = vset.pattern.permute.xlu0 0
  %5842 = vperm.xlu0 %5841, %v5796
  %v5843 = vpop.permute.xlu0 %5842
  %5846 = vset.pattern.permute.xlu0 0
  %5847 = vperm.xlu0 %5846, %v5797
  %v5848 = vpop.permute.xlu0 %5847
  %5851 = vset.pattern.permute.xlu0 0
  %5852 = vperm.xlu0 %5851, %v5798
  %v5853 = vpop.permute.xlu0 %5852
  %5856 = vset.pattern.permute.xlu0 0
  %5857 = vperm.xlu0 %5856, %v5799
  %v5858 = vpop.permute.xlu0 %5857
  %5861 = vset.pattern.permute.xlu0 0
  %5862 = vperm.xlu0 %5861, %v5800
  %v5863 = vpop.permute.xlu0 %5862
  %5866 = vset.pattern.permute.xlu0 0
  %5867 = vperm.xlu0 %5866, %v5801
  %v5868 = vpop.permute.xlu0 %5867
  %5871 = vset.pattern.permute.xlu0 0
  %5872 = vperm.xlu0 %5871, %v5802
  %v5873 = vpop.permute.xlu0 %5872
  %5876 = vset.pattern.permute.xlu0 0
  %5877 = vperm.xlu0 %5876, %v5803
  %v5878 = vpop.permute.xlu0 %5877
  %5881 = vset.pattern.permute.xlu0 0
  %5882 = vperm.xlu0 %5881, %v5804
  %v5883 = vpop.permute.xlu0 %5882
  %vm5885 = vcmask 523264
  %v5887 = vsel %vm5885, %v5773, 0
  %v5890 = vsel %vm5885, %v5774, 0
  %v5893 = vsel %vm5885, %v5775, 0
  %v5896 = vsel %vm5885, %v5776, 0
  %v5899 = vsel %vm5885, %v5777, 0
  %v5902 = vsel %vm5885, %v5778, 0
  %v5905 = vsel %vm5885, %v5779, 0
  %v5908 = vsel %vm5885, %v5780, 0
  %v5911 = vsel %vm5885, %v5781, 0
  %v5914 = vsel %vm5885, %v5782, 0
  %v5917 = vsel %vm5885, %v5783, 0
  %v5920 = vsel %vm5885, %v5784, 0
  %v5923 = vsel %vm5885, %v5785, 0
  %v5926 = vsel %vm5885, %v5786, 0
  %v5929 = vsel %vm5885, %v5787, 0
  %v5932 = vsel %vm5885, %v5788, 0
  %5934 = vmatpush.msra.mxu0 0.0
  %5935 = vmatpush.msra.mxu0 0.0
  %5936 = vmatpush.msra.mxu0 0.0
  %5937 = vmatpush.msra.mxu0 0.0
  %5938 = vmatpush.msra.mxu0 0.0
  %5939 = vmatpush.msra.mxu0 0.0
  %5940 = vmatpush.msra.mxu0 0.0
  %5941 = vmatpush.msra.mxu0 0.0
  %5942 = vmatpush.msra.mxu0 %v5772
  %5943 = vmatpush.msra.mxu0 %v5771
  %5944 = vmatpush.msra.mxu0 %v5770
  %5945 = vmatpush.msra.mxu0 %v5769
  %5946 = vmatpush.msra.mxu0 %v5768
  %5947 = vmatpush.msra.mxu0 %v5767
  %5948 = vmatpush.msra.mxu0 %v5766
  %5949 = vmatpush.msra.mxu0 %v5765
  %5950 = vmatmul.f32.gmra.mxu0 %v5887
  %v5951 = vpop.f32.mrf.mxu0
  %v5952 = vadd.f32 %v5808, %v5951
  %5953 = vmatmul.f32.gmra.mxu0 %v5890
  %v5954 = vpop.f32.mrf.mxu0
  %v5955 = vadd.f32 %v5813, %v5954
  %5956 = vmatmul.f32.gmra.mxu0 %v5893
  %v5957 = vpop.f32.mrf.mxu0
  %v5958 = vadd.f32 %v5818, %v5957
  %5959 = vmatmul.f32.gmra.mxu0 %v5896
  %v5960 = vpop.f32.mrf.mxu0
  %v5961 = vadd.f32 %v5823, %v5960
  %5962 = vmatmul.f32.gmra.mxu0 %v5899
  %v5963 = vpop.f32.mrf.mxu0
  %v5964 = vadd.f32 %v5828, %v5963
  %5965 = vmatmul.f32.gmra.mxu0 %v5902
  %v5966 = vpop.f32.mrf.mxu0
  %v5967 = vadd.f32 %v5833, %v5966
  %5968 = vmatmul.f32.gmra.mxu0 %v5905
  %v5969 = vpop.f32.mrf.mxu0
  %v5970 = vadd.f32 %v5838, %v5969
  %5971 = vmatmul.f32.gmra.mxu0 %v5908
  %v5972 = vpop.f32.mrf.mxu0
  %v5973 = vadd.f32 %v5843, %v5972
  %5974 = vmatmul.f32.gmra.mxu0 %v5911
  %v5975 = vpop.f32.mrf.mxu0
  %v5976 = vadd.f32 %v5848, %v5975
  %5977 = vmatmul.f32.gmra.mxu0 %v5914
  %v5978 = vpop.f32.mrf.mxu0
  %v5979 = vadd.f32 %v5853, %v5978
  %5980 = vmatmul.f32.gmra.mxu0 %v5917
  %v5981 = vpop.f32.mrf.mxu0
  %v5982 = vadd.f32 %v5858, %v5981
  %5983 = vmatmul.f32.gmra.mxu0 %v5920
  %v5984 = vpop.f32.mrf.mxu0
  %v5985 = vadd.f32 %v5863, %v5984
  %5986 = vmatmul.f32.gmra.mxu0 %v5923
  %v5987 = vpop.f32.mrf.mxu0
  %v5988 = vadd.f32 %v5868, %v5987
  %5989 = vmatmul.f32.gmra.mxu0 %v5926
  %v5990 = vpop.f32.mrf.mxu0
  %v5991 = vadd.f32 %v5873, %v5990
  %5992 = vmatmul.f32.gmra.mxu0 %v5929
  %v5993 = vpop.f32.mrf.mxu0
  %v5994 = vadd.f32 %v5878, %v5993
  %5995 = vmatmul.f32.gmra.mxu0 %v5932
  %v5996 = vpop.f32.mrf.mxu0
  %v5997 = vadd.f32 %v5883, %v5996
  %5998 = vdwg.mxu0
  %5999 = vxpose.xlu0.b32.start [1/16] %v5952, 128
  %6000 = vxpose.xlu0.b32.cont [2/16] %v5955, 128
  %6001 = vxpose.xlu0.b32.cont [3/16] %v5958, 128
  %6002 = vxpose.xlu0.b32.cont [4/16] %v5961, 128
  %6003 = vxpose.xlu0.b32.cont [5/16] %v5964, 128
  %6004 = vxpose.xlu0.b32.cont [6/16] %v5967, 128
  %6005 = vxpose.xlu0.b32.cont [7/16] %v5970, 128
  %6006 = vxpose.xlu0.b32.cont [8/16] %v5973, 128
  %6007 = vxpose.xlu0.b32.cont [9/16] %v5976, 128
  %6008 = vxpose.xlu0.b32.cont [10/16] %v5979, 128
  %6009 = vxpose.xlu0.b32.cont [11/16] %v5982, 128
  %6010 = vxpose.xlu0.b32.cont [12/16] %v5985, 128
  %6011 = vxpose.xlu0.b32.cont [13/16] %v5988, 128
  %6012 = vxpose.xlu0.b32.cont [14/16] %v5991, 128
  %6013 = vxpose.xlu0.b32.cont [15/16] %v5994, 128
  %6014 = vxpose.xlu0.b32.end [16/16] %v5997, 128
  %v6015 = vpop.trf.xlu0
  %v6016 = vpop.trf.xlu0
  %v6017 = vpop.trf.xlu0
  %v6018 = vpop.trf.xlu0
  %v6019 = vpop.trf.xlu0
  %v6020 = vpop.trf.xlu0
  %v6021 = vpop.trf.xlu0
  %v6022 = vpop.trf.xlu0
  %v6023 = vpop.trf.xlu0
  %v6024 = vpop.trf.xlu0
  %v6025 = vpop.trf.xlu0
  %v6026 = vpop.trf.xlu0
  %v6027 = vpop.trf.xlu0
  %v6028 = vpop.trf.xlu0
  %v6029 = vpop.trf.xlu0
  %v6030 = vpop.trf.xlu0
  %6031 = vmax.xlane.f32.xlu0 %v6015
  %v6032 = vpop.xlane.xlu0 %6031
  %v6033 = vsub.f32 %v6015, %v6032
  %v6034 = vmul.f32 %v6033, 1.442695
  %v6035 = vpow.pop %v6034
  %6036 = vadd.xlane.f32.xlu0 %v6035
  %v6037 = vpop.xlane.xlu0 %6036
  %v6038 = vrcp.pop %v6037
  %v6039 = vmul.f32 %v6037, %v6038
  %v6040 = vsub.f32 1.0, %v6039
  %v6041 = vmul.f32 %v6038, %v6040
  %v6042 = vadd.f32 %v6038, %v6041
  %vm6043 = vweird.f32 %v6037
  %vm6044 = vweird.f32 %v6038
  %vm6045 = vmor %vm6043, %vm6044
  %v6046 = vsel %vm6045, %v6038, %v6042
  %v6047 = vand.u32 2147483647, %v6037
  %vm6048 = vcmp.eq.f32.partialorder %v6047, 8.507059e+37
  %v6049 = vand.u32 %v6037, 2147483648
  %v6050 = vor.u32 1.1754944e-38, %v6049
  %v6051 = vsel %vm6048, %v6050, %v6046
  %v6052 = vmul.f32 %v6035, %v6051
  %6053 = vst [vmem:[%s9] sm:$0xff] %v6052
  // Predicated region
  $region38: #{net_forward.1} parent=0 // pred_check
    _
  $region39: #{net_forward.1} parent=0 // pred_check_branch
    %6055 = sbr.rel (0) target = $region41
  $region40: #{net_forward.1} parent=0 // pred_region
    _
  $region41: #{net_forward.1} parent=0 // pred_fallthru
    _
  // Predicated region
  $region42: #{net_forward.1} parent=0 // pred_check
    _
  $region43: #{net_forward.1} parent=0 // pred_check_branch
    %6057 = sbr.rel (0) target = $region45
  $region44: #{net_forward.1} parent=0 // pred_region
    _
  $region45: #{net_forward.1} parent=0 // pred_fallthru
    _

</llo_original>
